<compile_context>
chip_gen: v5e
topology: v5e:2x2
jax: 0.10.0
libtpu: 0.0.40
codegen_flags: <defaults>
</compile_context>

<pallas_src>
import jax
import jax.numpy as jnp
from jax.experimental import pallas as pl
from jax.experimental.pallas import tpu as pltpu

# ----------------------------- scaled ViT config ------------------------------
IMG_SIZE = 32
PATCH = 16
IN_CHANS = 3
EMBED_DIM = 64
DEPTH = 2
NUM_HEADS = 4
HEAD_DIM = EMBED_DIM // NUM_HEADS
MLP_HIDDEN = 4 * EMBED_DIM
NUM_CLASSES = 5
PAD_CLASSES = 128                    # lane-dense head output, sliced to 5 outside
LN_EPS = 1e-6                        # timm ViT uses LayerNorm(eps=1e-6)

N_PATCHES = (IMG_SIZE // PATCH) ** 2          # 4
SEQ = N_PATCHES + 1                           # 5
PATCH_VEC = IN_CHANS * PATCH * PATCH          # 768

# -------- packed "vector slab" layout: (VEC_ROWS, VEC_W) f32, one DMA -----------
VEC_W = 256
ROW_PATCH_B = 0
ROW_CLS = 1
ROW_POS = 2
ROW_BLK = ROW_POS + SEQ                       # per-depth rows start here
ROWS_PER_BLK = 8                              # ln1_g ln1_b qkv_b proj_b ln2_g ln2_b fc1_b fc2_b
ROW_LNF = ROW_BLK + DEPTH * ROWS_PER_BLK      # lnf_g, lnf_b, head_b (padded)
VEC_ROWS = ROW_LNF + 3

# ------- packed per-depth weight slab: big_w[d] = [qkv_w | proj_w | fc1_w] ------
COL_QKV = 0
COL_PROJ = 3 * EMBED_DIM                      # 192
COL_FC1 = 4 * EMBED_DIM                       # 256
BIG_W_COLS = COL_FC1 + MLP_HIDDEN             # 512


# --------------------------------- kernel -------------------------------------
def _vit_forward_kernel(patches_ref, patch_w_ref, big_w_ref, fc2_w_ref,
                        vecs_ref, head_w_ref, out_ref):
    """Full ViT forward for a tile of BT batch elements, entirely in VMEM."""
    f32 = jnp.float32
    bf16 = jnp.bfloat16
    inv_sqrt2 = 0.7071067811865476
    scale = HEAD_DIM ** -0.5

    BT = patches_ref.shape[1]
    M = BT * SEQ

    vecs = vecs_ref[...]                                        # (VEC_ROWS, VEC_W) f32

    def vrow(r, w=EMBED_DIM):
        return vecs[r:r + 1, 0:w]                               # (1, w)

    def layernorm(z, g, b):
        mu = jnp.mean(z, axis=-1, keepdims=True)
        var = jnp.mean((z - mu) ** 2, axis=-1, keepdims=True)
        return (z - mu) * jax.lax.rsqrt(var + LN_EPS) * g + b

    # --- patch embedding: Conv2d(k=16, s=16) == per-patch matmul (M = BT*N) ---
    p = patches_ref[0].reshape(BT * N_PATCHES, PATCH_VEC).astype(bf16)
    emb = jnp.dot(p, patch_w_ref[...],
                  preferred_element_type=f32) + vrow(ROW_PATCH_B)     # (BT*N, D)
    emb = emb.reshape(BT, N_PATCHES, EMBED_DIM)

    cls = jnp.broadcast_to(vrow(ROW_CLS).reshape(1, 1, EMBED_DIM),
                           (BT, 1, EMBED_DIM))
    pos = vecs[ROW_POS:ROW_POS + SEQ, 0:EMBED_DIM]                    # (SEQ, D)
    x = jnp.concatenate([cls, emb], axis=1) + pos[None]               # (BT, SEQ, D)
    xf = x.reshape(M, EMBED_DIM)                                      # flat slab

    # --- transformer blocks (DEPTH / NUM_HEADS static -> unrolled) ---
    for d in range(DEPTH):
        base = ROW_BLK + d * ROWS_PER_BLK
        ln1_g, ln1_b = vrow(base + 0), vrow(base + 1)
        qkv_b = vrow(base + 2, 3 * EMBED_DIM)
        proj_b = vrow(base + 3)
        ln2_g, ln2_b = vrow(base + 4), vrow(base + 5)
        fc1_b = vrow(base + 6, MLP_HIDDEN)
        fc2_b = vrow(base + 7)

        W = big_w_ref[d]                                              # (D, 512) bf16
        qkv_w = W[:, COL_QKV:COL_QKV + 3 * EMBED_DIM]
        proj_w = W[:, COL_PROJ:COL_PROJ + EMBED_DIM]
        fc1_w = W[:, COL_FC1:COL_FC1 + MLP_HIDDEN]
        fc2_w = fc2_w_ref[d]                                          # (HID, D) bf16

        # ---- attention ----
        h = layernorm(xf, ln1_g, ln1_b)
        qkv = jnp.dot(h.astype(bf16), qkv_w,
                      preferred_element_type=f32) + qkv_b             # (M, 3D)
        qkv3 = qkv.reshape(BT, SEQ, 3 * EMBED_DIM)

        attn3 = jnp.zeros((BT, SEQ, EMBED_DIM), f32)
        for hh in range(NUM_HEADS):
            lo = hh * HEAD_DIM
            q = qkv3[:, :, lo:lo + HEAD_DIM].astype(bf16)
            k = qkv3[:, :, EMBED_DIM + lo:EMBED_DIM + lo + HEAD_DIM].astype(bf16)
            v = qkv3[:, :, 2 * EMBED_DIM + lo:2 * EMBED_DIM + lo + HEAD_DIM].astype(bf16)
            # q · kᵀ without materializing a transpose (contract last dims)
            s = jax.lax.dot_general(q, k, (((2,), (2,)), ((0,), (0,))),
                                    preferred_element_type=f32) * scale   # (BT,S,S)
            s = s - jnp.max(s, axis=-1, keepdims=True)
            e = jnp.exp(s)
            a = e * pl.reciprocal(jnp.sum(e, axis=-1, keepdims=True), approx=True)
            o = jax.lax.dot_general(a.astype(bf16), v,
                                    (((2,), (1,)), ((0,), (0,))),
                                    preferred_element_type=f32)           # (BT,S,hd)
            # split-K projection: accumulate through proj_w row-slice (no concat)
            attn3 = attn3 + jax.lax.dot_general(
                o.astype(bf16), proj_w[lo:lo + HEAD_DIM, :],
                (((2,), (0,)), ((), ())), preferred_element_type=f32)     # (BT,S,D)
        xf = xf + attn3.reshape(M, EMBED_DIM) + proj_b

        # ---- MLP ----
        h = layernorm(xf, ln2_g, ln2_b)
        h = jnp.dot(h.astype(bf16), fc1_w,
                    preferred_element_type=f32) + fc1_b
        # exact (erf) GELU, matching torch.nn.GELU default used by timm ViT
        h = 0.5 * h * (1.0 + jax.lax.erf(h * inv_sqrt2))
        h = jnp.dot(h.astype(bf16), fc2_w,
                    preferred_element_type=f32) + fc2_b
        xf = xf + h

    # --- final LayerNorm + classification head on the cls rows only ---
    cls_rows = xf.reshape(BT, SEQ, EMBED_DIM)[:, 0, :]                    # (BT, D)
    cls_ln = layernorm(cls_rows, vrow(ROW_LNF), vrow(ROW_LNF + 1))
    logits = jnp.dot(cls_ln.astype(bf16), head_w_ref[...],
                     preferred_element_type=f32) + vrow(ROW_LNF + 2, PAD_CLASSES)
    out_ref[0] = logits.astype(out_ref.dtype)                            # (BT, 128)


# ------------------------------ parameter init ---------------------------------
def init_params(key):
    ks = iter(jax.random.split(key, 16))

    def w(shape):
        return (0.02 * jax.random.normal(next(ks), shape)).astype(jnp.float32)

    return {
        # conv-as-matmul: (C*p*p, D); patch vector flattened in (C, p, p) order,
        # matching PyTorch Conv2d weight (D, C, p, p).reshape(D, -1).T
        "patch_w": w((PATCH_VEC, EMBED_DIM)),
        "patch_b": jnp.zeros((1, EMBED_DIM), jnp.float32),
        "cls_token": w((1, EMBED_DIM)),
        "pos_embed": w((SEQ, EMBED_DIM)),
        # per-block parameters stacked on a leading DEPTH axis
        "ln1_g": jnp.ones((DEPTH, 1, EMBED_DIM), jnp.float32),
        "ln1_b": jnp.zeros((DEPTH, 1, EMBED_DIM), jnp.float32),
        "qkv_w": w((DEPTH, EMBED_DIM, 3 * EMBED_DIM)),
        "qkv_b": jnp.zeros((DEPTH, 1, 3 * EMBED_DIM), jnp.float32),
        "proj_w": w((DEPTH, EMBED_DIM, EMBED_DIM)),
        "proj_b": jnp.zeros((DEPTH, 1, EMBED_DIM), jnp.float32),
        "ln2_g": jnp.ones((DEPTH, 1, EMBED_DIM), jnp.float32),
        "ln2_b": jnp.zeros((DEPTH, 1, EMBED_DIM), jnp.float32),
        "fc1_w": w((DEPTH, EMBED_DIM, MLP_HIDDEN)),
        "fc1_b": jnp.zeros((DEPTH, 1, MLP_HIDDEN), jnp.float32),
        "fc2_w": w((DEPTH, MLP_HIDDEN, EMBED_DIM)),
        "fc2_b": jnp.zeros((DEPTH, 1, EMBED_DIM), jnp.float32),
        "ln_g": jnp.ones((1, EMBED_DIM), jnp.float32),
        "ln_b": jnp.zeros((1, EMBED_DIM), jnp.float32),
        "head_w": w((EMBED_DIM, NUM_CLASSES)),
        "head_b": jnp.zeros((NUM_CLASSES,), jnp.float32),
    }


# ---------------------- one-time parameter packing (hoisted) -------------------
def pack_params(params):
    """Pack ~20 small arrays into 5 slabs; cast matmul weights to bf16."""
    bf16 = jnp.bfloat16

    vecs = jnp.zeros((VEC_ROWS, VEC_W), jnp.float32)
    vecs = vecs.at[ROW_PATCH_B, :EMBED_DIM].set(params["patch_b"].reshape(-1))
    vecs = vecs.at[ROW_CLS, :EMBED_DIM].set(params["cls_token"].reshape(-1))
    vecs = vecs.at[ROW_POS:ROW_POS + SEQ, :EMBED_DIM].set(params["pos_embed"])
    for d in range(DEPTH):
        base = ROW_BLK + d * ROWS_PER_BLK
        vecs = vecs.at[base + 0, :EMBED_DIM].set(params["ln1_g"][d].reshape(-1))
        vecs = vecs.at[base + 1, :EMBED_DIM].set(params["ln1_b"][d].reshape(-1))
        vecs = vecs.at[base + 2, :3 * EMBED_DIM].set(params["qkv_b"][d].reshape(-1))
        vecs = vecs.at[base + 3, :EMBED_DIM].set(params["proj_b"][d].reshape(-1))
        vecs = vecs.at[base + 4, :EMBED_DIM].set(params["ln2_g"][d].reshape(-1))
        vecs = vecs.at[base + 5, :EMBED_DIM].set(params["ln2_b"][d].reshape(-1))
        vecs = vecs.at[base + 6, :MLP_HIDDEN].set(params["fc1_b"][d].reshape(-1))
        vecs = vecs.at[base + 7, :EMBED_DIM].set(params["fc2_b"][d].reshape(-1))
    vecs = vecs.at[ROW_LNF, :EMBED_DIM].set(params["ln_g"].reshape(-1))
    vecs = vecs.at[ROW_LNF + 1, :EMBED_DIM].set(params["ln_b"].reshape(-1))
    vecs = vecs.at[ROW_LNF + 2, :NUM_CLASSES].set(params["head_b"].reshape(-1))

    big_w = jnp.concatenate(
        [params["qkv_w"], params["proj_w"], params["fc1_w"]], axis=-1
    ).astype(bf16)                                                    # (DEPTH, D, 512)

    head_w = jnp.zeros((EMBED_DIM, PAD_CLASSES), jnp.float32)
    head_w = head_w.at[:, :NUM_CLASSES].set(params["head_w"]).astype(bf16)

    return {
        "patch_w": params["patch_w"].astype(bf16),   # (768, 64)
        "big_w": big_w,                              # (DEPTH, 64, 512)
        "fc2_w": params["fc2_w"].astype(bf16),       # (DEPTH, 256, 64)
        "vecs": vecs,                                # (VEC_ROWS, 256) f32
        "head_w": head_w,                            # (64, 128)
    }


# --------------------------------- forward -------------------------------------
def _num_grid_steps(batch):
    """1 grid step on single-TC chips (v5e/v6e); >=2 parallel steps on v7x."""
    try:
        kind = jax.devices()[0].device_kind.lower()
    except Exception:
        kind = ""
    if "v7" in kind and batch >= 2:
        return 2
    return 1


def disease_model_forward(packed, image):
    """image: (B, C, H, W) float32 NCHW -> logits (B, NUM_CLASSES)."""
    B, C, H, W = image.shape
    nh, nw = H // PATCH, W // PATCH
    n = nh * nw

    # Conv2d(k=16,s=16) patch extraction (layout only; matmul happens in-kernel).
    patches = (
        image.reshape(B, C, nh, PATCH, nw, PATCH)
        .transpose(0, 2, 4, 1, 3, 5)                  # (B, nh, nw, C, p, p)
        .reshape(B, n, C * PATCH * PATCH)
    )

    steps = _num_grid_steps(B)
    bt = -(-B // steps)                               # batch tile per grid step
    b_pad = steps * bt
    if b_pad != B:
        patches = jnp.pad(patches, ((0, b_pad - B), (0, 0), (0, 0)))
    patches = patches.reshape(steps, bt, n, C * PATCH * PATCH)

    def full_spec(a):
        return pl.BlockSpec(a.shape, lambda g, nd=a.ndim: (0,) * nd)

    # NOTE: weight specs are constant across the (1-2 step) grid; double-buffering
    # them costs <1 MiB so pl.Buffered(1) is intentionally omitted for robustness.
    in_specs = [
        pl.BlockSpec((1, bt, n, C * PATCH * PATCH), lambda g: (g, 0, 0, 0)),
        full_spec(packed["patch_w"]),
        full_spec(packed["big_w"]),
        full_spec(packed["fc2_w"]),
        full_spec(packed["vecs"]),
        full_spec(packed["head_w"]),
    ]

    out = pl.pallas_call(
        _vit_forward_kernel,
        out_shape=jax.ShapeDtypeStruct((steps, bt, PAD_CLASSES), jnp.float32),
        grid=(steps,),
        in_specs=in_specs,
        out_specs=pl.BlockSpec((1, bt, PAD_CLASSES), lambda g: (g, 0, 0)),
        compiler_params=pltpu.CompilerParams(
            dimension_semantics=("parallel",)),       # v7x: steps shard across 2 TCs
    )(patches, packed["patch_w"], packed["big_w"], packed["fc2_w"],
      packed["vecs"], packed["head_w"])

    return out.reshape(b_pad, PAD_CLASSES)[:B, :NUM_CLASSES]


# ----------------------------------- main ---------------------------------------
if __name__ == "__main__":
    key = jax.random.PRNGKey(0)
    pkey, xkey = jax.random.split(key)
    params = init_params(pkey)
    packed = pack_params(params)                      # one-time packing (hoisted)
    image = jax.random.normal(xkey, (2, IN_CHANS, IMG_SIZE, IMG_SIZE),
                              dtype=jnp.float32)

    logits = jax.jit(disease_model_forward)(packed, image)
    jax.block_until_ready(logits)
    assert logits.shape == (2, NUM_CLASSES) and logits.dtype == jnp.float32
    print("KERNEL_OK")
</pallas_src>

<mosaic_0001>
module attributes {stable_mosaic.version = 11 : i64} {
  func.func @_vit_forward_kernel(%arg0: i32, %arg1: memref<1x2x4x768xf32, #tpu.memory_space<vmem>>, %arg2: memref<768x64xbf16, #tpu.memory_space<vmem>>, %arg3: memref<2x64x512xbf16, #tpu.memory_space<vmem>>, %arg4: memref<2x256x64xbf16, #tpu.memory_space<vmem>>, %arg5: memref<26x256xf32, #tpu.memory_space<vmem>>, %arg6: memref<64x128xbf16, #tpu.memory_space<vmem>>, %arg7: memref<1x2x128xf32, #tpu.memory_space<vmem>>) attributes {dimension_semantics = [#tpu.dimension_semantics<parallel>], iteration_bounds = array<i64: 1>, scalar_prefetch = 0 : i64, scratch_operands = 0 : i64, tpu.core_type = #tpu.core_type<tc>, window_params = [{transform_indices = @transform_0, window_bounds = array<i64: 1, 2, 4, 768>}, {pipeline_mode = #tpu.pipeline_mode<synchronous>, transform_indices = @transform_1, window_bounds = array<i64: 768, 64>}, {pipeline_mode = #tpu.pipeline_mode<synchronous>, transform_indices = @transform_2, window_bounds = array<i64: 2, 64, 512>}, {pipeline_mode = #tpu.pipeline_mode<synchronous>, transform_indices = @transform_3, window_bounds = array<i64: 2, 256, 64>}, {pipeline_mode = #tpu.pipeline_mode<synchronous>, transform_indices = @transform_4, window_bounds = array<i64: 26, 256>}, {pipeline_mode = #tpu.pipeline_mode<synchronous>, transform_indices = @transform_5, window_bounds = array<i64: 64, 128>}, {transform_indices = @transform_6, window_bounds = array<i64: 1, 2, 128>}]} {
    %c0 = arith.constant 0 : index
    %c0_0 = arith.constant 0 : index
    %0 = vector.load %arg5[%c0, %c0_0] : memref<26x256xf32, #tpu.memory_space<vmem>>, vector<26x256xf32>
    %c0_1 = arith.constant 0 : index
    %c0_2 = arith.constant 0 : index
    %c0_3 = arith.constant 0 : index
    %c0_4 = arith.constant 0 : index
    %1 = vector.load %arg1[%c0_1, %c0_2, %c0_3, %c0_4] : memref<1x2x4x768xf32, #tpu.memory_space<vmem>>, vector<1x2x4x768xf32>
    %2 = vector.shape_cast %1 : vector<1x2x4x768xf32> to vector<2x4x768xf32>
    %3 = vector.shape_cast %2 : vector<2x4x768xf32> to vector<8x768xf32>
    %4 = arith.truncf %3 : vector<8x768xf32> to vector<8x768xbf16>
    %c0_5 = arith.constant 0 : index
    %c0_6 = arith.constant 0 : index
    %5 = vector.load %arg2[%c0_5, %c0_6] : memref<768x64xbf16, #tpu.memory_space<vmem>>, vector<768x64xbf16>
    %cst = arith.constant dense<0.000000e+00> : vector<8x64xf32>
    %6 = tpu.matmul %4, %5, %cst {dimension_numbers = #tpu.dot_dimension_numbers<[1], [0], [0], [1], [0, 0, 1, 1], [], []>} : vector<8x768xbf16>, vector<768x64xbf16>, vector<8x64xf32> -> vector<8x64xf32>
    %7 = vector.extract_strided_slice %0 {offsets = [0, 0], sizes = [1, 64], strides = [1, 1]} : vector<26x256xf32> to vector<1x64xf32>
    %8 = vector.broadcast %7 : vector<1x64xf32> to vector<8x64xf32>
    %9 = arith.addf %6, %8 : vector<8x64xf32>
    %10 = vector.shape_cast %9 : vector<8x64xf32> to vector<2x4x64xf32>
    %11 = vector.extract_strided_slice %0 {offsets = [1, 0], sizes = [1, 64], strides = [1, 1]} : vector<26x256xf32> to vector<1x64xf32>
    %12 = vector.shape_cast %11 : vector<1x64xf32> to vector<1x1x64xf32>
    %13 = vector.shape_cast %12 : vector<1x1x64xf32> to vector<1x1x64xf32>
    %14 = vector.broadcast %13 : vector<1x1x64xf32> to vector<2x1x64xf32>
    %15 = vector.extract_strided_slice %0 {offsets = [2, 0], sizes = [5, 64], strides = [1, 1]} : vector<26x256xf32> to vector<5x64xf32>
    %16 = tpu.concatenate %14, %10 in 1 : vector<2x1x64xf32>, vector<2x4x64xf32> -> vector<2x5x64xf32>
    %17 = vector.shape_cast %15 : vector<5x64xf32> to vector<1x5x64xf32>
    %18 = vector.broadcast %17 : vector<1x5x64xf32> to vector<2x5x64xf32>
    %19 = arith.addf %16, %18 : vector<2x5x64xf32>
    %20 = vector.shape_cast %19 : vector<2x5x64xf32> to vector<10x64xf32>
    %21 = vector.extract_strided_slice %0 {offsets = [7, 0], sizes = [1, 64], strides = [1, 1]} : vector<26x256xf32> to vector<1x64xf32>
    %22 = vector.extract_strided_slice %0 {offsets = [8, 0], sizes = [1, 64], strides = [1, 1]} : vector<26x256xf32> to vector<1x64xf32>
    %23 = vector.extract_strided_slice %0 {offsets = [9, 0], sizes = [1, 192], strides = [1, 1]} : vector<26x256xf32> to vector<1x192xf32>
    %24 = vector.extract_strided_slice %0 {offsets = [10, 0], sizes = [1, 64], strides = [1, 1]} : vector<26x256xf32> to vector<1x64xf32>
    %25 = vector.extract_strided_slice %0 {offsets = [11, 0], sizes = [1, 64], strides = [1, 1]} : vector<26x256xf32> to vector<1x64xf32>
    %26 = vector.extract_strided_slice %0 {offsets = [12, 0], sizes = [1, 64], strides = [1, 1]} : vector<26x256xf32> to vector<1x64xf32>
    %27 = vector.extract_strided_slice %0 {offsets = [13, 0], sizes = [1, 256], strides = [1, 1]} : vector<26x256xf32> to vector<1x256xf32>
    %28 = vector.extract_strided_slice %0 {offsets = [14, 0], sizes = [1, 64], strides = [1, 1]} : vector<26x256xf32> to vector<1x64xf32>
    %c0_7 = arith.constant 0 : index
    %c0_8 = arith.constant 0 : index
    %c0_9 = arith.constant 0 : index
    %29 = vector.load %arg3[%c0_7, %c0_8, %c0_9] : memref<2x64x512xbf16, #tpu.memory_space<vmem>>, vector<1x64x512xbf16>
    %30 = vector.shape_cast %29 : vector<1x64x512xbf16> to vector<64x512xbf16>
    %31 = vector.extract_strided_slice %30 {offsets = [0, 0], sizes = [64, 192], strides = [1, 1]} : vector<64x512xbf16> to vector<64x192xbf16>
    %32 = vector.extract_strided_slice %30 {offsets = [0, 192], sizes = [64, 64], strides = [1, 1]} : vector<64x512xbf16> to vector<64x64xbf16>
    %33 = vector.extract_strided_slice %30 {offsets = [0, 256], sizes = [64, 256], strides = [1, 1]} : vector<64x512xbf16> to vector<64x256xbf16>
    %c0_10 = arith.constant 0 : index
    %c0_11 = arith.constant 0 : index
    %c0_12 = arith.constant 0 : index
    %34 = vector.load %arg4[%c0_10, %c0_11, %c0_12] : memref<2x256x64xbf16, #tpu.memory_space<vmem>>, vector<1x256x64xbf16>
    %35 = vector.shape_cast %34 : vector<1x256x64xbf16> to vector<256x64xbf16>
    %cst_13 = arith.constant dense<0.000000e+00> : vector<10xf32>
    %36 = vector.multi_reduction <add>, %20, %cst_13 [1] : vector<10x64xf32> to vector<10xf32>
    %37 = vector.shape_cast %36 : vector<10xf32> to vector<10x1xf32>
    %cst_14 = arith.constant 6.400000e+01 : f32
    %38 = vector.broadcast %cst_14 : f32 to vector<10x1xf32>
    %39 = arith.divf %37, %38 : vector<10x1xf32>
    %40 = vector.broadcast %39 : vector<10x1xf32> to vector<10x64xf32>
    %41 = arith.subf %20, %40 : vector<10x64xf32>
    %42 = arith.mulf %41, %41 : vector<10x64xf32>
    %cst_15 = arith.constant dense<0.000000e+00> : vector<10xf32>
    %43 = vector.multi_reduction <add>, %42, %cst_15 [1] : vector<10x64xf32> to vector<10xf32>
    %44 = vector.shape_cast %43 : vector<10xf32> to vector<10x1xf32>
    %cst_16 = arith.constant 6.400000e+01 : f32
    %45 = vector.broadcast %cst_16 : f32 to vector<10x1xf32>
    %46 = arith.divf %44, %45 : vector<10x1xf32>
    %47 = vector.broadcast %39 : vector<10x1xf32> to vector<10x64xf32>
    %48 = arith.subf %20, %47 : vector<10x64xf32>
    %cst_17 = arith.constant 9.99999997E-7 : f32
    %49 = vector.broadcast %cst_17 : f32 to vector<10x1xf32>
    %50 = arith.addf %46, %49 : vector<10x1xf32>
    %51 = math.rsqrt %50 : vector<10x1xf32>
    %52 = vector.broadcast %51 : vector<10x1xf32> to vector<10x64xf32>
    %53 = arith.mulf %48, %52 : vector<10x64xf32>
    %54 = vector.broadcast %21 : vector<1x64xf32> to vector<10x64xf32>
    %55 = arith.mulf %53, %54 : vector<10x64xf32>
    %56 = vector.broadcast %22 : vector<1x64xf32> to vector<10x64xf32>
    %57 = arith.addf %55, %56 : vector<10x64xf32>
    %58 = arith.truncf %57 : vector<10x64xf32> to vector<10x64xbf16>
    %cst_18 = arith.constant dense<0.000000e+00> : vector<10x192xf32>
    %59 = tpu.matmul %58, %31, %cst_18 {dimension_numbers = #tpu.dot_dimension_numbers<[1], [0], [0], [1], [0, 0, 1, 1], [], []>} : vector<10x64xbf16>, vector<64x192xbf16>, vector<10x192xf32> -> vector<10x192xf32>
    %60 = vector.broadcast %23 : vector<1x192xf32> to vector<10x192xf32>
    %61 = arith.addf %59, %60 : vector<10x192xf32>
    %62 = vector.shape_cast %61 : vector<10x192xf32> to vector<2x5x192xf32>
    %cst_19 = arith.constant 0.000000e+00 : f32
    %63 = vector.broadcast %cst_19 : f32 to vector<2x5x64xf32>
    %64 = vector.extract_strided_slice %62 {offsets = [0, 0, 0], sizes = [2, 5, 16], strides = [1, 1, 1]} : vector<2x5x192xf32> to vector<2x5x16xf32>
    %65 = arith.truncf %64 : vector<2x5x16xf32> to vector<2x5x16xbf16>
    %66 = vector.extract_strided_slice %62 {offsets = [0, 0, 64], sizes = [2, 5, 16], strides = [1, 1, 1]} : vector<2x5x192xf32> to vector<2x5x16xf32>
    %67 = arith.truncf %66 : vector<2x5x16xf32> to vector<2x5x16xbf16>
    %68 = vector.extract_strided_slice %62 {offsets = [0, 0, 128], sizes = [2, 5, 16], strides = [1, 1, 1]} : vector<2x5x192xf32> to vector<2x5x16xf32>
    %69 = arith.truncf %68 : vector<2x5x16xf32> to vector<2x5x16xbf16>
    %cst_20 = arith.constant dense<0.000000e+00> : vector<2x5x5xf32>
    %70 = tpu.matmul %65, %67, %cst_20 {dimension_numbers = #tpu.dot_dimension_numbers<[2], [2], [1], [1], [0, 0, 0, 1, 1, 1], [0], [0]>} : vector<2x5x16xbf16>, vector<2x5x16xbf16>, vector<2x5x5xf32> -> vector<2x5x5xf32>
    %cst_21 = arith.constant 2.500000e-01 : f32
    %71 = vector.broadcast %cst_21 : f32 to vector<2x5x5xf32>
    %72 = arith.mulf %70, %71 : vector<2x5x5xf32>
    %cst_22 = arith.constant dense<0xFF800000> : vector<2x5xf32>
    %73 = vector.multi_reduction <maximumf>, %72, %cst_22 [2] : vector<2x5x5xf32> to vector<2x5xf32>
    %74 = vector.shape_cast %73 : vector<2x5xf32> to vector<2x5x1xf32>
    %75 = vector.broadcast %74 : vector<2x5x1xf32> to vector<2x5x5xf32>
    %76 = arith.subf %72, %75 : vector<2x5x5xf32>
    %77 = math.exp %76 : vector<2x5x5xf32>
    %cst_23 = arith.constant dense<0.000000e+00> : vector<2x5xf32>
    %78 = vector.multi_reduction <add>, %77, %cst_23 [2] : vector<2x5x5xf32> to vector<2x5xf32>
    %79 = vector.shape_cast %78 : vector<2x5xf32> to vector<2x5x1xf32>
    %80 = tpu.reciprocal %79 {approx = true} : vector<2x5x1xf32> -> vector<2x5x1xf32>
    %81 = vector.broadcast %80 : vector<2x5x1xf32> to vector<2x5x5xf32>
    %82 = arith.mulf %77, %81 : vector<2x5x5xf32>
    %83 = arith.truncf %82 : vector<2x5x5xf32> to vector<2x5x5xbf16>
    %cst_24 = arith.constant dense<0.000000e+00> : vector<2x5x16xf32>
    %84 = tpu.matmul %83, %69, %cst_24 {dimension_numbers = #tpu.dot_dimension_numbers<[2], [1], [1], [2], [0, 0, 0, 1, 1, 2], [0], [0]>} : vector<2x5x5xbf16>, vector<2x5x16xbf16>, vector<2x5x16xf32> -> vector<2x5x16xf32>
    %85 = arith.truncf %84 : vector<2x5x16xf32> to vector<2x5x16xbf16>
    %86 = vector.extract_strided_slice %32 {offsets = [0, 0], sizes = [16, 64], strides = [1, 1]} : vector<64x64xbf16> to vector<16x64xbf16>
    %cst_25 = arith.constant dense<0.000000e+00> : vector<2x5x64xf32>
    %87 = tpu.matmul %85, %86, %cst_25 {dimension_numbers = #tpu.dot_dimension_numbers<[2], [0], [0, 1], [1], [0, 0, 0, 1, 1, 1], [], []>} : vector<2x5x16xbf16>, vector<16x64xbf16>, vector<2x5x64xf32> -> vector<2x5x64xf32>
    %88 = arith.addf %63, %87 : vector<2x5x64xf32>
    %89 = vector.extract_strided_slice %62 {offsets = [0, 0, 16], sizes = [2, 5, 16], strides = [1, 1, 1]} : vector<2x5x192xf32> to vector<2x5x16xf32>
    %90 = arith.truncf %89 : vector<2x5x16xf32> to vector<2x5x16xbf16>
    %91 = vector.extract_strided_slice %62 {offsets = [0, 0, 80], sizes = [2, 5, 16], strides = [1, 1, 1]} : vector<2x5x192xf32> to vector<2x5x16xf32>
    %92 = arith.truncf %91 : vector<2x5x16xf32> to vector<2x5x16xbf16>
    %93 = vector.extract_strided_slice %62 {offsets = [0, 0, 144], sizes = [2, 5, 16], strides = [1, 1, 1]} : vector<2x5x192xf32> to vector<2x5x16xf32>
    %94 = arith.truncf %93 : vector<2x5x16xf32> to vector<2x5x16xbf16>
    %cst_26 = arith.constant dense<0.000000e+00> : vector<2x5x5xf32>
    %95 = tpu.matmul %90, %92, %cst_26 {dimension_numbers = #tpu.dot_dimension_numbers<[2], [2], [1], [1], [0, 0, 0, 1, 1, 1], [0], [0]>} : vector<2x5x16xbf16>, vector<2x5x16xbf16>, vector<2x5x5xf32> -> vector<2x5x5xf32>
    %cst_27 = arith.constant 2.500000e-01 : f32
    %96 = vector.broadcast %cst_27 : f32 to vector<2x5x5xf32>
    %97 = arith.mulf %95, %96 : vector<2x5x5xf32>
    %cst_28 = arith.constant dense<0xFF800000> : vector<2x5xf32>
    %98 = vector.multi_reduction <maximumf>, %97, %cst_28 [2] : vector<2x5x5xf32> to vector<2x5xf32>
    %99 = vector.shape_cast %98 : vector<2x5xf32> to vector<2x5x1xf32>
    %100 = vector.broadcast %99 : vector<2x5x1xf32> to vector<2x5x5xf32>
    %101 = arith.subf %97, %100 : vector<2x5x5xf32>
    %102 = math.exp %101 : vector<2x5x5xf32>
    %cst_29 = arith.constant dense<0.000000e+00> : vector<2x5xf32>
    %103 = vector.multi_reduction <add>, %102, %cst_29 [2] : vector<2x5x5xf32> to vector<2x5xf32>
    %104 = vector.shape_cast %103 : vector<2x5xf32> to vector<2x5x1xf32>
    %105 = tpu.reciprocal %104 {approx = true} : vector<2x5x1xf32> -> vector<2x5x1xf32>
    %106 = vector.broadcast %105 : vector<2x5x1xf32> to vector<2x5x5xf32>
    %107 = arith.mulf %102, %106 : vector<2x5x5xf32>
    %108 = arith.truncf %107 : vector<2x5x5xf32> to vector<2x5x5xbf16>
    %cst_30 = arith.constant dense<0.000000e+00> : vector<2x5x16xf32>
    %109 = tpu.matmul %108, %94, %cst_30 {dimension_numbers = #tpu.dot_dimension_numbers<[2], [1], [1], [2], [0, 0, 0, 1, 1, 2], [0], [0]>} : vector<2x5x5xbf16>, vector<2x5x16xbf16>, vector<2x5x16xf32> -> vector<2x5x16xf32>
    %110 = arith.truncf %109 : vector<2x5x16xf32> to vector<2x5x16xbf16>
    %111 = vector.extract_strided_slice %32 {offsets = [16, 0], sizes = [16, 64], strides = [1, 1]} : vector<64x64xbf16> to vector<16x64xbf16>
    %cst_31 = arith.constant dense<0.000000e+00> : vector<2x5x64xf32>
    %112 = tpu.matmul %110, %111, %cst_31 {dimension_numbers = #tpu.dot_dimension_numbers<[2], [0], [0, 1], [1], [0, 0, 0, 1, 1, 1], [], []>} : vector<2x5x16xbf16>, vector<16x64xbf16>, vector<2x5x64xf32> -> vector<2x5x64xf32>
    %113 = arith.addf %88, %112 : vector<2x5x64xf32>
    %114 = vector.extract_strided_slice %62 {offsets = [0, 0, 32], sizes = [2, 5, 16], strides = [1, 1, 1]} : vector<2x5x192xf32> to vector<2x5x16xf32>
    %115 = arith.truncf %114 : vector<2x5x16xf32> to vector<2x5x16xbf16>
    %116 = vector.extract_strided_slice %62 {offsets = [0, 0, 96], sizes = [2, 5, 16], strides = [1, 1, 1]} : vector<2x5x192xf32> to vector<2x5x16xf32>
    %117 = arith.truncf %116 : vector<2x5x16xf32> to vector<2x5x16xbf16>
    %118 = vector.extract_strided_slice %62 {offsets = [0, 0, 160], sizes = [2, 5, 16], strides = [1, 1, 1]} : vector<2x5x192xf32> to vector<2x5x16xf32>
    %119 = arith.truncf %118 : vector<2x5x16xf32> to vector<2x5x16xbf16>
    %cst_32 = arith.constant dense<0.000000e+00> : vector<2x5x5xf32>
    %120 = tpu.matmul %115, %117, %cst_32 {dimension_numbers = #tpu.dot_dimension_numbers<[2], [2], [1], [1], [0, 0, 0, 1, 1, 1], [0], [0]>} : vector<2x5x16xbf16>, vector<2x5x16xbf16>, vector<2x5x5xf32> -> vector<2x5x5xf32>
    %cst_33 = arith.constant 2.500000e-01 : f32
    %121 = vector.broadcast %cst_33 : f32 to vector<2x5x5xf32>
    %122 = arith.mulf %120, %121 : vector<2x5x5xf32>
    %cst_34 = arith.constant dense<0xFF800000> : vector<2x5xf32>
    %123 = vector.multi_reduction <maximumf>, %122, %cst_34 [2] : vector<2x5x5xf32> to vector<2x5xf32>
    %124 = vector.shape_cast %123 : vector<2x5xf32> to vector<2x5x1xf32>
    %125 = vector.broadcast %124 : vector<2x5x1xf32> to vector<2x5x5xf32>
    %126 = arith.subf %122, %125 : vector<2x5x5xf32>
    %127 = math.exp %126 : vector<2x5x5xf32>
    %cst_35 = arith.constant dense<0.000000e+00> : vector<2x5xf32>
    %128 = vector.multi_reduction <add>, %127, %cst_35 [2] : vector<2x5x5xf32> to vector<2x5xf32>
    %129 = vector.shape_cast %128 : vector<2x5xf32> to vector<2x5x1xf32>
    %130 = tpu.reciprocal %129 {approx = true} : vector<2x5x1xf32> -> vector<2x5x1xf32>
    %131 = vector.broadcast %130 : vector<2x5x1xf32> to vector<2x5x5xf32>
    %132 = arith.mulf %127, %131 : vector<2x5x5xf32>
    %133 = arith.truncf %132 : vector<2x5x5xf32> to vector<2x5x5xbf16>
    %cst_36 = arith.constant dense<0.000000e+00> : vector<2x5x16xf32>
    %134 = tpu.matmul %133, %119, %cst_36 {dimension_numbers = #tpu.dot_dimension_numbers<[2], [1], [1], [2], [0, 0, 0, 1, 1, 2], [0], [0]>} : vector<2x5x5xbf16>, vector<2x5x16xbf16>, vector<2x5x16xf32> -> vector<2x5x16xf32>
    %135 = arith.truncf %134 : vector<2x5x16xf32> to vector<2x5x16xbf16>
    %136 = vector.extract_strided_slice %32 {offsets = [32, 0], sizes = [16, 64], strides = [1, 1]} : vector<64x64xbf16> to vector<16x64xbf16>
    %cst_37 = arith.constant dense<0.000000e+00> : vector<2x5x64xf32>
    %137 = tpu.matmul %135, %136, %cst_37 {dimension_numbers = #tpu.dot_dimension_numbers<[2], [0], [0, 1], [1], [0, 0, 0, 1, 1, 1], [], []>} : vector<2x5x16xbf16>, vector<16x64xbf16>, vector<2x5x64xf32> -> vector<2x5x64xf32>
    %138 = arith.addf %113, %137 : vector<2x5x64xf32>
    %139 = vector.extract_strided_slice %62 {offsets = [0, 0, 48], sizes = [2, 5, 16], strides = [1, 1, 1]} : vector<2x5x192xf32> to vector<2x5x16xf32>
    %140 = arith.truncf %139 : vector<2x5x16xf32> to vector<2x5x16xbf16>
    %141 = vector.extract_strided_slice %62 {offsets = [0, 0, 112], sizes = [2, 5, 16], strides = [1, 1, 1]} : vector<2x5x192xf32> to vector<2x5x16xf32>
    %142 = arith.truncf %141 : vector<2x5x16xf32> to vector<2x5x16xbf16>
    %143 = vector.extract_strided_slice %62 {offsets = [0, 0, 176], sizes = [2, 5, 16], strides = [1, 1, 1]} : vector<2x5x192xf32> to vector<2x5x16xf32>
    %144 = arith.truncf %143 : vector<2x5x16xf32> to vector<2x5x16xbf16>
    %cst_38 = arith.constant dense<0.000000e+00> : vector<2x5x5xf32>
    %145 = tpu.matmul %140, %142, %cst_38 {dimension_numbers = #tpu.dot_dimension_numbers<[2], [2], [1], [1], [0, 0, 0, 1, 1, 1], [0], [0]>} : vector<2x5x16xbf16>, vector<2x5x16xbf16>, vector<2x5x5xf32> -> vector<2x5x5xf32>
    %cst_39 = arith.constant 2.500000e-01 : f32
    %146 = vector.broadcast %cst_39 : f32 to vector<2x5x5xf32>
    %147 = arith.mulf %145, %146 : vector<2x5x5xf32>
    %cst_40 = arith.constant dense<0xFF800000> : vector<2x5xf32>
    %148 = vector.multi_reduction <maximumf>, %147, %cst_40 [2] : vector<2x5x5xf32> to vector<2x5xf32>
    %149 = vector.shape_cast %148 : vector<2x5xf32> to vector<2x5x1xf32>
    %150 = vector.broadcast %149 : vector<2x5x1xf32> to vector<2x5x5xf32>
    %151 = arith.subf %147, %150 : vector<2x5x5xf32>
    %152 = math.exp %151 : vector<2x5x5xf32>
    %cst_41 = arith.constant dense<0.000000e+00> : vector<2x5xf32>
    %153 = vector.multi_reduction <add>, %152, %cst_41 [2] : vector<2x5x5xf32> to vector<2x5xf32>
    %154 = vector.shape_cast %153 : vector<2x5xf32> to vector<2x5x1xf32>
    %155 = tpu.reciprocal %154 {approx = true} : vector<2x5x1xf32> -> vector<2x5x1xf32>
    %156 = vector.broadcast %155 : vector<2x5x1xf32> to vector<2x5x5xf32>
    %157 = arith.mulf %152, %156 : vector<2x5x5xf32>
    %158 = arith.truncf %157 : vector<2x5x5xf32> to vector<2x5x5xbf16>
    %cst_42 = arith.constant dense<0.000000e+00> : vector<2x5x16xf32>
    %159 = tpu.matmul %158, %144, %cst_42 {dimension_numbers = #tpu.dot_dimension_numbers<[2], [1], [1], [2], [0, 0, 0, 1, 1, 2], [0], [0]>} : vector<2x5x5xbf16>, vector<2x5x16xbf16>, vector<2x5x16xf32> -> vector<2x5x16xf32>
    %160 = arith.truncf %159 : vector<2x5x16xf32> to vector<2x5x16xbf16>
    %161 = vector.extract_strided_slice %32 {offsets = [48, 0], sizes = [16, 64], strides = [1, 1]} : vector<64x64xbf16> to vector<16x64xbf16>
    %cst_43 = arith.constant dense<0.000000e+00> : vector<2x5x64xf32>
    %162 = tpu.matmul %160, %161, %cst_43 {dimension_numbers = #tpu.dot_dimension_numbers<[2], [0], [0, 1], [1], [0, 0, 0, 1, 1, 1], [], []>} : vector<2x5x16xbf16>, vector<16x64xbf16>, vector<2x5x64xf32> -> vector<2x5x64xf32>
    %163 = arith.addf %138, %162 : vector<2x5x64xf32>
    %164 = vector.shape_cast %163 : vector<2x5x64xf32> to vector<10x64xf32>
    %165 = arith.addf %20, %164 : vector<10x64xf32>
    %166 = vector.broadcast %24 : vector<1x64xf32> to vector<10x64xf32>
    %167 = arith.addf %165, %166 : vector<10x64xf32>
    %cst_44 = arith.constant dense<0.000000e+00> : vector<10xf32>
    %168 = vector.multi_reduction <add>, %167, %cst_44 [1] : vector<10x64xf32> to vector<10xf32>
    %169 = vector.shape_cast %168 : vector<10xf32> to vector<10x1xf32>
    %cst_45 = arith.constant 6.400000e+01 : f32
    %170 = vector.broadcast %cst_45 : f32 to vector<10x1xf32>
    %171 = arith.divf %169, %170 : vector<10x1xf32>
    %172 = vector.broadcast %171 : vector<10x1xf32> to vector<10x64xf32>
    %173 = arith.subf %167, %172 : vector<10x64xf32>
    %174 = arith.mulf %173, %173 : vector<10x64xf32>
    %cst_46 = arith.constant dense<0.000000e+00> : vector<10xf32>
    %175 = vector.multi_reduction <add>, %174, %cst_46 [1] : vector<10x64xf32> to vector<10xf32>
    %176 = vector.shape_cast %175 : vector<10xf32> to vector<10x1xf32>
    %cst_47 = arith.constant 6.400000e+01 : f32
    %177 = vector.broadcast %cst_47 : f32 to vector<10x1xf32>
    %178 = arith.divf %176, %177 : vector<10x1xf32>
    %179 = vector.broadcast %171 : vector<10x1xf32> to vector<10x64xf32>
    %180 = arith.subf %167, %179 : vector<10x64xf32>
    %cst_48 = arith.constant 9.99999997E-7 : f32
    %181 = vector.broadcast %cst_48 : f32 to vector<10x1xf32>
    %182 = arith.addf %178, %181 : vector<10x1xf32>
    %183 = math.rsqrt %182 : vector<10x1xf32>
    %184 = vector.broadcast %183 : vector<10x1xf32> to vector<10x64xf32>
    %185 = arith.mulf %180, %184 : vector<10x64xf32>
    %186 = vector.broadcast %25 : vector<1x64xf32> to vector<10x64xf32>
    %187 = arith.mulf %185, %186 : vector<10x64xf32>
    %188 = vector.broadcast %26 : vector<1x64xf32> to vector<10x64xf32>
    %189 = arith.addf %187, %188 : vector<10x64xf32>
    %190 = arith.truncf %189 : vector<10x64xf32> to vector<10x64xbf16>
    %cst_49 = arith.constant dense<0.000000e+00> : vector<10x256xf32>
    %191 = tpu.matmul %190, %33, %cst_49 {dimension_numbers = #tpu.dot_dimension_numbers<[1], [0], [0], [1], [0, 0, 1, 1], [], []>} : vector<10x64xbf16>, vector<64x256xbf16>, vector<10x256xf32> -> vector<10x256xf32>
    %192 = vector.broadcast %27 : vector<1x256xf32> to vector<10x256xf32>
    %193 = arith.addf %191, %192 : vector<10x256xf32>
    %cst_50 = arith.constant 5.000000e-01 : f32
    %194 = vector.broadcast %cst_50 : f32 to vector<10x256xf32>
    %195 = arith.mulf %194, %193 : vector<10x256xf32>
    %cst_51 = arith.constant 0.707106769 : f32
    %196 = vector.broadcast %cst_51 : f32 to vector<10x256xf32>
    %197 = arith.mulf %193, %196 : vector<10x256xf32>
    %198 = math.erf %197 : vector<10x256xf32>
    %cst_52 = arith.constant 1.000000e+00 : f32
    %199 = vector.broadcast %cst_52 : f32 to vector<10x256xf32>
    %200 = arith.addf %199, %198 : vector<10x256xf32>
    %201 = arith.mulf %195, %200 : vector<10x256xf32>
    %202 = arith.truncf %201 : vector<10x256xf32> to vector<10x256xbf16>
    %cst_53 = arith.constant dense<0.000000e+00> : vector<10x64xf32>
    %203 = tpu.matmul %202, %35, %cst_53 {dimension_numbers = #tpu.dot_dimension_numbers<[1], [0], [0], [1], [0, 0, 1, 1], [], []>} : vector<10x256xbf16>, vector<256x64xbf16>, vector<10x64xf32> -> vector<10x64xf32>
    %204 = vector.broadcast %28 : vector<1x64xf32> to vector<10x64xf32>
    %205 = arith.addf %203, %204 : vector<10x64xf32>
    %206 = arith.addf %167, %205 : vector<10x64xf32>
    %207 = vector.extract_strided_slice %0 {offsets = [15, 0], sizes = [1, 64], strides = [1, 1]} : vector<26x256xf32> to vector<1x64xf32>
    %208 = vector.extract_strided_slice %0 {offsets = [16, 0], sizes = [1, 64], strides = [1, 1]} : vector<26x256xf32> to vector<1x64xf32>
    %209 = vector.extract_strided_slice %0 {offsets = [17, 0], sizes = [1, 192], strides = [1, 1]} : vector<26x256xf32> to vector<1x192xf32>
    %210 = vector.extract_strided_slice %0 {offsets = [18, 0], sizes = [1, 64], strides = [1, 1]} : vector<26x256xf32> to vector<1x64xf32>
    %211 = vector.extract_strided_slice %0 {offsets = [19, 0], sizes = [1, 64], strides = [1, 1]} : vector<26x256xf32> to vector<1x64xf32>
    %212 = vector.extract_strided_slice %0 {offsets = [20, 0], sizes = [1, 64], strides = [1, 1]} : vector<26x256xf32> to vector<1x64xf32>
    %213 = vector.extract_strided_slice %0 {offsets = [21, 0], sizes = [1, 256], strides = [1, 1]} : vector<26x256xf32> to vector<1x256xf32>
    %214 = vector.extract_strided_slice %0 {offsets = [22, 0], sizes = [1, 64], strides = [1, 1]} : vector<26x256xf32> to vector<1x64xf32>
    %c1 = arith.constant 1 : index
    %c0_54 = arith.constant 0 : index
    %c0_55 = arith.constant 0 : index
    %215 = vector.load %arg3[%c1, %c0_54, %c0_55] : memref<2x64x512xbf16, #tpu.memory_space<vmem>>, vector<1x64x512xbf16>
    %216 = vector.shape_cast %215 : vector<1x64x512xbf16> to vector<64x512xbf16>
    %217 = vector.extract_strided_slice %216 {offsets = [0, 0], sizes = [64, 192], strides = [1, 1]} : vector<64x512xbf16> to vector<64x192xbf16>
    %218 = vector.extract_strided_slice %216 {offsets = [0, 192], sizes = [64, 64], strides = [1, 1]} : vector<64x512xbf16> to vector<64x64xbf16>
    %219 = vector.extract_strided_slice %216 {offsets = [0, 256], sizes = [64, 256], strides = [1, 1]} : vector<64x512xbf16> to vector<64x256xbf16>
    %c1_56 = arith.constant 1 : index
    %c0_57 = arith.constant 0 : index
    %c0_58 = arith.constant 0 : index
    %220 = vector.load %arg4[%c1_56, %c0_57, %c0_58] : memref<2x256x64xbf16, #tpu.memory_space<vmem>>, vector<1x256x64xbf16>
    %221 = vector.shape_cast %220 : vector<1x256x64xbf16> to vector<256x64xbf16>
    %cst_59 = arith.constant dense<0.000000e+00> : vector<10xf32>
    %222 = vector.multi_reduction <add>, %206, %cst_59 [1] : vector<10x64xf32> to vector<10xf32>
    %223 = vector.shape_cast %222 : vector<10xf32> to vector<10x1xf32>
    %cst_60 = arith.constant 6.400000e+01 : f32
    %224 = vector.broadcast %cst_60 : f32 to vector<10x1xf32>
    %225 = arith.divf %223, %224 : vector<10x1xf32>
    %226 = vector.broadcast %225 : vector<10x1xf32> to vector<10x64xf32>
    %227 = arith.subf %206, %226 : vector<10x64xf32>
    %228 = arith.mulf %227, %227 : vector<10x64xf32>
    %cst_61 = arith.constant dense<0.000000e+00> : vector<10xf32>
    %229 = vector.multi_reduction <add>, %228, %cst_61 [1] : vector<10x64xf32> to vector<10xf32>
    %230 = vector.shape_cast %229 : vector<10xf32> to vector<10x1xf32>
    %cst_62 = arith.constant 6.400000e+01 : f32
    %231 = vector.broadcast %cst_62 : f32 to vector<10x1xf32>
    %232 = arith.divf %230, %231 : vector<10x1xf32>
    %233 = vector.broadcast %225 : vector<10x1xf32> to vector<10x64xf32>
    %234 = arith.subf %206, %233 : vector<10x64xf32>
    %cst_63 = arith.constant 9.99999997E-7 : f32
    %235 = vector.broadcast %cst_63 : f32 to vector<10x1xf32>
    %236 = arith.addf %232, %235 : vector<10x1xf32>
    %237 = math.rsqrt %236 : vector<10x1xf32>
    %238 = vector.broadcast %237 : vector<10x1xf32> to vector<10x64xf32>
    %239 = arith.mulf %234, %238 : vector<10x64xf32>
    %240 = vector.broadcast %207 : vector<1x64xf32> to vector<10x64xf32>
    %241 = arith.mulf %239, %240 : vector<10x64xf32>
    %242 = vector.broadcast %208 : vector<1x64xf32> to vector<10x64xf32>
    %243 = arith.addf %241, %242 : vector<10x64xf32>
    %244 = arith.truncf %243 : vector<10x64xf32> to vector<10x64xbf16>
    %cst_64 = arith.constant dense<0.000000e+00> : vector<10x192xf32>
    %245 = tpu.matmul %244, %217, %cst_64 {dimension_numbers = #tpu.dot_dimension_numbers<[1], [0], [0], [1], [0, 0, 1, 1], [], []>} : vector<10x64xbf16>, vector<64x192xbf16>, vector<10x192xf32> -> vector<10x192xf32>
    %246 = vector.broadcast %209 : vector<1x192xf32> to vector<10x192xf32>
    %247 = arith.addf %245, %246 : vector<10x192xf32>
    %248 = vector.shape_cast %247 : vector<10x192xf32> to vector<2x5x192xf32>
    %cst_65 = arith.constant 0.000000e+00 : f32
    %249 = vector.broadcast %cst_65 : f32 to vector<2x5x64xf32>
    %250 = vector.extract_strided_slice %248 {offsets = [0, 0, 0], sizes = [2, 5, 16], strides = [1, 1, 1]} : vector<2x5x192xf32> to vector<2x5x16xf32>
    %251 = arith.truncf %250 : vector<2x5x16xf32> to vector<2x5x16xbf16>
    %252 = vector.extract_strided_slice %248 {offsets = [0, 0, 64], sizes = [2, 5, 16], strides = [1, 1, 1]} : vector<2x5x192xf32> to vector<2x5x16xf32>
    %253 = arith.truncf %252 : vector<2x5x16xf32> to vector<2x5x16xbf16>
    %254 = vector.extract_strided_slice %248 {offsets = [0, 0, 128], sizes = [2, 5, 16], strides = [1, 1, 1]} : vector<2x5x192xf32> to vector<2x5x16xf32>
    %255 = arith.truncf %254 : vector<2x5x16xf32> to vector<2x5x16xbf16>
    %cst_66 = arith.constant dense<0.000000e+00> : vector<2x5x5xf32>
    %256 = tpu.matmul %251, %253, %cst_66 {dimension_numbers = #tpu.dot_dimension_numbers<[2], [2], [1], [1], [0, 0, 0, 1, 1, 1], [0], [0]>} : vector<2x5x16xbf16>, vector<2x5x16xbf16>, vector<2x5x5xf32> -> vector<2x5x5xf32>
    %cst_67 = arith.constant 2.500000e-01 : f32
    %257 = vector.broadcast %cst_67 : f32 to vector<2x5x5xf32>
    %258 = arith.mulf %256, %257 : vector<2x5x5xf32>
    %cst_68 = arith.constant dense<0xFF800000> : vector<2x5xf32>
    %259 = vector.multi_reduction <maximumf>, %258, %cst_68 [2] : vector<2x5x5xf32> to vector<2x5xf32>
    %260 = vector.shape_cast %259 : vector<2x5xf32> to vector<2x5x1xf32>
    %261 = vector.broadcast %260 : vector<2x5x1xf32> to vector<2x5x5xf32>
    %262 = arith.subf %258, %261 : vector<2x5x5xf32>
    %263 = math.exp %262 : vector<2x5x5xf32>
    %cst_69 = arith.constant dense<0.000000e+00> : vector<2x5xf32>
    %264 = vector.multi_reduction <add>, %263, %cst_69 [2] : vector<2x5x5xf32> to vector<2x5xf32>
    %265 = vector.shape_cast %264 : vector<2x5xf32> to vector<2x5x1xf32>
    %266 = tpu.reciprocal %265 {approx = true} : vector<2x5x1xf32> -> vector<2x5x1xf32>
    %267 = vector.broadcast %266 : vector<2x5x1xf32> to vector<2x5x5xf32>
    %268 = arith.mulf %263, %267 : vector<2x5x5xf32>
    %269 = arith.truncf %268 : vector<2x5x5xf32> to vector<2x5x5xbf16>
    %cst_70 = arith.constant dense<0.000000e+00> : vector<2x5x16xf32>
    %270 = tpu.matmul %269, %255, %cst_70 {dimension_numbers = #tpu.dot_dimension_numbers<[2], [1], [1], [2], [0, 0, 0, 1, 1, 2], [0], [0]>} : vector<2x5x5xbf16>, vector<2x5x16xbf16>, vector<2x5x16xf32> -> vector<2x5x16xf32>
    %271 = arith.truncf %270 : vector<2x5x16xf32> to vector<2x5x16xbf16>
    %272 = vector.extract_strided_slice %218 {offsets = [0, 0], sizes = [16, 64], strides = [1, 1]} : vector<64x64xbf16> to vector<16x64xbf16>
    %cst_71 = arith.constant dense<0.000000e+00> : vector<2x5x64xf32>
    %273 = tpu.matmul %271, %272, %cst_71 {dimension_numbers = #tpu.dot_dimension_numbers<[2], [0], [0, 1], [1], [0, 0, 0, 1, 1, 1], [], []>} : vector<2x5x16xbf16>, vector<16x64xbf16>, vector<2x5x64xf32> -> vector<2x5x64xf32>
    %274 = arith.addf %249, %273 : vector<2x5x64xf32>
    %275 = vector.extract_strided_slice %248 {offsets = [0, 0, 16], sizes = [2, 5, 16], strides = [1, 1, 1]} : vector<2x5x192xf32> to vector<2x5x16xf32>
    %276 = arith.truncf %275 : vector<2x5x16xf32> to vector<2x5x16xbf16>
    %277 = vector.extract_strided_slice %248 {offsets = [0, 0, 80], sizes = [2, 5, 16], strides = [1, 1, 1]} : vector<2x5x192xf32> to vector<2x5x16xf32>
    %278 = arith.truncf %277 : vector<2x5x16xf32> to vector<2x5x16xbf16>
    %279 = vector.extract_strided_slice %248 {offsets = [0, 0, 144], sizes = [2, 5, 16], strides = [1, 1, 1]} : vector<2x5x192xf32> to vector<2x5x16xf32>
    %280 = arith.truncf %279 : vector<2x5x16xf32> to vector<2x5x16xbf16>
    %cst_72 = arith.constant dense<0.000000e+00> : vector<2x5x5xf32>
    %281 = tpu.matmul %276, %278, %cst_72 {dimension_numbers = #tpu.dot_dimension_numbers<[2], [2], [1], [1], [0, 0, 0, 1, 1, 1], [0], [0]>} : vector<2x5x16xbf16>, vector<2x5x16xbf16>, vector<2x5x5xf32> -> vector<2x5x5xf32>
    %cst_73 = arith.constant 2.500000e-01 : f32
    %282 = vector.broadcast %cst_73 : f32 to vector<2x5x5xf32>
    %283 = arith.mulf %281, %282 : vector<2x5x5xf32>
    %cst_74 = arith.constant dense<0xFF800000> : vector<2x5xf32>
    %284 = vector.multi_reduction <maximumf>, %283, %cst_74 [2] : vector<2x5x5xf32> to vector<2x5xf32>
    %285 = vector.shape_cast %284 : vector<2x5xf32> to vector<2x5x1xf32>
    %286 = vector.broadcast %285 : vector<2x5x1xf32> to vector<2x5x5xf32>
    %287 = arith.subf %283, %286 : vector<2x5x5xf32>
    %288 = math.exp %287 : vector<2x5x5xf32>
    %cst_75 = arith.constant dense<0.000000e+00> : vector<2x5xf32>
    %289 = vector.multi_reduction <add>, %288, %cst_75 [2] : vector<2x5x5xf32> to vector<2x5xf32>
    %290 = vector.shape_cast %289 : vector<2x5xf32> to vector<2x5x1xf32>
    %291 = tpu.reciprocal %290 {approx = true} : vector<2x5x1xf32> -> vector<2x5x1xf32>
    %292 = vector.broadcast %291 : vector<2x5x1xf32> to vector<2x5x5xf32>
    %293 = arith.mulf %288, %292 : vector<2x5x5xf32>
    %294 = arith.truncf %293 : vector<2x5x5xf32> to vector<2x5x5xbf16>
    %cst_76 = arith.constant dense<0.000000e+00> : vector<2x5x16xf32>
    %295 = tpu.matmul %294, %280, %cst_76 {dimension_numbers = #tpu.dot_dimension_numbers<[2], [1], [1], [2], [0, 0, 0, 1, 1, 2], [0], [0]>} : vector<2x5x5xbf16>, vector<2x5x16xbf16>, vector<2x5x16xf32> -> vector<2x5x16xf32>
    %296 = arith.truncf %295 : vector<2x5x16xf32> to vector<2x5x16xbf16>
    %297 = vector.extract_strided_slice %218 {offsets = [16, 0], sizes = [16, 64], strides = [1, 1]} : vector<64x64xbf16> to vector<16x64xbf16>
    %cst_77 = arith.constant dense<0.000000e+00> : vector<2x5x64xf32>
    %298 = tpu.matmul %296, %297, %cst_77 {dimension_numbers = #tpu.dot_dimension_numbers<[2], [0], [0, 1], [1], [0, 0, 0, 1, 1, 1], [], []>} : vector<2x5x16xbf16>, vector<16x64xbf16>, vector<2x5x64xf32> -> vector<2x5x64xf32>
    %299 = arith.addf %274, %298 : vector<2x5x64xf32>
    %300 = vector.extract_strided_slice %248 {offsets = [0, 0, 32], sizes = [2, 5, 16], strides = [1, 1, 1]} : vector<2x5x192xf32> to vector<2x5x16xf32>
    %301 = arith.truncf %300 : vector<2x5x16xf32> to vector<2x5x16xbf16>
    %302 = vector.extract_strided_slice %248 {offsets = [0, 0, 96], sizes = [2, 5, 16], strides = [1, 1, 1]} : vector<2x5x192xf32> to vector<2x5x16xf32>
    %303 = arith.truncf %302 : vector<2x5x16xf32> to vector<2x5x16xbf16>
    %304 = vector.extract_strided_slice %248 {offsets = [0, 0, 160], sizes = [2, 5, 16], strides = [1, 1, 1]} : vector<2x5x192xf32> to vector<2x5x16xf32>
    %305 = arith.truncf %304 : vector<2x5x16xf32> to vector<2x5x16xbf16>
    %cst_78 = arith.constant dense<0.000000e+00> : vector<2x5x5xf32>
    %306 = tpu.matmul %301, %303, %cst_78 {dimension_numbers = #tpu.dot_dimension_numbers<[2], [2], [1], [1], [0, 0, 0, 1, 1, 1], [0], [0]>} : vector<2x5x16xbf16>, vector<2x5x16xbf16>, vector<2x5x5xf32> -> vector<2x5x5xf32>
    %cst_79 = arith.constant 2.500000e-01 : f32
    %307 = vector.broadcast %cst_79 : f32 to vector<2x5x5xf32>
    %308 = arith.mulf %306, %307 : vector<2x5x5xf32>
    %cst_80 = arith.constant dense<0xFF800000> : vector<2x5xf32>
    %309 = vector.multi_reduction <maximumf>, %308, %cst_80 [2] : vector<2x5x5xf32> to vector<2x5xf32>
    %310 = vector.shape_cast %309 : vector<2x5xf32> to vector<2x5x1xf32>
    %311 = vector.broadcast %310 : vector<2x5x1xf32> to vector<2x5x5xf32>
    %312 = arith.subf %308, %311 : vector<2x5x5xf32>
    %313 = math.exp %312 : vector<2x5x5xf32>
    %cst_81 = arith.constant dense<0.000000e+00> : vector<2x5xf32>
    %314 = vector.multi_reduction <add>, %313, %cst_81 [2] : vector<2x5x5xf32> to vector<2x5xf32>
    %315 = vector.shape_cast %314 : vector<2x5xf32> to vector<2x5x1xf32>
    %316 = tpu.reciprocal %315 {approx = true} : vector<2x5x1xf32> -> vector<2x5x1xf32>
    %317 = vector.broadcast %316 : vector<2x5x1xf32> to vector<2x5x5xf32>
    %318 = arith.mulf %313, %317 : vector<2x5x5xf32>
    %319 = arith.truncf %318 : vector<2x5x5xf32> to vector<2x5x5xbf16>
    %cst_82 = arith.constant dense<0.000000e+00> : vector<2x5x16xf32>
    %320 = tpu.matmul %319, %305, %cst_82 {dimension_numbers = #tpu.dot_dimension_numbers<[2], [1], [1], [2], [0, 0, 0, 1, 1, 2], [0], [0]>} : vector<2x5x5xbf16>, vector<2x5x16xbf16>, vector<2x5x16xf32> -> vector<2x5x16xf32>
    %321 = arith.truncf %320 : vector<2x5x16xf32> to vector<2x5x16xbf16>
    %322 = vector.extract_strided_slice %218 {offsets = [32, 0], sizes = [16, 64], strides = [1, 1]} : vector<64x64xbf16> to vector<16x64xbf16>
    %cst_83 = arith.constant dense<0.000000e+00> : vector<2x5x64xf32>
    %323 = tpu.matmul %321, %322, %cst_83 {dimension_numbers = #tpu.dot_dimension_numbers<[2], [0], [0, 1], [1], [0, 0, 0, 1, 1, 1], [], []>} : vector<2x5x16xbf16>, vector<16x64xbf16>, vector<2x5x64xf32> -> vector<2x5x64xf32>
    %324 = arith.addf %299, %323 : vector<2x5x64xf32>
    %325 = vector.extract_strided_slice %248 {offsets = [0, 0, 48], sizes = [2, 5, 16], strides = [1, 1, 1]} : vector<2x5x192xf32> to vector<2x5x16xf32>
    %326 = arith.truncf %325 : vector<2x5x16xf32> to vector<2x5x16xbf16>
    %327 = vector.extract_strided_slice %248 {offsets = [0, 0, 112], sizes = [2, 5, 16], strides = [1, 1, 1]} : vector<2x5x192xf32> to vector<2x5x16xf32>
    %328 = arith.truncf %327 : vector<2x5x16xf32> to vector<2x5x16xbf16>
    %329 = vector.extract_strided_slice %248 {offsets = [0, 0, 176], sizes = [2, 5, 16], strides = [1, 1, 1]} : vector<2x5x192xf32> to vector<2x5x16xf32>
    %330 = arith.truncf %329 : vector<2x5x16xf32> to vector<2x5x16xbf16>
    %cst_84 = arith.constant dense<0.000000e+00> : vector<2x5x5xf32>
    %331 = tpu.matmul %326, %328, %cst_84 {dimension_numbers = #tpu.dot_dimension_numbers<[2], [2], [1], [1], [0, 0, 0, 1, 1, 1], [0], [0]>} : vector<2x5x16xbf16>, vector<2x5x16xbf16>, vector<2x5x5xf32> -> vector<2x5x5xf32>
    %cst_85 = arith.constant 2.500000e-01 : f32
    %332 = vector.broadcast %cst_85 : f32 to vector<2x5x5xf32>
    %333 = arith.mulf %331, %332 : vector<2x5x5xf32>
    %cst_86 = arith.constant dense<0xFF800000> : vector<2x5xf32>
    %334 = vector.multi_reduction <maximumf>, %333, %cst_86 [2] : vector<2x5x5xf32> to vector<2x5xf32>
    %335 = vector.shape_cast %334 : vector<2x5xf32> to vector<2x5x1xf32>
    %336 = vector.broadcast %335 : vector<2x5x1xf32> to vector<2x5x5xf32>
    %337 = arith.subf %333, %336 : vector<2x5x5xf32>
    %338 = math.exp %337 : vector<2x5x5xf32>
    %cst_87 = arith.constant dense<0.000000e+00> : vector<2x5xf32>
    %339 = vector.multi_reduction <add>, %338, %cst_87 [2] : vector<2x5x5xf32> to vector<2x5xf32>
    %340 = vector.shape_cast %339 : vector<2x5xf32> to vector<2x5x1xf32>
    %341 = tpu.reciprocal %340 {approx = true} : vector<2x5x1xf32> -> vector<2x5x1xf32>
    %342 = vector.broadcast %341 : vector<2x5x1xf32> to vector<2x5x5xf32>
    %343 = arith.mulf %338, %342 : vector<2x5x5xf32>
    %344 = arith.truncf %343 : vector<2x5x5xf32> to vector<2x5x5xbf16>
    %cst_88 = arith.constant dense<0.000000e+00> : vector<2x5x16xf32>
    %345 = tpu.matmul %344, %330, %cst_88 {dimension_numbers = #tpu.dot_dimension_numbers<[2], [1], [1], [2], [0, 0, 0, 1, 1, 2], [0], [0]>} : vector<2x5x5xbf16>, vector<2x5x16xbf16>, vector<2x5x16xf32> -> vector<2x5x16xf32>
    %346 = arith.truncf %345 : vector<2x5x16xf32> to vector<2x5x16xbf16>
    %347 = vector.extract_strided_slice %218 {offsets = [48, 0], sizes = [16, 64], strides = [1, 1]} : vector<64x64xbf16> to vector<16x64xbf16>
    %cst_89 = arith.constant dense<0.000000e+00> : vector<2x5x64xf32>
    %348 = tpu.matmul %346, %347, %cst_89 {dimension_numbers = #tpu.dot_dimension_numbers<[2], [0], [0, 1], [1], [0, 0, 0, 1, 1, 1], [], []>} : vector<2x5x16xbf16>, vector<16x64xbf16>, vector<2x5x64xf32> -> vector<2x5x64xf32>
    %349 = arith.addf %324, %348 : vector<2x5x64xf32>
    %350 = vector.shape_cast %349 : vector<2x5x64xf32> to vector<10x64xf32>
    %351 = arith.addf %206, %350 : vector<10x64xf32>
    %352 = vector.broadcast %210 : vector<1x64xf32> to vector<10x64xf32>
    %353 = arith.addf %351, %352 : vector<10x64xf32>
    %cst_90 = arith.constant dense<0.000000e+00> : vector<10xf32>
    %354 = vector.multi_reduction <add>, %353, %cst_90 [1] : vector<10x64xf32> to vector<10xf32>
    %355 = vector.shape_cast %354 : vector<10xf32> to vector<10x1xf32>
    %cst_91 = arith.constant 6.400000e+01 : f32
    %356 = vector.broadcast %cst_91 : f32 to vector<10x1xf32>
    %357 = arith.divf %355, %356 : vector<10x1xf32>
    %358 = vector.broadcast %357 : vector<10x1xf32> to vector<10x64xf32>
    %359 = arith.subf %353, %358 : vector<10x64xf32>
    %360 = arith.mulf %359, %359 : vector<10x64xf32>
    %cst_92 = arith.constant dense<0.000000e+00> : vector<10xf32>
    %361 = vector.multi_reduction <add>, %360, %cst_92 [1] : vector<10x64xf32> to vector<10xf32>
    %362 = vector.shape_cast %361 : vector<10xf32> to vector<10x1xf32>
    %cst_93 = arith.constant 6.400000e+01 : f32
    %363 = vector.broadcast %cst_93 : f32 to vector<10x1xf32>
    %364 = arith.divf %362, %363 : vector<10x1xf32>
    %365 = vector.broadcast %357 : vector<10x1xf32> to vector<10x64xf32>
    %366 = arith.subf %353, %365 : vector<10x64xf32>
    %cst_94 = arith.constant 9.99999997E-7 : f32
    %367 = vector.broadcast %cst_94 : f32 to vector<10x1xf32>
    %368 = arith.addf %364, %367 : vector<10x1xf32>
    %369 = math.rsqrt %368 : vector<10x1xf32>
    %370 = vector.broadcast %369 : vector<10x1xf32> to vector<10x64xf32>
    %371 = arith.mulf %366, %370 : vector<10x64xf32>
    %372 = vector.broadcast %211 : vector<1x64xf32> to vector<10x64xf32>
    %373 = arith.mulf %371, %372 : vector<10x64xf32>
    %374 = vector.broadcast %212 : vector<1x64xf32> to vector<10x64xf32>
    %375 = arith.addf %373, %374 : vector<10x64xf32>
    %376 = arith.truncf %375 : vector<10x64xf32> to vector<10x64xbf16>
    %cst_95 = arith.constant dense<0.000000e+00> : vector<10x256xf32>
    %377 = tpu.matmul %376, %219, %cst_95 {dimension_numbers = #tpu.dot_dimension_numbers<[1], [0], [0], [1], [0, 0, 1, 1], [], []>} : vector<10x64xbf16>, vector<64x256xbf16>, vector<10x256xf32> -> vector<10x256xf32>
    %378 = vector.broadcast %213 : vector<1x256xf32> to vector<10x256xf32>
    %379 = arith.addf %377, %378 : vector<10x256xf32>
    %cst_96 = arith.constant 5.000000e-01 : f32
    %380 = vector.broadcast %cst_96 : f32 to vector<10x256xf32>
    %381 = arith.mulf %380, %379 : vector<10x256xf32>
    %cst_97 = arith.constant 0.707106769 : f32
    %382 = vector.broadcast %cst_97 : f32 to vector<10x256xf32>
    %383 = arith.mulf %379, %382 : vector<10x256xf32>
    %384 = math.erf %383 : vector<10x256xf32>
    %cst_98 = arith.constant 1.000000e+00 : f32
    %385 = vector.broadcast %cst_98 : f32 to vector<10x256xf32>
    %386 = arith.addf %385, %384 : vector<10x256xf32>
    %387 = arith.mulf %381, %386 : vector<10x256xf32>
    %388 = arith.truncf %387 : vector<10x256xf32> to vector<10x256xbf16>
    %cst_99 = arith.constant dense<0.000000e+00> : vector<10x64xf32>
    %389 = tpu.matmul %388, %221, %cst_99 {dimension_numbers = #tpu.dot_dimension_numbers<[1], [0], [0], [1], [0, 0, 1, 1], [], []>} : vector<10x256xbf16>, vector<256x64xbf16>, vector<10x64xf32> -> vector<10x64xf32>
    %390 = vector.broadcast %214 : vector<1x64xf32> to vector<10x64xf32>
    %391 = arith.addf %389, %390 : vector<10x64xf32>
    %392 = arith.addf %353, %391 : vector<10x64xf32>
    %393 = vector.shape_cast %392 : vector<10x64xf32> to vector<2x5x64xf32>
    %394 = vector.extract_strided_slice %393 {offsets = [0, 0, 0], sizes = [2, 1, 64], strides = [1, 1, 1]} : vector<2x5x64xf32> to vector<2x1x64xf32>
    %395 = vector.shape_cast %394 : vector<2x1x64xf32> to vector<2x64xf32>
    %396 = vector.extract_strided_slice %0 {offsets = [23, 0], sizes = [1, 64], strides = [1, 1]} : vector<26x256xf32> to vector<1x64xf32>
    %397 = vector.extract_strided_slice %0 {offsets = [24, 0], sizes = [1, 64], strides = [1, 1]} : vector<26x256xf32> to vector<1x64xf32>
    %cst_100 = arith.constant dense<0.000000e+00> : vector<2xf32>
    %398 = vector.multi_reduction <add>, %395, %cst_100 [1] : vector<2x64xf32> to vector<2xf32>
    %399 = vector.shape_cast %398 : vector<2xf32> to vector<2x1xf32>
    %cst_101 = arith.constant 6.400000e+01 : f32
    %400 = vector.broadcast %cst_101 : f32 to vector<2x1xf32>
    %401 = arith.divf %399, %400 : vector<2x1xf32>
    %402 = vector.broadcast %401 : vector<2x1xf32> to vector<2x64xf32>
    %403 = arith.subf %395, %402 : vector<2x64xf32>
    %404 = arith.mulf %403, %403 : vector<2x64xf32>
    %cst_102 = arith.constant dense<0.000000e+00> : vector<2xf32>
    %405 = vector.multi_reduction <add>, %404, %cst_102 [1] : vector<2x64xf32> to vector<2xf32>
    %406 = vector.shape_cast %405 : vector<2xf32> to vector<2x1xf32>
    %cst_103 = arith.constant 6.400000e+01 : f32
    %407 = vector.broadcast %cst_103 : f32 to vector<2x1xf32>
    %408 = arith.divf %406, %407 : vector<2x1xf32>
    %409 = vector.broadcast %401 : vector<2x1xf32> to vector<2x64xf32>
    %410 = arith.subf %395, %409 : vector<2x64xf32>
    %cst_104 = arith.constant 9.99999997E-7 : f32
    %411 = vector.broadcast %cst_104 : f32 to vector<2x1xf32>
    %412 = arith.addf %408, %411 : vector<2x1xf32>
    %413 = math.rsqrt %412 : vector<2x1xf32>
    %414 = vector.broadcast %413 : vector<2x1xf32> to vector<2x64xf32>
    %415 = arith.mulf %410, %414 : vector<2x64xf32>
    %416 = vector.broadcast %396 : vector<1x64xf32> to vector<2x64xf32>
    %417 = arith.mulf %415, %416 : vector<2x64xf32>
    %418 = vector.broadcast %397 : vector<1x64xf32> to vector<2x64xf32>
    %419 = arith.addf %417, %418 : vector<2x64xf32>
    %420 = arith.truncf %419 : vector<2x64xf32> to vector<2x64xbf16>
    %c0_105 = arith.constant 0 : index
    %c0_106 = arith.constant 0 : index
    %421 = vector.load %arg6[%c0_105, %c0_106] : memref<64x128xbf16, #tpu.memory_space<vmem>>, vector<64x128xbf16>
    %cst_107 = arith.constant dense<0.000000e+00> : vector<2x128xf32>
    %422 = tpu.matmul %420, %421, %cst_107 {dimension_numbers = #tpu.dot_dimension_numbers<[1], [0], [0], [1], [0, 0, 1, 1], [], []>} : vector<2x64xbf16>, vector<64x128xbf16>, vector<2x128xf32> -> vector<2x128xf32>
    %423 = vector.extract_strided_slice %0 {offsets = [25, 0], sizes = [1, 128], strides = [1, 1]} : vector<26x256xf32> to vector<1x128xf32>
    %424 = vector.broadcast %423 : vector<1x128xf32> to vector<2x128xf32>
    %425 = arith.addf %422, %424 : vector<2x128xf32>
    %c0_108 = arith.constant 0 : index
    %c0_109 = arith.constant 0 : index
    %c0_110 = arith.constant 0 : index
    %426 = vector.load %arg7[%c0_108, %c0_109, %c0_110] : memref<1x2x128xf32, #tpu.memory_space<vmem>>, vector<1x2x128xf32>
    %427 = vector.shape_cast %426 : vector<1x2x128xf32> to vector<2x128xf32>
    %428 = vector.shape_cast %425 : vector<2x128xf32> to vector<1x2x128xf32>
    tpu.vector_store %arg7[%c0_108, %c0_109, %c0_110], %428 {strides = array<i32>} : memref<1x2x128xf32, #tpu.memory_space<vmem>>, vector<1x2x128xf32>,
    return
  }
  func.func @transform_0(%arg0: i32) -> (i32, i32, i32, i32) {
    %c0_i32 = arith.constant 0 : i32
    %c0_i32_0 = arith.constant 0 : i32
    %c0_i32_1 = arith.constant 0 : i32
    %c0_i32_2 = arith.constant 0 : i32
    return %arg0, %c0_i32, %c0_i32_0, %c0_i32_1 : i32, i32, i32, i32
  }
  func.func @transform_1(%arg0: i32) -> (i32, i32) {
    %c0_i32 = arith.constant 0 : i32
    %c0_i32_0 = arith.constant 0 : i32
    %c0_i32_1 = arith.constant 0 : i32
    return %c0_i32, %c0_i32_0 : i32, i32
  }
  func.func @transform_2(%arg0: i32) -> (i32, i32, i32) {
    %c0_i32 = arith.constant 0 : i32
    %c0_i32_0 = arith.constant 0 : i32
    %c0_i32_1 = arith.constant 0 : i32
    %c0_i32_2 = arith.constant 0 : i32
    return %c0_i32, %c0_i32_0, %c0_i32_1 : i32, i32, i32
  }
  func.func @transform_3(%arg0: i32) -> (i32, i32, i32) {
    %c0_i32 = arith.constant 0 : i32
    %c0_i32_0 = arith.constant 0 : i32
    %c0_i32_1 = arith.constant 0 : i32
    %c0_i32_2 = arith.constant 0 : i32
    return %c0_i32, %c0_i32_0, %c0_i32_1 : i32, i32, i32
  }
  func.func @transform_4(%arg0: i32) -> (i32, i32) {
    %c0_i32 = arith.constant 0 : i32
    %c0_i32_0 = arith.constant 0 : i32
    %c0_i32_1 = arith.constant 0 : i32
    return %c0_i32, %c0_i32_0 : i32, i32
  }
  func.func @transform_5(%arg0: i32) -> (i32, i32) {
    %c0_i32 = arith.constant 0 : i32
    %c0_i32_0 = arith.constant 0 : i32
    %c0_i32_1 = arith.constant 0 : i32
    return %c0_i32, %c0_i32_0 : i32, i32
  }
  func.func @transform_6(%arg0: i32) -> (i32, i32, i32) {
    %c0_i32 = arith.constant 0 : i32
    %c0_i32_0 = arith.constant 0 : i32
    %c0_i32_1 = arith.constant 0 : i32
    return %arg0, %c0_i32, %c0_i32_0 : i32, i32, i32
  }
}

</mosaic_0001>

<llo_original>
// kernel: disease_model_forward.1
$region0: #{disease_model_forward.1}
  #allocation0 [shape = 'u32[]', space=smem, size = 0x4, offset = 0x4, fixed_abs, tag = 'smem constant byte address 0x4 - core index']
  #allocation1 [shape = 'u32[72,128]{1,0:T(1,128)}', space=vmem, size = 0x9000, scoped, tag = 'internal scratch']
  %s0 = inlined_call_operand.vmem [shape: f32[1,2,4,768], index: 0, kind: input, shape index: {}]
  %s1 = inlined_call_operand.vmem [shape: bf16[768,64], index: 1, kind: input, shape index: {}]
  %s2 = inlined_call_operand.vmem [shape: bf16[2,64,512], index: 2, kind: input, shape index: {}]
  %s3 = inlined_call_operand.vmem [shape: bf16[2,256,64], index: 3, kind: input, shape index: {}]
  %s4 = inlined_call_operand.vmem [shape: f32[26,256], index: 4, kind: input, shape index: {}]
  %s5 = inlined_call_operand.vmem [shape: bf16[64,128], index: 5, kind: input, shape index: {}]
  %s6 = inlined_call_operand.hbm [shape: f32[1,2,128], index: 6, kind: output, shape index: {}]
  %s7 = sld [smem:[#allocation0]]
  $region34: #{disease_model_forward.1} parent=0
    _
  %s9 = ssub.s32 1, %s7
  %s10 = scalar_select 0, %s9, %s7
  $region1: #{disease_model_forward.1} parent=0
    #allocation2 [shape = 'u8[1024]{0}', space=vmem, size = 0x400, scoped, tag = 'output window, operand 0, single buffered']
    #allocation3 [shape = 's32[1]{0}', space=sflag, size = 0x4, scoped, tag = 'scoped memory for disease_model_forward.1']
    %11 = vsyncpa [#allocation3], 0
    // Predicated region
    $region2: #{disease_model_forward.1} parent=1 // pred_check
      _
    $region3: #{disease_model_forward.1} parent=1 // pred_check_branch
      %13 = sbr.rel (0) target = $region5
    $region4: #{disease_model_forward.1} parent=1 // pred_region
      _
    $region5: #{disease_model_forward.1} parent=1 // pred_fallthru
      _
    // Predicated region
    $region6: #{disease_model_forward.1} parent=1 // pred_check
      _
    $region7: #{disease_model_forward.1} parent=1 // pred_check_branch
      %15 = sbr.rel (0) target = $region9
    $region8: #{disease_model_forward.1} parent=1 // pred_region
      _
    $region9: #{disease_model_forward.1} parent=1 // pred_fallthru
      _
    // Predicated region
    $region10: #{disease_model_forward.1} parent=1 // pred_check
      _
    $region11: #{disease_model_forward.1} parent=1 // pred_check_branch
      %17 = sbr.rel (0) target = $region13
    $region12: #{disease_model_forward.1} parent=1 // pred_region
      _
    $region13: #{disease_model_forward.1} parent=1 // pred_fallthru
      _
    // Predicated region
    $region14: #{disease_model_forward.1} parent=1 // pred_check
      _
    $region15: #{disease_model_forward.1} parent=1 // pred_check_branch
      %19 = sbr.rel (0) target = $region17
    $region16: #{disease_model_forward.1} parent=1 // pred_region
      _
    $region17: #{disease_model_forward.1} parent=1 // pred_fallthru
      _
    // Predicated region
    $region18: #{disease_model_forward.1} parent=1 // pred_check
      _
    $region19: #{disease_model_forward.1} parent=1 // pred_check_branch
      %21 = sbr.rel (0) target = $region21
    $region20: #{disease_model_forward.1} parent=1 // pred_region
      _
    $region21: #{disease_model_forward.1} parent=1 // pred_fallthru
      _
    // Predicated region
    $region22: #{disease_model_forward.1} parent=1 // pred_check
      _
    $region23: #{disease_model_forward.1} parent=1 // pred_check_branch
      %23 = sbr.rel (0) target = $region25
    $region24: #{disease_model_forward.1} parent=1 // pred_region
      _
    $region25: #{disease_model_forward.1} parent=1 // pred_fallthru
      _
    %v25 = vld [vmem:[%s4] sm:$0xff]
    %v26 = vld [vmem:[%s4 + $0x10] sm:$0xff]
    %v27 = vld [vmem:[%s4 + $0x18] sm:$0xff]
    %v28 = vld [vmem:[%s4 + $0x20] sm:$0xff]
    %v29 = vld [vmem:[%s4 + $0x28] sm:$0xff]
    %v30 = vld [vmem:[%s4 + $0x30] sm:$0x3]
    %v31 = vld [vmem:[%s0] sm:$0xff]
    %v32 = vld [vmem:[%s0 + $0x8] sm:$0xff]
    %v33 = vld [vmem:[%s0 + $0x10] sm:$0xff]
    %v34 = vld [vmem:[%s0 + $0x18] sm:$0xff]
    %v35 = vld [vmem:[%s0 + $0x20] sm:$0xff]
    %v36 = vld [vmem:[%s0 + $0x28] sm:$0xff]
    %43 = vst [vmem:[#allocation1] ss:$2 sm:$0xff] %v31
    %s44 = scalar_lea.vmem [#allocation1], 1
    %45 = vst [vmem:[%s44] ss:$2 sm:$0xff] %v34
    %s46 = scalar_lea.vmem [#allocation1], 16
    %47 = vst [vmem:[%s46] ss:$2 sm:$0xff] %v32
    %s48 = scalar_lea.vmem [#allocation1], 17
    %49 = vst [vmem:[%s48] ss:$2 sm:$0xff] %v35
    %s50 = scalar_lea.vmem [#allocation1], 32
    %51 = vst [vmem:[%s50] ss:$2 sm:$0xff] %v33
    %s52 = scalar_lea.vmem [#allocation1], 33
    %53 = vst [vmem:[%s52] ss:$2 sm:$0xff] %v36
    %v54 = vld.sshfl [vmem:[#allocation1] sm:$0xff pattern:$0x75316420]
    %v55 = vld.sshfl [vmem:[#allocation1 + $0x8] sm:$0xff pattern:$0x75316420]
    %v56 = vld.sshfl [vmem:[#allocation1 + $0x10] sm:$0xff pattern:$0x75316420]
    %v57 = vld.sshfl [vmem:[#allocation1 + $0x18] sm:$0xff pattern:$0x75316420]
    %v58 = vld.sshfl [vmem:[#allocation1 + $0x20] sm:$0xff pattern:$0x75316420]
    %v59 = vld.sshfl [vmem:[#allocation1 + $0x28] sm:$0xff pattern:$0x75316420]
    %v66 = vpack.c.bf16 %v54, %v54
    %v67 = vpack.c.bf16 %v55, %v55
    %v68 = vpack.c.bf16 %v56, %v56
    %v69 = vpack.c.bf16 %v57, %v57
    %v70 = vpack.c.bf16 %v58, %v58
    %v71 = vpack.c.bf16 %v59, %v59
    %v72 = vld [vmem:[%s1] sm:$0xf]
    %v73 = vld [vmem:[%s1 + $0x4] sm:$0xf]
    %v74 = vld [vmem:[%s1 + $0x8] sm:$0xf]
    %v75 = vld [vmem:[%s1 + $0xc] sm:$0xf]
    %v76 = vld [vmem:[%s1 + $0x10] sm:$0xf]
    %v77 = vld [vmem:[%s1 + $0x14] sm:$0xf]
    %v78 = vld [vmem:[%s1 + $0x18] sm:$0xf]
    %v79 = vld [vmem:[%s1 + $0x1c] sm:$0xf]
    %v80 = vld [vmem:[%s1 + $0x20] sm:$0xf]
    %v81 = vld [vmem:[%s1 + $0x24] sm:$0xf]
    %v82 = vld [vmem:[%s1 + $0x28] sm:$0xf]
    %v83 = vld [vmem:[%s1 + $0x2c] sm:$0xf]
    %v84 = vld [vmem:[%s1 + $0x30] sm:$0xf]
    %v85 = vld [vmem:[%s1 + $0x34] sm:$0xf]
    %v86 = vld [vmem:[%s1 + $0x38] sm:$0xf]
    %v87 = vld [vmem:[%s1 + $0x3c] sm:$0xf]
    %v88 = vld [vmem:[%s1 + $0x40] sm:$0xf]
    %v89 = vld [vmem:[%s1 + $0x44] sm:$0xf]
    %v90 = vld [vmem:[%s1 + $0x48] sm:$0xf]
    %v91 = vld [vmem:[%s1 + $0x4c] sm:$0xf]
    %v92 = vld [vmem:[%s1 + $0x50] sm:$0xf]
    %v93 = vld [vmem:[%s1 + $0x54] sm:$0xf]
    %v94 = vld [vmem:[%s1 + $0x58] sm:$0xf]
    %v95 = vld [vmem:[%s1 + $0x5c] sm:$0xf]
    %v96 = vld [vmem:[%s1 + $0x60] sm:$0xf]
    %v97 = vld [vmem:[%s1 + $0x64] sm:$0xf]
    %v98 = vld [vmem:[%s1 + $0x68] sm:$0xf]
    %v99 = vld [vmem:[%s1 + $0x6c] sm:$0xf]
    %v100 = vld [vmem:[%s1 + $0x70] sm:$0xf]
    %v101 = vld [vmem:[%s1 + $0x74] sm:$0xf]
    %v102 = vld [vmem:[%s1 + $0x78] sm:$0xf]
    %v103 = vld [vmem:[%s1 + $0x7c] sm:$0xf]
    %v104 = vld [vmem:[%s1 + $0x80] sm:$0xf]
    %v105 = vld [vmem:[%s1 + $0x84] sm:$0xf]
    %v106 = vld [vmem:[%s1 + $0x88] sm:$0xf]
    %v107 = vld [vmem:[%s1 + $0x8c] sm:$0xf]
    %v108 = vld [vmem:[%s1 + $0x90] sm:$0xf]
    %v109 = vld [vmem:[%s1 + $0x94] sm:$0xf]
    %v110 = vld [vmem:[%s1 + $0x98] sm:$0xf]
    %v111 = vld [vmem:[%s1 + $0x9c] sm:$0xf]
    %v112 = vld [vmem:[%s1 + $0xa0] sm:$0xf]
    %v113 = vld [vmem:[%s1 + $0xa4] sm:$0xf]
    %v114 = vld [vmem:[%s1 + $0xa8] sm:$0xf]
    %v115 = vld [vmem:[%s1 + $0xac] sm:$0xf]
    %v116 = vld [vmem:[%s1 + $0xb0] sm:$0xf]
    %v117 = vld [vmem:[%s1 + $0xb4] sm:$0xf]
    %v118 = vld [vmem:[%s1 + $0xb8] sm:$0xf]
    %v119 = vld [vmem:[%s1 + $0xbc] sm:$0xf]
    %v120 = vld [vmem:[%s1 + $0xc0] sm:$0xf]
    %v121 = vld [vmem:[%s1 + $0xc4] sm:$0xf]
    %v122 = vld [vmem:[%s1 + $0xc8] sm:$0xf]
    %v123 = vld [vmem:[%s1 + $0xcc] sm:$0xf]
    %v124 = vld [vmem:[%s1 + $0xd0] sm:$0xf]
    %v125 = vld [vmem:[%s1 + $0xd4] sm:$0xf]
    %v126 = vld [vmem:[%s1 + $0xd8] sm:$0xf]
    %v127 = vld [vmem:[%s1 + $0xdc] sm:$0xf]
    %v128 = vld [vmem:[%s1 + $0xe0] sm:$0xf]
    %v129 = vld [vmem:[%s1 + $0xe4] sm:$0xf]
    %v130 = vld [vmem:[%s1 + $0xe8] sm:$0xf]
    %v131 = vld [vmem:[%s1 + $0xec] sm:$0xf]
    %v132 = vld [vmem:[%s1 + $0xf0] sm:$0xf]
    %v133 = vld [vmem:[%s1 + $0xf4] sm:$0xf]
    %v134 = vld [vmem:[%s1 + $0xf8] sm:$0xf]
    %v135 = vld [vmem:[%s1 + $0xfc] sm:$0xf]
    %v136 = vld [vmem:[%s1 + $0x100] sm:$0xf]
    %v137 = vld [vmem:[%s1 + $0x104] sm:$0xf]
    %v138 = vld [vmem:[%s1 + $0x108] sm:$0xf]
    %v139 = vld [vmem:[%s1 + $0x10c] sm:$0xf]
    %v140 = vld [vmem:[%s1 + $0x110] sm:$0xf]
    %v141 = vld [vmem:[%s1 + $0x114] sm:$0xf]
    %v142 = vld [vmem:[%s1 + $0x118] sm:$0xf]
    %v143 = vld [vmem:[%s1 + $0x11c] sm:$0xf]
    %v144 = vld [vmem:[%s1 + $0x120] sm:$0xf]
    %v145 = vld [vmem:[%s1 + $0x124] sm:$0xf]
    %v146 = vld [vmem:[%s1 + $0x128] sm:$0xf]
    %v147 = vld [vmem:[%s1 + $0x12c] sm:$0xf]
    %v148 = vld [vmem:[%s1 + $0x130] sm:$0xf]
    %v149 = vld [vmem:[%s1 + $0x134] sm:$0xf]
    %v150 = vld [vmem:[%s1 + $0x138] sm:$0xf]
    %v151 = vld [vmem:[%s1 + $0x13c] sm:$0xf]
    %v152 = vld [vmem:[%s1 + $0x140] sm:$0xf]
    %v153 = vld [vmem:[%s1 + $0x144] sm:$0xf]
    %v154 = vld [vmem:[%s1 + $0x148] sm:$0xf]
    %v155 = vld [vmem:[%s1 + $0x14c] sm:$0xf]
    %v156 = vld [vmem:[%s1 + $0x150] sm:$0xf]
    %v157 = vld [vmem:[%s1 + $0x154] sm:$0xf]
    %v158 = vld [vmem:[%s1 + $0x158] sm:$0xf]
    %v159 = vld [vmem:[%s1 + $0x15c] sm:$0xf]
    %v160 = vld [vmem:[%s1 + $0x160] sm:$0xf]
    %v161 = vld [vmem:[%s1 + $0x164] sm:$0xf]
    %v162 = vld [vmem:[%s1 + $0x168] sm:$0xf]
    %v163 = vld [vmem:[%s1 + $0x16c] sm:$0xf]
    %v164 = vld [vmem:[%s1 + $0x170] sm:$0xf]
    %v165 = vld [vmem:[%s1 + $0x174] sm:$0xf]
    %v166 = vld [vmem:[%s1 + $0x178] sm:$0xf]
    %v167 = vld [vmem:[%s1 + $0x17c] sm:$0xf]
    %v168 = vperm.slane %v25, 0
    %v265 = vunpack.c.l.b16 %v72
    %v266 = vunpack.c.l.b16 %v73
    %v267 = vunpack.c.l.b16 %v74
    %v268 = vunpack.c.l.b16 %v75
    %v269 = vunpack.c.l.b16 %v76
    %v270 = vunpack.c.l.b16 %v77
    %v271 = vunpack.c.l.b16 %v78
    %v272 = vunpack.c.l.b16 %v79
    %v273 = vunpack.c.l.b16 %v80
    %v274 = vunpack.c.l.b16 %v81
    %v275 = vunpack.c.l.b16 %v82
    %v276 = vunpack.c.l.b16 %v83
    %v277 = vunpack.c.l.b16 %v84
    %v278 = vunpack.c.l.b16 %v85
    %v279 = vunpack.c.l.b16 %v86
    %v280 = vunpack.c.l.b16 %v87
    %v281 = vunpack.c.l.b16 %v88
    %v282 = vunpack.c.l.b16 %v89
    %v283 = vunpack.c.l.b16 %v90
    %v284 = vunpack.c.l.b16 %v91
    %v285 = vunpack.c.l.b16 %v92
    %v286 = vunpack.c.l.b16 %v93
    %v287 = vunpack.c.l.b16 %v94
    %v288 = vunpack.c.l.b16 %v95
    %v289 = vunpack.c.l.b16 %v96
    %v290 = vunpack.c.l.b16 %v97
    %v291 = vunpack.c.l.b16 %v98
    %v292 = vunpack.c.l.b16 %v99
    %v293 = vunpack.c.l.b16 %v100
    %v294 = vunpack.c.l.b16 %v101
    %v295 = vunpack.c.l.b16 %v102
    %v296 = vunpack.c.l.b16 %v103
    %v297 = vunpack.c.l.b16 %v104
    %v298 = vunpack.c.l.b16 %v105
    %v299 = vunpack.c.l.b16 %v106
    %v300 = vunpack.c.l.b16 %v107
    %v301 = vunpack.c.l.b16 %v108
    %v302 = vunpack.c.l.b16 %v109
    %v303 = vunpack.c.l.b16 %v110
    %v304 = vunpack.c.l.b16 %v111
    %v305 = vunpack.c.l.b16 %v112
    %v306 = vunpack.c.l.b16 %v113
    %v307 = vunpack.c.l.b16 %v114
    %v308 = vunpack.c.l.b16 %v115
    %v309 = vunpack.c.l.b16 %v116
    %v310 = vunpack.c.l.b16 %v117
    %v311 = vunpack.c.l.b16 %v118
    %v312 = vunpack.c.l.b16 %v119
    %v313 = vunpack.c.l.b16 %v120
    %v314 = vunpack.c.l.b16 %v121
    %v315 = vunpack.c.l.b16 %v122
    %v316 = vunpack.c.l.b16 %v123
    %v317 = vunpack.c.l.b16 %v124
    %v318 = vunpack.c.l.b16 %v125
    %v319 = vunpack.c.l.b16 %v126
    %v320 = vunpack.c.l.b16 %v127
    %v321 = vunpack.c.l.b16 %v128
    %v322 = vunpack.c.l.b16 %v129
    %v323 = vunpack.c.l.b16 %v130
    %v324 = vunpack.c.l.b16 %v131
    %v325 = vunpack.c.l.b16 %v132
    %v326 = vunpack.c.l.b16 %v133
    %v327 = vunpack.c.l.b16 %v134
    %v328 = vunpack.c.l.b16 %v135
    %v329 = vunpack.c.l.b16 %v136
    %v330 = vunpack.c.l.b16 %v137
    %v331 = vunpack.c.l.b16 %v138
    %v332 = vunpack.c.l.b16 %v139
    %v333 = vunpack.c.l.b16 %v140
    %v334 = vunpack.c.l.b16 %v141
    %v335 = vunpack.c.l.b16 %v142
    %v336 = vunpack.c.l.b16 %v143
    %v337 = vunpack.c.l.b16 %v144
    %v338 = vunpack.c.l.b16 %v145
    %v339 = vunpack.c.l.b16 %v146
    %v340 = vunpack.c.l.b16 %v147
    %v341 = vunpack.c.l.b16 %v148
    %v342 = vunpack.c.l.b16 %v149
    %v343 = vunpack.c.l.b16 %v150
    %v344 = vunpack.c.l.b16 %v151
    %v345 = vunpack.c.l.b16 %v152
    %v346 = vunpack.c.l.b16 %v153
    %v347 = vunpack.c.l.b16 %v154
    %v348 = vunpack.c.l.b16 %v155
    %v349 = vunpack.c.l.b16 %v156
    %v350 = vunpack.c.l.b16 %v157
    %v351 = vunpack.c.l.b16 %v158
    %v352 = vunpack.c.l.b16 %v159
    %v353 = vunpack.c.l.b16 %v160
    %v354 = vunpack.c.l.b16 %v161
    %v355 = vunpack.c.l.b16 %v162
    %v356 = vunpack.c.l.b16 %v163
    %v357 = vunpack.c.l.b16 %v164
    %v358 = vunpack.c.l.b16 %v165
    %v359 = vunpack.c.l.b16 %v166
    %v360 = vunpack.c.l.b16 %v167
    %v361 = vpack.c.b16 %v266, %v265
    %v362 = vpack.c.b16 %v268, %v267
    %v363 = vpack.c.b16 %v270, %v269
    %v364 = vpack.c.b16 %v272, %v271
    %v365 = vpack.c.b16 %v274, %v273
    %v366 = vpack.c.b16 %v276, %v275
    %v367 = vpack.c.b16 %v278, %v277
    %v368 = vpack.c.b16 %v280, %v279
    %v369 = vpack.c.b16 %v282, %v281
    %v370 = vpack.c.b16 %v284, %v283
    %v371 = vpack.c.b16 %v286, %v285
    %v372 = vpack.c.b16 %v288, %v287
    %v373 = vpack.c.b16 %v290, %v289
    %v374 = vpack.c.b16 %v292, %v291
    %v375 = vpack.c.b16 %v294, %v293
    %v376 = vpack.c.b16 %v296, %v295
    %v377 = vpack.c.b16 %v298, %v297
    %v378 = vpack.c.b16 %v300, %v299
    %v379 = vpack.c.b16 %v302, %v301
    %v380 = vpack.c.b16 %v304, %v303
    %v381 = vpack.c.b16 %v306, %v305
    %v382 = vpack.c.b16 %v308, %v307
    %v383 = vpack.c.b16 %v310, %v309
    %v384 = vpack.c.b16 %v312, %v311
    %v385 = vpack.c.b16 %v314, %v313
    %v386 = vpack.c.b16 %v316, %v315
    %v387 = vpack.c.b16 %v318, %v317
    %v388 = vpack.c.b16 %v320, %v319
    %v389 = vpack.c.b16 %v322, %v321
    %v390 = vpack.c.b16 %v324, %v323
    %v391 = vpack.c.b16 %v326, %v325
    %v392 = vpack.c.b16 %v328, %v327
    %v393 = vpack.c.b16 %v330, %v329
    %v394 = vpack.c.b16 %v332, %v331
    %v395 = vpack.c.b16 %v334, %v333
    %v396 = vpack.c.b16 %v336, %v335
    %v397 = vpack.c.b16 %v338, %v337
    %v398 = vpack.c.b16 %v340, %v339
    %v399 = vpack.c.b16 %v342, %v341
    %v400 = vpack.c.b16 %v344, %v343
    %v401 = vpack.c.b16 %v346, %v345
    %v402 = vpack.c.b16 %v348, %v347
    %v403 = vpack.c.b16 %v350, %v349
    %v404 = vpack.c.b16 %v352, %v351
    %v405 = vpack.c.b16 %v354, %v353
    %v406 = vpack.c.b16 %v356, %v355
    %v407 = vpack.c.b16 %v358, %v357
    %v408 = vpack.c.b16 %v360, %v359
    %457 = vmatpush.bf16.msra.mxu0 %v368
    %458 = vmatpush.bf16.msra.mxu0 %v367
    %459 = vmatpush.bf16.msra.mxu0 %v366
    %460 = vmatpush.bf16.msra.mxu0 %v365
    %461 = vmatpush.bf16.msra.mxu0 %v364
    %462 = vmatpush.bf16.msra.mxu0 %v363
    %463 = vmatpush.bf16.msra.mxu0 %v362
    %464 = vmatpush.bf16.msra.mxu0 %v361
    %465 = vmatmul.bf16.gmra.mxu0 %v66
    %v466 = vpop.f32.mrf.mxu0
    %v467 = vadd.f32 %v168, %v466
    %v468 = vpop.f32.mrf.mxu0
    %469 = vdwg.mxu0
    %470 = vmatpush.bf16.msra.mxu0 %v376
    %471 = vmatpush.bf16.msra.mxu0 %v375
    %472 = vmatpush.bf16.msra.mxu0 %v374
    %473 = vmatpush.bf16.msra.mxu0 %v373
    %474 = vmatpush.bf16.msra.mxu0 %v372
    %475 = vmatpush.bf16.msra.mxu0 %v371
    %476 = vmatpush.bf16.msra.mxu0 %v370
    %477 = vmatpush.bf16.msra.mxu0 %v369
    %478 = vmatmul.bf16.gmra.mxu0 %v67
    %v479 = vpop.f32.mrf.mxu0
    %v480 = vadd.f32 %v467, %v479
    %v481 = vpop.f32.mrf.mxu0
    %482 = vdwg.mxu0
    %483 = vmatpush.bf16.msra.mxu0 %v384
    %484 = vmatpush.bf16.msra.mxu0 %v383
    %485 = vmatpush.bf16.msra.mxu0 %v382
    %486 = vmatpush.bf16.msra.mxu0 %v381
    %487 = vmatpush.bf16.msra.mxu0 %v380
    %488 = vmatpush.bf16.msra.mxu0 %v379
    %489 = vmatpush.bf16.msra.mxu0 %v378
    %490 = vmatpush.bf16.msra.mxu0 %v377
    %491 = vmatmul.bf16.gmra.mxu0 %v68
    %v492 = vpop.f32.mrf.mxu0
    %v493 = vadd.f32 %v480, %v492
    %v494 = vpop.f32.mrf.mxu0
    %495 = vdwg.mxu0
    %496 = vmatpush.bf16.msra.mxu0 %v392
    %497 = vmatpush.bf16.msra.mxu0 %v391
    %498 = vmatpush.bf16.msra.mxu0 %v390
    %499 = vmatpush.bf16.msra.mxu0 %v389
    %500 = vmatpush.bf16.msra.mxu0 %v388
    %501 = vmatpush.bf16.msra.mxu0 %v387
    %502 = vmatpush.bf16.msra.mxu0 %v386
    %503 = vmatpush.bf16.msra.mxu0 %v385
    %504 = vmatmul.bf16.gmra.mxu0 %v69
    %v505 = vpop.f32.mrf.mxu0
    %v506 = vadd.f32 %v493, %v505
    %v507 = vpop.f32.mrf.mxu0
    %508 = vdwg.mxu0
    %509 = vmatpush.bf16.msra.mxu0 %v400
    %510 = vmatpush.bf16.msra.mxu0 %v399
    %511 = vmatpush.bf16.msra.mxu0 %v398
    %512 = vmatpush.bf16.msra.mxu0 %v397
    %513 = vmatpush.bf16.msra.mxu0 %v396
    %514 = vmatpush.bf16.msra.mxu0 %v395
    %515 = vmatpush.bf16.msra.mxu0 %v394
    %516 = vmatpush.bf16.msra.mxu0 %v393
    %517 = vmatmul.bf16.gmra.mxu0 %v70
    %v518 = vpop.f32.mrf.mxu0
    %v519 = vadd.f32 %v506, %v518
    %v520 = vpop.f32.mrf.mxu0
    %521 = vdwg.mxu0
    %522 = vmatpush.bf16.msra.mxu0 %v408
    %523 = vmatpush.bf16.msra.mxu0 %v407
    %524 = vmatpush.bf16.msra.mxu0 %v406
    %525 = vmatpush.bf16.msra.mxu0 %v405
    %526 = vmatpush.bf16.msra.mxu0 %v404
    %527 = vmatpush.bf16.msra.mxu0 %v403
    %528 = vmatpush.bf16.msra.mxu0 %v402
    %529 = vmatpush.bf16.msra.mxu0 %v401
    %530 = vmatmul.bf16.gmra.mxu0 %v71
    %v531 = vpop.f32.mrf.mxu0
    %v532 = vadd.f32 %v519, %v531
    %v533 = vpop.f32.mrf.mxu0
    %534 = vdwg.mxu0
    %v536 = vrot.slane %v532, 4
    %v538 = vrot.slane %v25, 1
    %540 = vst [vmem:[#allocation1] ss:$2 sm:$0xff] %v532
    %v541 = vld.sshfl [vmem:[#allocation1] sm:$0xff pattern:$0x75316420]
    %s542 = scalar_lea.vmem [#allocation1], 16
    %543 = vst [vmem:[%s542] ss:$2 sm:$0xff] %v536
    %v544 = vld.sshfl [vmem:[#allocation1 + $0x10] sm:$0xff pattern:$0x75316420]
    %v545 = vrot.slane %v541, 7
    %v546 = vrot.slane %v544, 7
    %vm549 = vcmask 1040384
    %v550 = vsel %vm549, %v538, %v545
    %v551 = vsel %vm549, %v538, %v546
    %v552 = vrot.slane %v25, 2
    %v554 = vadd.f32 %v550, %v552
    %v555 = vadd.f32 %v551, %v552
    %v558 = vrot.slane %v554, 1
    %v559 = vrot.slane %v554, 2
    %v560 = vrot.slane %v554, 3
    %v561 = vrot.slane %v554, 4
    %v562 = vrot.slane %v555, 1
    %v563 = vrot.slane %v555, 2
    %v564 = vrot.slane %v555, 3
    %v565 = vrot.slane %v555, 4
    %v574 = vld [vmem:[%s2] sm:$0xff]
    %v575 = vld [vmem:[%s2 + $0x8] sm:$0xff]
    %v576 = vld [vmem:[%s2 + $0x10] sm:$0xff]
    %v577 = vld [vmem:[%s2 + $0x18] sm:$0xff]
    %v578 = vld [vmem:[%s2 + $0x20] sm:$0xff]
    %v579 = vld [vmem:[%s2 + $0x28] sm:$0xff]
    %v580 = vld [vmem:[%s2 + $0x30] sm:$0xff]
    %v581 = vld [vmem:[%s2 + $0x38] sm:$0xff]
    %v582 = vld [vmem:[%s2 + $0x40] sm:$0xff]
    %v583 = vld [vmem:[%s2 + $0x48] sm:$0xff]
    %v584 = vld [vmem:[%s2 + $0x50] sm:$0xff]
    %v585 = vld [vmem:[%s2 + $0x58] sm:$0xff]
    %v586 = vld [vmem:[%s2 + $0x60] sm:$0xff]
    %v587 = vld [vmem:[%s2 + $0x68] sm:$0xff]
    %v588 = vld [vmem:[%s2 + $0x70] sm:$0xff]
    %v589 = vld [vmem:[%s2 + $0x78] sm:$0xff]
    %v590 = vld [vmem:[%s3] sm:$0xf]
    %v591 = vld [vmem:[%s3 + $0x4] sm:$0xf]
    %v592 = vld [vmem:[%s3 + $0x8] sm:$0xf]
    %v593 = vld [vmem:[%s3 + $0xc] sm:$0xf]
    %v594 = vld [vmem:[%s3 + $0x10] sm:$0xf]
    %v595 = vld [vmem:[%s3 + $0x14] sm:$0xf]
    %v596 = vld [vmem:[%s3 + $0x18] sm:$0xf]
    %v597 = vld [vmem:[%s3 + $0x1c] sm:$0xf]
    %v598 = vld [vmem:[%s3 + $0x20] sm:$0xf]
    %v599 = vld [vmem:[%s3 + $0x24] sm:$0xf]
    %v600 = vld [vmem:[%s3 + $0x28] sm:$0xf]
    %v601 = vld [vmem:[%s3 + $0x2c] sm:$0xf]
    %v602 = vld [vmem:[%s3 + $0x30] sm:$0xf]
    %v603 = vld [vmem:[%s3 + $0x34] sm:$0xf]
    %v604 = vld [vmem:[%s3 + $0x38] sm:$0xf]
    %v605 = vld [vmem:[%s3 + $0x3c] sm:$0xf]
    %v606 = vld [vmem:[%s3 + $0x40] sm:$0xf]
    %v607 = vld [vmem:[%s3 + $0x44] sm:$0xf]
    %v608 = vld [vmem:[%s3 + $0x48] sm:$0xf]
    %v609 = vld [vmem:[%s3 + $0x4c] sm:$0xf]
    %v610 = vld [vmem:[%s3 + $0x50] sm:$0xf]
    %v611 = vld [vmem:[%s3 + $0x54] sm:$0xf]
    %v612 = vld [vmem:[%s3 + $0x58] sm:$0xf]
    %v613 = vld [vmem:[%s3 + $0x5c] sm:$0xf]
    %v614 = vld [vmem:[%s3 + $0x60] sm:$0xf]
    %v615 = vld [vmem:[%s3 + $0x64] sm:$0xf]
    %v616 = vld [vmem:[%s3 + $0x68] sm:$0xf]
    %v617 = vld [vmem:[%s3 + $0x6c] sm:$0xf]
    %v618 = vld [vmem:[%s3 + $0x70] sm:$0xf]
    %v619 = vld [vmem:[%s3 + $0x74] sm:$0xf]
    %v620 = vld [vmem:[%s3 + $0x78] sm:$0xf]
    %v621 = vld [vmem:[%s3 + $0x7c] sm:$0xf]
    %622 = vst [vmem:[#allocation1] ss:$9 sm:$0xff] %v554
    %s623 = scalar_lea.vmem [#allocation1], 1
    %624 = vst [vmem:[%s623] ss:$9 sm:$0xff] %v558
    %s625 = scalar_lea.vmem [#allocation1], 2
    %626 = vst [vmem:[%s625] ss:$9 sm:$0xff] %v559
    %s627 = scalar_lea.vmem [#allocation1], 3
    %628 = vst [vmem:[%s627] ss:$9 sm:$0xff] %v560
    %s629 = scalar_lea.vmem [#allocation1], 4
    %630 = vst [vmem:[%s629] ss:$9 sm:$0xff] %v561
    %s631 = scalar_lea.vmem [#allocation1], 5
    %632 = vst [vmem:[%s631] ss:$9 sm:$0xff] %v555
    %s633 = scalar_lea.vmem [#allocation1], 6
    %634 = vst [vmem:[%s633] ss:$9 sm:$0xff] %v562
    %s635 = scalar_lea.vmem [#allocation1], 7
    %636 = vst [vmem:[%s635] ss:$9 sm:$0xff] %v563
    %v637 = vld [vmem:[#allocation1] sm:$0xff]
    %638 = vst [vmem:[#allocation1] ss:$9 sm:$0xff] %v564
    %639 = vst [vmem:[%s623] ss:$9 sm:$0xff] %v565
    %v640 = vld [vmem:[#allocation1] sm:$0xff]
    %vm643 = vcmask 523264
    %v644 = vsel %vm643, %v637, 0.0
    %645 = vadd.xlane.f32.xlu0 %v644
    %v646 = vpop.xlane.xlu0 %645
    %vm647 = vcmask 517120
    %v648 = vsel %vm647, %v640, 0.0
    %649 = vadd.xlane.f32.xlu0 %v648
    %v650 = vpop.xlane.xlu0 %649
    %v651 = vrcp.pop 64.0
    %v652 = vmul.f32 64.0, %v651
    %v653 = vsub.f32 1.0, %v652
    %v654 = vmul.f32 %v651, %v653
    %v655 = vadd.f32 %v651, %v654
    %vm656 = vweird.f32 %v651
    %v657 = vsel %vm656, %v651, %v655
    %v658 = vmul.f32 %v646, %v657
    %v659 = vmul.f32 %v650, %v657
    %v662 = vperm.slane %v658, 0
    %v663 = vperm.slane %v658, 1
    %v664 = vperm.slane %v658, 2
    %v665 = vperm.slane %v658, 3
    %v666 = vperm.slane %v658, 4
    %v667 = vperm.slane %v658, 5
    %v668 = vperm.slane %v658, 6
    %v669 = vperm.slane %v658, 7
    %v670 = vperm.slane %v659, 0
    %v671 = vperm.slane %v659, 1
    %v682 = vsub.f32 %v554, %v662
    %v683 = vsub.f32 %v558, %v663
    %v684 = vsub.f32 %v559, %v664
    %v685 = vsub.f32 %v560, %v665
    %v686 = vsub.f32 %v561, %v666
    %v687 = vsub.f32 %v555, %v667
    %v688 = vsub.f32 %v562, %v668
    %v689 = vsub.f32 %v563, %v669
    %v690 = vsub.f32 %v564, %v670
    %v691 = vsub.f32 %v565, %v671
    %v692 = vmul.f32 %v682, %v682
    %v693 = vmul.f32 %v683, %v683
    %v694 = vmul.f32 %v684, %v684
    %v695 = vmul.f32 %v685, %v685
    %v696 = vmul.f32 %v686, %v686
    %v697 = vmul.f32 %v687, %v687
    %v698 = vmul.f32 %v688, %v688
    %v699 = vmul.f32 %v689, %v689
    %v700 = vmul.f32 %v690, %v690
    %v701 = vmul.f32 %v691, %v691
    %712 = vst [vmem:[#allocation1] ss:$9 sm:$0xff] %v692
    %s713 = scalar_lea.vmem [#allocation1], 1
    %714 = vst [vmem:[%s713] ss:$9 sm:$0xff] %v693
    %s715 = scalar_lea.vmem [#allocation1], 2
    %716 = vst [vmem:[%s715] ss:$9 sm:$0xff] %v694
    %s717 = scalar_lea.vmem [#allocation1], 3
    %718 = vst [vmem:[%s717] ss:$9 sm:$0xff] %v695
    %s719 = scalar_lea.vmem [#allocation1], 4
    %720 = vst [vmem:[%s719] ss:$9 sm:$0xff] %v696
    %s721 = scalar_lea.vmem [#allocation1], 5
    %722 = vst [vmem:[%s721] ss:$9 sm:$0xff] %v697
    %s723 = scalar_lea.vmem [#allocation1], 6
    %724 = vst [vmem:[%s723] ss:$9 sm:$0xff] %v698
    %s725 = scalar_lea.vmem [#allocation1], 7
    %726 = vst [vmem:[%s725] ss:$9 sm:$0xff] %v699
    %v727 = vld [vmem:[#allocation1] sm:$0xff]
    %728 = vst [vmem:[#allocation1] ss:$9 sm:$0xff] %v700
    %729 = vst [vmem:[%s713] ss:$9 sm:$0xff] %v701
    %v730 = vld [vmem:[#allocation1] sm:$0xff]
    %v733 = vsel %vm643, %v727, 0.0
    %734 = vadd.xlane.f32.xlu0 %v733
    %v735 = vpop.xlane.xlu0 %734
    %v736 = vsel %vm647, %v730, 0.0
    %737 = vadd.xlane.f32.xlu0 %v736
    %v738 = vpop.xlane.xlu0 %737
    %v739 = vmul.f32 %v735, %v657
    %v740 = vmul.f32 %v738, %v657
    %v741 = vadd.f32 %v739, 1e-06
    %v742 = vadd.f32 %v740, 1e-06
    %v743 = vrsqrt.pop %v741
    %v744 = vmul.f32 %v743, %v741
    %v745 = vmul.f32 %v744, %v743
    %v746 = vmul.f32 0.5, %v745
    %v747 = vsub.f32 1.5, %v746
    %v748 = vmul.f32 %v743, %v747
    %vm749 = vweird.f32 %v741
    %vm750 = vweird.f32 %v743
    %vm751 = vmor %vm749, %vm750
    %v752 = vsel %vm751, %v743, %v748
    %v753 = vrsqrt.pop %v742
    %v754 = vmul.f32 %v753, %v742
    %v755 = vmul.f32 %v754, %v753
    %v756 = vmul.f32 0.5, %v755
    %v757 = vsub.f32 1.5, %v756
    %v758 = vmul.f32 %v753, %v757
    %vm759 = vweird.f32 %v742
    %vm760 = vweird.f32 %v753
    %vm761 = vmor %vm759, %vm760
    %v762 = vsel %vm761, %v753, %v758
    %v765 = vperm.slane %v752, 0
    %v766 = vperm.slane %v752, 1
    %v767 = vperm.slane %v752, 2
    %v768 = vperm.slane %v752, 3
    %v769 = vperm.slane %v752, 4
    %v770 = vperm.slane %v752, 5
    %v771 = vperm.slane %v752, 6
    %v772 = vperm.slane %v752, 7
    %v773 = vperm.slane %v762, 0
    %v774 = vperm.slane %v762, 1
    %v785 = vmul.f32 %v682, %v765
    %v786 = vmul.f32 %v683, %v766
    %v787 = vmul.f32 %v684, %v767
    %v788 = vmul.f32 %v685, %v768
    %v789 = vmul.f32 %v686, %v769
    %v790 = vmul.f32 %v687, %v770
    %v791 = vmul.f32 %v688, %v771
    %v792 = vmul.f32 %v689, %v772
    %v793 = vmul.f32 %v690, %v773
    %v794 = vmul.f32 %v691, %v774
    %v795 = vperm.slane %v25, 7
    %v797 = vrot.slane %v795, 1
    %v798 = vrot.slane %v795, 2
    %v799 = vrot.slane %v795, 3
    %v800 = vrot.slane %v795, 4
    %v801 = vrot.slane %v795, 5
    %v802 = vrot.slane %v795, 6
    %v803 = vrot.slane %v795, 7
    %v811 = vmul.f32 %v785, %v795
    %v812 = vmul.f32 %v786, %v797
    %v813 = vmul.f32 %v787, %v798
    %v814 = vmul.f32 %v788, %v799
    %v815 = vmul.f32 %v789, %v800
    %v816 = vmul.f32 %v790, %v801
    %v817 = vmul.f32 %v791, %v802
    %v818 = vmul.f32 %v792, %v803
    %v819 = vmul.f32 %v793, %v795
    %v820 = vmul.f32 %v794, %v797
    %v821 = vperm.slane %v26, 0
    %v823 = vrot.slane %v821, 1
    %v824 = vrot.slane %v821, 2
    %v825 = vrot.slane %v821, 3
    %v826 = vrot.slane %v821, 4
    %v827 = vrot.slane %v821, 5
    %v828 = vrot.slane %v821, 6
    %v829 = vrot.slane %v821, 7
    %v837 = vadd.f32 %v811, %v821
    %v838 = vadd.f32 %v812, %v823
    %v839 = vadd.f32 %v813, %v824
    %v840 = vadd.f32 %v814, %v825
    %v841 = vadd.f32 %v815, %v826
    %v842 = vadd.f32 %v816, %v827
    %v843 = vadd.f32 %v817, %v828
    %v844 = vadd.f32 %v818, %v829
    %v845 = vadd.f32 %v819, %v821
    %v846 = vadd.f32 %v820, %v823
    %857 = vst [vmem:[#allocation1] ss:$9 sm:$0xff] %v837
    %s858 = scalar_lea.vmem [#allocation1], 1
    %859 = vst [vmem:[%s858] ss:$9 sm:$0xff] %v838
    %s860 = scalar_lea.vmem [#allocation1], 2
    %861 = vst [vmem:[%s860] ss:$9 sm:$0xff] %v839
    %s862 = scalar_lea.vmem [#allocation1], 3
    %863 = vst [vmem:[%s862] ss:$9 sm:$0xff] %v840
    %s864 = scalar_lea.vmem [#allocation1], 4
    %865 = vst [vmem:[%s864] ss:$9 sm:$0xff] %v841
    %s866 = scalar_lea.vmem [#allocation1], 5
    %867 = vst [vmem:[%s866] ss:$9 sm:$0xff] %v842
    %s868 = scalar_lea.vmem [#allocation1], 6
    %869 = vst [vmem:[%s868] ss:$9 sm:$0xff] %v843
    %s870 = scalar_lea.vmem [#allocation1], 7
    %871 = vst [vmem:[%s870] ss:$9 sm:$0xff] %v844
    %v872 = vld [vmem:[#allocation1] sm:$0xff]
    %873 = vst [vmem:[#allocation1] ss:$9 sm:$0xff] %v845
    %874 = vst [vmem:[%s858] ss:$9 sm:$0xff] %v846
    %v875 = vld [vmem:[#allocation1] sm:$0xff]
    %v878 = vpack.c.bf16 %v875, %v872
    %v879 = vperm.slane %v26, 1
    %v880 = vperm.slane %v27, 1
    %v889 = vunpack.c.l.b16 %v574
    %v890 = vunpack.c.h.b16 %v574
    %v891 = vunpack.c.l.b16 %v576
    %v892 = vunpack.c.h.b16 %v576
    %v893 = vunpack.c.l.b16 %v578
    %v894 = vunpack.c.h.b16 %v578
    %v895 = vunpack.c.l.b16 %v580
    %v896 = vunpack.c.h.b16 %v580
    %v897 = vunpack.c.l.b16 %v582
    %v898 = vunpack.c.h.b16 %v582
    %v899 = vunpack.c.l.b16 %v584
    %v900 = vunpack.c.h.b16 %v584
    %v901 = vunpack.c.l.b16 %v586
    %v902 = vunpack.c.h.b16 %v586
    %v903 = vunpack.c.l.b16 %v588
    %v904 = vunpack.c.h.b16 %v588
    %v905 = vpack.c.b16 %v891, %v889
    %v906 = vpack.c.b16 %v892, %v890
    %v907 = vpack.c.b16 %v895, %v893
    %v908 = vpack.c.b16 %v896, %v894
    %v909 = vpack.c.b16 %v899, %v897
    %v910 = vpack.c.b16 %v900, %v898
    %v911 = vpack.c.b16 %v903, %v901
    %v912 = vpack.c.b16 %v904, %v902
    %v922 = vsel %vm643, %v878, 0
    %924 = vmatpush.bf16.msra.mxu0 0
    %925 = vmatpush.bf16.msra.mxu0 0
    %926 = vmatpush.bf16.msra.mxu0 0
    %927 = vmatpush.bf16.msra.mxu0 0
    %928 = vmatpush.bf16.msra.mxu0 %v911
    %929 = vmatpush.bf16.msra.mxu0 %v909
    %930 = vmatpush.bf16.msra.mxu0 %v907
    %931 = vmatpush.bf16.msra.mxu0 %v905
    %932 = vmatmul.bf16.gmra.mxu0 %v922
    %v933 = vpop.f32.mrf.mxu0
    %v934 = vadd.f32 %v879, %v933
    %v935 = vpop.f32.mrf.mxu0
    %v936 = vadd.f32 %v879, %v935
    %937 = vdwg.mxu0
    %938 = vmatpush.bf16.msra.mxu0 0
    %939 = vmatpush.bf16.msra.mxu0 0
    %940 = vmatpush.bf16.msra.mxu0 0
    %941 = vmatpush.bf16.msra.mxu0 0
    %942 = vmatpush.bf16.msra.mxu0 %v912
    %943 = vmatpush.bf16.msra.mxu0 %v910
    %944 = vmatpush.bf16.msra.mxu0 %v908
    %945 = vmatpush.bf16.msra.mxu0 %v906
    %946 = vmatmul.bf16.gmra.mxu0 %v922
    %v947 = vpop.f32.mrf.mxu0
    %v948 = vadd.f32 %v880, %v947
    %v949 = vpop.f32.mrf.mxu0
    %v950 = vadd.f32 %v880, %v949
    %951 = vdwg.mxu0
    %v956 = vrot.slane %v948, 7
    %v957 = vrot.slane %v950, 7
    %v958 = vsel %vm549, %v934, %v956
    %vm959 = vcmask 1041409
    %v960 = vsel %vm959, %v934, %v956
    %v961 = vrot.slane %v960, 1
    %vm962 = vcmask 1042434
    %v963 = vsel %vm962, %v934, %v956
    %v964 = vrot.slane %v963, 2
    %vm965 = vcmask 1043459
    %v966 = vsel %vm965, %v934, %v956
    %v967 = vrot.slane %v966, 3
    %vm968 = vcmask 1044484
    %v969 = vsel %vm968, %v934, %v956
    %v970 = vrot.slane %v969, 4
    %vm971 = vcmask 1045509
    %v972 = vsel %vm971, %v934, %v956
    %v973 = vrot.slane %v972, 5
    %vm974 = vcmask 1046534
    %v975 = vsel %vm974, %v934, %v956
    %v976 = vrot.slane %v975, 6
    %vm977 = vcmask 1046528
    %v978 = vsel %vm977, %v956, %v934
    %v979 = vrot.slane %v978, 7
    %v980 = vsel %vm549, %v936, %v957
    %v981 = vsel %vm959, %v936, %v957
    %v982 = vrot.slane %v981, 1
    %983 = vst [vmem:[#allocation1] ss:$9 sm:$0xff] %v958
    %s984 = scalar_lea.vmem [#allocation1], 1
    %985 = vst [vmem:[%s984] ss:$9 sm:$0xff] %v961
    %s986 = scalar_lea.vmem [#allocation1], 2
    %987 = vst [vmem:[%s986] ss:$9 sm:$0xff] %v964
    %s988 = scalar_lea.vmem [#allocation1], 3
    %989 = vst [vmem:[%s988] ss:$9 sm:$0xff] %v967
    %s990 = scalar_lea.vmem [#allocation1], 4
    %991 = vst [vmem:[%s990] ss:$9 sm:$0xff] %v970
    %v992 = vld [vmem:[#allocation1] sm:$0xff]
    %993 = vst [vmem:[#allocation1] ss:$9 sm:$0xff] %v973
    %994 = vst [vmem:[%s984] ss:$9 sm:$0xff] %v976
    %995 = vst [vmem:[%s986] ss:$9 sm:$0xff] %v979
    %996 = vst [vmem:[%s988] ss:$9 sm:$0xff] %v980
    %997 = vst [vmem:[%s990] ss:$9 sm:$0xff] %v982
    %v998 = vld [vmem:[#allocation1] sm:$0xff]
    %v1001 = vpack.c.bf16 %v992, %v992
    %v1002 = vpack.c.bf16 %v998, %v998
    %1003 = vst [vmem:[#allocation1] ss:$9 sm:$0xff] %v958
    %s1004 = scalar_lea.vmem [#allocation1], 1
    %1005 = vst [vmem:[%s1004] ss:$9 sm:$0xff] %v961
    %s1006 = scalar_lea.vmem [#allocation1], 2
    %1007 = vst [vmem:[%s1006] ss:$9 sm:$0xff] %v964
    %s1008 = scalar_lea.vmem [#allocation1], 3
    %1009 = vst [vmem:[%s1008] ss:$9 sm:$0xff] %v967
    %s1010 = scalar_lea.vmem [#allocation1], 4
    %1011 = vst [vmem:[%s1010] ss:$9 sm:$0xff] %v970
    %v1012 = vld [vmem:[#allocation1] sm:$0xff]
    %1013 = vst [vmem:[#allocation1] ss:$9 sm:$0xff] %v973
    %1014 = vst [vmem:[%s1004] ss:$9 sm:$0xff] %v976
    %1015 = vst [vmem:[%s1006] ss:$9 sm:$0xff] %v979
    %1016 = vst [vmem:[%s1008] ss:$9 sm:$0xff] %v980
    %1017 = vst [vmem:[%s1010] ss:$9 sm:$0xff] %v982
    %v1018 = vld [vmem:[#allocation1] sm:$0xff]
    %v1021 = vpack.c.bf16 %v1012, %v1012
    %v1022 = vpack.c.bf16 %v1018, %v1018
    %1023 = vst [vmem:[#allocation1] ss:$9 sm:$0xff] %v958
    %s1024 = scalar_lea.vmem [#allocation1], 1
    %1025 = vst [vmem:[%s1024] ss:$9 sm:$0xff] %v961
    %s1026 = scalar_lea.vmem [#allocation1], 2
    %1027 = vst [vmem:[%s1026] ss:$9 sm:$0xff] %v964
    %s1028 = scalar_lea.vmem [#allocation1], 3
    %1029 = vst [vmem:[%s1028] ss:$9 sm:$0xff] %v967
    %s1030 = scalar_lea.vmem [#allocation1], 4
    %1031 = vst [vmem:[%s1030] ss:$9 sm:$0xff] %v970
    %v1032 = vld [vmem:[#allocation1 + $0x9] sm:$0xff]
    %1033 = vst [vmem:[#allocation1] ss:$9 sm:$0xff] %v973
    %1034 = vst [vmem:[%s1024] ss:$9 sm:$0xff] %v976
    %1035 = vst [vmem:[%s1026] ss:$9 sm:$0xff] %v979
    %1036 = vst [vmem:[%s1028] ss:$9 sm:$0xff] %v980
    %1037 = vst [vmem:[%s1030] ss:$9 sm:$0xff] %v982
    %v1038 = vld [vmem:[#allocation1 + $0x9] sm:$0xff]
    %v1041 = vpack.c.bf16 %v1032, %v1032
    %v1042 = vpack.c.bf16 %v1038, %v1038
    %v1044 = vunpack.c.l.b16 %v1021
    %v1045 = vpack.c.b16 %v1044, %v1044
    %1046 = vrot.lane.b32.xlu0 %v1045, 64
    %v1047 = vpop.permute.xlu0 %1046
    %vm1048 = vcmask 130048
    %v1050 = vsel %vm1048, %v1001, 0
    %v1053 = vsel %vm1048, %v1047, 0
    %1055 = vmatpush.bf16.xpose.msra.mxu0 0
    %1056 = vmatpush.bf16.xpose.msra.mxu0 0
    %1057 = vmatpush.bf16.xpose.msra.mxu0 0
    %1058 = vmatpush.bf16.xpose.msra.mxu0 0
    %1059 = vmatpush.bf16.xpose.msra.mxu0 0
    %1060 = vmatpush.bf16.xpose.msra.mxu0 0
    %1061 = vmatpush.bf16.xpose.msra.mxu0 0
    %1062 = vmatpush.bf16.xpose.msra.mxu0 %v1053
    %1063 = vmatmul.bf16.gmra.mxu0 %v1050
    %v1064 = vpop.f32.mrf.mxu0
    %v1065 = vadd.f32 0.0, %v1064
    %v1066 = vpop.f32.mrf.mxu0
    %1067 = vdwg.mxu0
    %v1069 = vunpack.c.l.b16 %v1022
    %v1070 = vpack.c.b16 %v1069, %v1069
    %1071 = vrot.lane.b32.xlu0 %v1070, 64
    %v1072 = vpop.permute.xlu0 %1071
    %v1074 = vsel %vm1048, %v1002, 0
    %v1077 = vsel %vm1048, %v1072, 0
    %1079 = vmatpush.bf16.xpose.msra.mxu0 0
    %1080 = vmatpush.bf16.xpose.msra.mxu0 0
    %1081 = vmatpush.bf16.xpose.msra.mxu0 0
    %1082 = vmatpush.bf16.xpose.msra.mxu0 0
    %1083 = vmatpush.bf16.xpose.msra.mxu0 0
    %1084 = vmatpush.bf16.xpose.msra.mxu0 0
    %1085 = vmatpush.bf16.xpose.msra.mxu0 0
    %1086 = vmatpush.bf16.xpose.msra.mxu0 %v1077
    %1087 = vmatmul.bf16.gmra.mxu0 %v1074
    %v1088 = vpop.f32.mrf.mxu0
    %v1089 = vadd.f32 0.0, %v1088
    %v1090 = vpop.f32.mrf.mxu0
    %1091 = vdwg.mxu0
    %v1092 = vmul.f32 %v1065, 0.25
    %v1093 = vmul.f32 %v1089, 0.25
    %vm1094 = vcmask 36864
    %v1095 = vsel %vm1094, %v1092, -inf
    %1096 = vmax.xlane.f32.xlu0 %v1095
    %v1097 = vpop.xlane.xlu0 %1096
    %v1098 = vsel %vm1094, %v1093, -inf
    %1099 = vmax.xlane.f32.xlu0 %v1098
    %v1100 = vpop.xlane.xlu0 %1099
    %v1101 = vsub.f32 %v1092, %v1097
    %v1102 = vsub.f32 %v1093, %v1100
    %v1103 = vmul.f32 %v1101, 1.442695
    %v1104 = vpow.pop %v1103
    %v1105 = vmul.f32 %v1102, 1.442695
    %v1106 = vpow.pop %v1105
    %v1107 = vsel %vm1094, %v1104, 0.0
    %1108 = vadd.xlane.f32.xlu0 %v1107
    %v1109 = vpop.xlane.xlu0 %1108
    %v1110 = vsel %vm1094, %v1106, 0.0
    %1111 = vadd.xlane.f32.xlu0 %v1110
    %v1112 = vpop.xlane.xlu0 %1111
    %v1113 = vrcp.pop %v1109
    %v1114 = vrcp.pop %v1112
    %v1115 = vmul.f32 %v1104, %v1113
    %v1116 = vmul.f32 %v1106, %v1114
    %v1117 = vpack.c.bf16 %v1115, %v1115
    %v1118 = vpack.c.bf16 %v1116, %v1116
    %vm1119 = vcmask 39936
    %v1121 = vsel %vm1119, %v1117, 0
    %vm1123 = vcmask 1041408
    %vm1124 = vcmask 1042432
    %v1125 = vsel %vm1123, 4294967295, 65535
    %v1126 = vsel %vm1124, %v1125, 0
    %v1128 = vand.u32 %v1041, %v1126
    %1130 = vmatpush.bf16.msra.mxu0 0
    %1131 = vmatpush.bf16.msra.mxu0 0
    %1132 = vmatpush.bf16.msra.mxu0 0
    %1133 = vmatpush.bf16.msra.mxu0 0
    %1134 = vmatpush.bf16.msra.mxu0 0
    %1135 = vmatpush.bf16.msra.mxu0 0
    %1136 = vmatpush.bf16.msra.mxu0 0
    %1137 = vmatpush.bf16.msra.mxu0 %v1128
    %1138 = vmatmul.bf16.gmra.mxu0 %v1121
    %v1139 = vpop.f32.mrf.mxu0
    %v1140 = vadd.f32 0.0, %v1139
    %v1141 = vpop.f32.mrf.mxu0
    %1142 = vdwg.mxu0
    %v1144 = vsel %vm1119, %v1118, 0
    %v1147 = vand.u32 %v1042, %v1126
    %1149 = vmatpush.bf16.msra.mxu0 0
    %1150 = vmatpush.bf16.msra.mxu0 0
    %1151 = vmatpush.bf16.msra.mxu0 0
    %1152 = vmatpush.bf16.msra.mxu0 0
    %1153 = vmatpush.bf16.msra.mxu0 0
    %1154 = vmatpush.bf16.msra.mxu0 0
    %1155 = vmatpush.bf16.msra.mxu0 0
    %1156 = vmatpush.bf16.msra.mxu0 %v1147
    %1157 = vmatmul.bf16.gmra.mxu0 %v1144
    %v1158 = vpop.f32.mrf.mxu0
    %v1159 = vadd.f32 0.0, %v1158
    %v1160 = vpop.f32.mrf.mxu0
    %1161 = vdwg.mxu0
    %v1162 = vpack.c.bf16 %v1140, %v1140
    %v1163 = vpack.c.bf16 %v1159, %v1159
    %1164 = vst [vmem:[#allocation1] ss:$9 sm:$0xff] %v958
    %s1165 = scalar_lea.vmem [#allocation1], 1
    %1166 = vst [vmem:[%s1165] ss:$9 sm:$0xff] %v961
    %s1167 = scalar_lea.vmem [#allocation1], 2
    %1168 = vst [vmem:[%s1167] ss:$9 sm:$0xff] %v964
    %s1169 = scalar_lea.vmem [#allocation1], 3
    %1170 = vst [vmem:[%s1169] ss:$9 sm:$0xff] %v967
    %s1171 = scalar_lea.vmem [#allocation1], 4
    %1172 = vst [vmem:[%s1171] ss:$9 sm:$0xff] %v970
    %v1173 = vld [vmem:[#allocation1] sm:$0xff]
    %1174 = vst [vmem:[#allocation1] ss:$9 sm:$0xff] %v973
    %1175 = vst [vmem:[%s1165] ss:$9 sm:$0xff] %v976
    %1176 = vst [vmem:[%s1167] ss:$9 sm:$0xff] %v979
    %1177 = vst [vmem:[%s1169] ss:$9 sm:$0xff] %v980
    %1178 = vst [vmem:[%s1171] ss:$9 sm:$0xff] %v982
    %v1179 = vld [vmem:[#allocation1] sm:$0xff]
    %v1182 = vpack.c.bf16 %v1173, %v1173
    %v1183 = vpack.c.bf16 %v1179, %v1179
    %1184 = vst [vmem:[#allocation1] ss:$9 sm:$0xff] %v958
    %s1185 = scalar_lea.vmem [#allocation1], 1
    %1186 = vst [vmem:[%s1185] ss:$9 sm:$0xff] %v961
    %s1187 = scalar_lea.vmem [#allocation1], 2
    %1188 = vst [vmem:[%s1187] ss:$9 sm:$0xff] %v964
    %s1189 = scalar_lea.vmem [#allocation1], 3
    %1190 = vst [vmem:[%s1189] ss:$9 sm:$0xff] %v967
    %s1191 = scalar_lea.vmem [#allocation1], 4
    %1192 = vst [vmem:[%s1191] ss:$9 sm:$0xff] %v970
    %v1193 = vld [vmem:[#allocation1] sm:$0xff]
    %1194 = vst [vmem:[#allocation1] ss:$9 sm:$0xff] %v973
    %1195 = vst [vmem:[%s1185] ss:$9 sm:$0xff] %v976
    %1196 = vst [vmem:[%s1187] ss:$9 sm:$0xff] %v979
    %1197 = vst [vmem:[%s1189] ss:$9 sm:$0xff] %v980
    %1198 = vst [vmem:[%s1191] ss:$9 sm:$0xff] %v982
    %v1199 = vld [vmem:[#allocation1] sm:$0xff]
    %v1202 = vpack.c.bf16 %v1193, %v1193
    %v1203 = vpack.c.bf16 %v1199, %v1199
    %1204 = vst [vmem:[#allocation1] ss:$9 sm:$0xff] %v958
    %s1205 = scalar_lea.vmem [#allocation1], 1
    %1206 = vst [vmem:[%s1205] ss:$9 sm:$0xff] %v961
    %s1207 = scalar_lea.vmem [#allocation1], 2
    %1208 = vst [vmem:[%s1207] ss:$9 sm:$0xff] %v964
    %s1209 = scalar_lea.vmem [#allocation1], 3
    %1210 = vst [vmem:[%s1209] ss:$9 sm:$0xff] %v967
    %s1211 = scalar_lea.vmem [#allocation1], 4
    %1212 = vst [vmem:[%s1211] ss:$9 sm:$0xff] %v970
    %v1213 = vld [vmem:[#allocation1 + $0x9] sm:$0xff]
    %1214 = vst [vmem:[#allocation1] ss:$9 sm:$0xff] %v973
    %1215 = vst [vmem:[%s1205] ss:$9 sm:$0xff] %v976
    %1216 = vst [vmem:[%s1207] ss:$9 sm:$0xff] %v979
    %1217 = vst [vmem:[%s1209] ss:$9 sm:$0xff] %v980
    %1218 = vst [vmem:[%s1211] ss:$9 sm:$0xff] %v982
    %v1219 = vld [vmem:[#allocation1 + $0x9] sm:$0xff]
    %1220 = vrot.lane.b32.xlu0 %v1213, 112
    %v1221 = vpop.permute.xlu0 %1220
    %1222 = vrot.lane.b32.xlu0 %v1219, 112
    %v1223 = vpop.permute.xlu0 %1222
    %v1226 = vpack.c.bf16 %v1221, %v1221
    %v1227 = vpack.c.bf16 %v1223, %v1223
    %v1229 = vunpack.c.l.b16 %v1182
    %v1230 = vpack.c.b16 %v1229, %v1229
    %1231 = vrot.lane.b32.xlu0 %v1230, 112
    %v1232 = vpop.permute.xlu0 %1231
    %v1234 = vunpack.c.l.b16 %v1202
    %v1235 = vpack.c.b16 %v1234, %v1234
    %1236 = vrot.lane.b32.xlu0 %v1235, 48
    %v1237 = vpop.permute.xlu0 %1236
    %v1239 = vsel %vm1048, %v1232, 0
    %v1242 = vsel %vm1048, %v1237, 0
    %1244 = vmatpush.bf16.xpose.msra.mxu0 0
    %1245 = vmatpush.bf16.xpose.msra.mxu0 0
    %1246 = vmatpush.bf16.xpose.msra.mxu0 0
    %1247 = vmatpush.bf16.xpose.msra.mxu0 0
    %1248 = vmatpush.bf16.xpose.msra.mxu0 0
    %1249 = vmatpush.bf16.xpose.msra.mxu0 0
    %1250 = vmatpush.bf16.xpose.msra.mxu0 0
    %1251 = vmatpush.bf16.xpose.msra.mxu0 %v1242
    %1252 = vmatmul.bf16.gmra.mxu0 %v1239
    %v1253 = vpop.f32.mrf.mxu0
    %v1254 = vadd.f32 0.0, %v1253
    %v1255 = vpop.f32.mrf.mxu0
    %1256 = vdwg.mxu0
    %v1258 = vunpack.c.l.b16 %v1183
    %v1259 = vpack.c.b16 %v1258, %v1258
    %1260 = vrot.lane.b32.xlu0 %v1259, 112
    %v1261 = vpop.permute.xlu0 %1260
    %v1263 = vunpack.c.l.b16 %v1203
    %v1264 = vpack.c.b16 %v1263, %v1263
    %1265 = vrot.lane.b32.xlu0 %v1264, 48
    %v1266 = vpop.permute.xlu0 %1265
    %v1268 = vsel %vm1048, %v1261, 0
    %v1271 = vsel %vm1048, %v1266, 0
    %1273 = vmatpush.bf16.xpose.msra.mxu0 0
    %1274 = vmatpush.bf16.xpose.msra.mxu0 0
    %1275 = vmatpush.bf16.xpose.msra.mxu0 0
    %1276 = vmatpush.bf16.xpose.msra.mxu0 0
    %1277 = vmatpush.bf16.xpose.msra.mxu0 0
    %1278 = vmatpush.bf16.xpose.msra.mxu0 0
    %1279 = vmatpush.bf16.xpose.msra.mxu0 0
    %1280 = vmatpush.bf16.xpose.msra.mxu0 %v1271
    %1281 = vmatmul.bf16.gmra.mxu0 %v1268
    %v1282 = vpop.f32.mrf.mxu0
    %v1283 = vadd.f32 0.0, %v1282
    %v1284 = vpop.f32.mrf.mxu0
    %1285 = vdwg.mxu0
    %v1286 = vmul.f32 %v1254, 0.25
    %v1287 = vmul.f32 %v1283, 0.25
    %v1288 = vsel %vm1094, %v1286, -inf
    %1289 = vmax.xlane.f32.xlu0 %v1288
    %v1290 = vpop.xlane.xlu0 %1289
    %v1291 = vsel %vm1094, %v1287, -inf
    %1292 = vmax.xlane.f32.xlu0 %v1291
    %v1293 = vpop.xlane.xlu0 %1292
    %v1294 = vsub.f32 %v1286, %v1290
    %v1295 = vsub.f32 %v1287, %v1293
    %v1296 = vmul.f32 %v1294, 1.442695
    %v1297 = vpow.pop %v1296
    %v1298 = vmul.f32 %v1295, 1.442695
    %v1299 = vpow.pop %v1298
    %v1300 = vsel %vm1094, %v1297, 0.0
    %1301 = vadd.xlane.f32.xlu0 %v1300
    %v1302 = vpop.xlane.xlu0 %1301
    %v1303 = vsel %vm1094, %v1299, 0.0
    %1304 = vadd.xlane.f32.xlu0 %v1303
    %v1305 = vpop.xlane.xlu0 %1304
    %v1306 = vrcp.pop %v1302
    %v1307 = vrcp.pop %v1305
    %v1308 = vmul.f32 %v1297, %v1306
    %v1309 = vmul.f32 %v1299, %v1307
    %v1310 = vpack.c.bf16 %v1308, %v1308
    %v1311 = vpack.c.bf16 %v1309, %v1309
    %v1313 = vsel %vm1119, %v1310, 0
    %v1316 = vand.u32 %v1226, %v1126
    %1318 = vmatpush.bf16.msra.mxu0 0
    %1319 = vmatpush.bf16.msra.mxu0 0
    %1320 = vmatpush.bf16.msra.mxu0 0
    %1321 = vmatpush.bf16.msra.mxu0 0
    %1322 = vmatpush.bf16.msra.mxu0 0
    %1323 = vmatpush.bf16.msra.mxu0 0
    %1324 = vmatpush.bf16.msra.mxu0 0
    %1325 = vmatpush.bf16.msra.mxu0 %v1316
    %1326 = vmatmul.bf16.gmra.mxu0 %v1313
    %v1327 = vpop.f32.mrf.mxu0
    %v1328 = vadd.f32 0.0, %v1327
    %v1329 = vpop.f32.mrf.mxu0
    %1330 = vdwg.mxu0
    %v1332 = vsel %vm1119, %v1311, 0
    %v1335 = vand.u32 %v1227, %v1126
    %1337 = vmatpush.bf16.msra.mxu0 0
    %1338 = vmatpush.bf16.msra.mxu0 0
    %1339 = vmatpush.bf16.msra.mxu0 0
    %1340 = vmatpush.bf16.msra.mxu0 0
    %1341 = vmatpush.bf16.msra.mxu0 0
    %1342 = vmatpush.bf16.msra.mxu0 0
    %1343 = vmatpush.bf16.msra.mxu0 0
    %1344 = vmatpush.bf16.msra.mxu0 %v1335
    %1345 = vmatmul.bf16.gmra.mxu0 %v1332
    %v1346 = vpop.f32.mrf.mxu0
    %v1347 = vadd.f32 0.0, %v1346
    %v1348 = vpop.f32.mrf.mxu0
    %1349 = vdwg.mxu0
    %v1350 = vpack.c.bf16 %v1328, %v1328
    %v1351 = vpack.c.bf16 %v1347, %v1347
    %v1354 = vrot.slane %v1350, 3
    %v1355 = vrot.slane %v1351, 3
    %v1358 = vsel %vm549, %v1350, %v1354
    %v1360 = vsel %vm959, %v1350, %v1354
    %v1362 = vrot.slane %v1360, 1
    %v1363 = vsel %vm962, %v1350, %v1354
    %v1365 = vrot.slane %v1363, 2
    %v1368 = vsel %vm549, %v1351, %v1355
    %v1370 = vsel %vm959, %v1351, %v1355
    %v1372 = vrot.slane %v1370, 1
    %v1373 = vsel %vm962, %v1351, %v1355
    %v1375 = vrot.slane %v1373, 2
    %v1376 = vunpack.i.l.s16 %v1358
    %v1377 = vunpack.i.h.s16 %v1358
    %v1378 = vunpack.i.l.s16 %v1362
    %v1379 = vunpack.i.h.s16 %v1362
    %v1380 = vunpack.i.l.s16 %v1365
    %v1381 = vunpack.i.l.s16 %v1368
    %v1382 = vunpack.i.h.s16 %v1368
    %v1383 = vunpack.i.l.s16 %v1372
    %v1384 = vunpack.i.h.s16 %v1372
    %v1385 = vunpack.i.l.s16 %v1375
    %v1386 = vpack.i.b16 %v1377, %v1376
    %v1387 = vpack.i.b16 %v1379, %v1378
    %v1388 = vpack.i.b16 %v1381, %v1380
    %v1389 = vpack.i.b16 %v1383, %v1382
    %v1390 = vpack.i.b16 %v1385, %v1384
    %1392 = vst [vmem:[#allocation1] ss:$9 sm:$0xff] %v1386
    %s1394 = scalar_lea.vmem [#allocation1], 1
    %1395 = vst [vmem:[%s1394] ss:$9 sm:$0xff] %v1387
    %s1397 = scalar_lea.vmem [#allocation1], 2
    %1398 = vst [vmem:[%s1397] ss:$9 sm:$0xff] %v1388
    %s1400 = scalar_lea.vmem [#allocation1], 3
    %1401 = vst [vmem:[%s1400] ss:$9 sm:$0xff] %v1389
    %s1403 = scalar_lea.vmem [#allocation1], 4
    %1404 = vst [vmem:[%s1403] ss:$9 sm:$0xff] %v1390
    %v1405 = vld [vmem:[#allocation1] sm:$0xff]
    %1406 = vrot.lane.b32.xlu0 %v908, 64
    %v1407 = vpop.permute.xlu0 %1406
    %v1409 = vsel %vm1048, %v1405, 0
    %1411 = vmatpush.bf16.msra.mxu0 0
    %1412 = vmatpush.bf16.msra.mxu0 0
    %1413 = vmatpush.bf16.msra.mxu0 0
    %1414 = vmatpush.bf16.msra.mxu0 0
    %1415 = vmatpush.bf16.msra.mxu0 0
    %1416 = vmatpush.bf16.msra.mxu0 0
    %1417 = vmatpush.bf16.msra.mxu0 0
    %1418 = vmatpush.bf16.msra.mxu0 %v1407
    %1419 = vmatmul.bf16.gmra.mxu0 %v1409
    %v1420 = vpop.f32.mrf.mxu0
    %v1421 = vadd.f32 0.0, %v1420
    %v1422 = vpop.f32.mrf.mxu0
    %v1423 = vadd.f32 0.0, %v1422
    %1424 = vdwg.mxu0
    %v1427 = vrot.slane %v1162, 3
    %v1428 = vrot.slane %v1163, 3
    %v1431 = vsel %vm549, %v1162, %v1427
    %v1433 = vsel %vm959, %v1162, %v1427
    %v1435 = vrot.slane %v1433, 1
    %v1436 = vsel %vm962, %v1162, %v1427
    %v1438 = vrot.slane %v1436, 2
    %v1441 = vsel %vm549, %v1163, %v1428
    %v1443 = vsel %vm959, %v1163, %v1428
    %v1445 = vrot.slane %v1443, 1
    %v1446 = vsel %vm962, %v1163, %v1428
    %v1448 = vrot.slane %v1446, 2
    %v1449 = vunpack.i.l.s16 %v1431
    %v1450 = vunpack.i.h.s16 %v1431
    %v1451 = vunpack.i.l.s16 %v1435
    %v1452 = vunpack.i.h.s16 %v1435
    %v1453 = vunpack.i.l.s16 %v1438
    %v1454 = vunpack.i.l.s16 %v1441
    %v1455 = vunpack.i.h.s16 %v1441
    %v1456 = vunpack.i.l.s16 %v1445
    %v1457 = vunpack.i.h.s16 %v1445
    %v1458 = vunpack.i.l.s16 %v1448
    %v1459 = vpack.i.b16 %v1450, %v1449
    %v1460 = vpack.i.b16 %v1452, %v1451
    %v1461 = vpack.i.b16 %v1454, %v1453
    %v1462 = vpack.i.b16 %v1456, %v1455
    %v1463 = vpack.i.b16 %v1458, %v1457
    %1465 = vst [vmem:[#allocation1] ss:$9 sm:$0xff] %v1459
    %s1467 = scalar_lea.vmem [#allocation1], 1
    %1468 = vst [vmem:[%s1467] ss:$9 sm:$0xff] %v1460
    %s1470 = scalar_lea.vmem [#allocation1], 2
    %1471 = vst [vmem:[%s1470] ss:$9 sm:$0xff] %v1461
    %s1473 = scalar_lea.vmem [#allocation1], 3
    %1474 = vst [vmem:[%s1473] ss:$9 sm:$0xff] %v1462
    %s1476 = scalar_lea.vmem [#allocation1], 4
    %1477 = vst [vmem:[%s1476] ss:$9 sm:$0xff] %v1463
    %v1478 = vld [vmem:[#allocation1] sm:$0xff]
    %1479 = vrot.lane.b32.xlu0 %v906, 64
    %v1480 = vpop.permute.xlu0 %1479
    %v1482 = vsel %vm1048, %v1478, 0
    %1484 = vmatpush.bf16.msra.mxu0 0
    %1485 = vmatpush.bf16.msra.mxu0 0
    %1486 = vmatpush.bf16.msra.mxu0 0
    %1487 = vmatpush.bf16.msra.mxu0 0
    %1488 = vmatpush.bf16.msra.mxu0 0
    %1489 = vmatpush.bf16.msra.mxu0 0
    %1490 = vmatpush.bf16.msra.mxu0 0
    %1491 = vmatpush.bf16.msra.mxu0 %v1480
    %1492 = vmatmul.bf16.gmra.mxu0 %v1482
    %v1493 = vpop.f32.mrf.mxu0
    %v1494 = vadd.f32 %v1421, %v1493
    %v1495 = vpop.f32.mrf.mxu0
    %v1496 = vadd.f32 %v1423, %v1495
    %1497 = vdwg.mxu0
    %v1500 = vrot.slane %v1494, 1
    %v1501 = vrot.slane %v1494, 2
    %v1502 = vrot.slane %v1494, 3
    %v1503 = vrot.slane %v1494, 4
    %v1504 = vrot.slane %v1494, 5
    %v1505 = vrot.slane %v1494, 6
    %v1506 = vrot.slane %v1494, 7
    %v1507 = vrot.slane %v1496, 1
    %1516 = vst [vmem:[#allocation1] ss:$9 sm:$0xff] %v958
    %s1517 = scalar_lea.vmem [#allocation1], 1
    %1518 = vst [vmem:[%s1517] ss:$9 sm:$0xff] %v961
    %s1519 = scalar_lea.vmem [#allocation1], 2
    %1520 = vst [vmem:[%s1519] ss:$9 sm:$0xff] %v964
    %s1521 = scalar_lea.vmem [#allocation1], 3
    %1522 = vst [vmem:[%s1521] ss:$9 sm:$0xff] %v967
    %s1523 = scalar_lea.vmem [#allocation1], 4
    %1524 = vst [vmem:[%s1523] ss:$9 sm:$0xff] %v970
    %v1525 = vld [vmem:[#allocation1] sm:$0xff]
    %1526 = vst [vmem:[#allocation1] ss:$9 sm:$0xff] %v973
    %1527 = vst [vmem:[%s1517] ss:$9 sm:$0xff] %v976
    %1528 = vst [vmem:[%s1519] ss:$9 sm:$0xff] %v979
    %1529 = vst [vmem:[%s1521] ss:$9 sm:$0xff] %v980
    %1530 = vst [vmem:[%s1523] ss:$9 sm:$0xff] %v982
    %v1531 = vld [vmem:[#allocation1] sm:$0xff]
    %v1534 = vpack.c.bf16 %v1525, %v1525
    %v1535 = vpack.c.bf16 %v1531, %v1531
    %1536 = vst [vmem:[#allocation1] ss:$9 sm:$0xff] %v958
    %s1537 = scalar_lea.vmem [#allocation1], 1
    %1538 = vst [vmem:[%s1537] ss:$9 sm:$0xff] %v961
    %s1539 = scalar_lea.vmem [#allocation1], 2
    %1540 = vst [vmem:[%s1539] ss:$9 sm:$0xff] %v964
    %s1541 = scalar_lea.vmem [#allocation1], 3
    %1542 = vst [vmem:[%s1541] ss:$9 sm:$0xff] %v967
    %s1543 = scalar_lea.vmem [#allocation1], 4
    %1544 = vst [vmem:[%s1543] ss:$9 sm:$0xff] %v970
    %v1545 = vld [vmem:[#allocation1] sm:$0xff]
    %1546 = vst [vmem:[#allocation1] ss:$9 sm:$0xff] %v973
    %1547 = vst [vmem:[%s1537] ss:$9 sm:$0xff] %v976
    %1548 = vst [vmem:[%s1539] ss:$9 sm:$0xff] %v979
    %1549 = vst [vmem:[%s1541] ss:$9 sm:$0xff] %v980
    %1550 = vst [vmem:[%s1543] ss:$9 sm:$0xff] %v982
    %v1551 = vld [vmem:[#allocation1] sm:$0xff]
    %v1554 = vpack.c.bf16 %v1545, %v1545
    %v1555 = vpack.c.bf16 %v1551, %v1551
    %1556 = vst [vmem:[#allocation1] ss:$9 sm:$0xff] %v958
    %s1557 = scalar_lea.vmem [#allocation1], 1
    %1558 = vst [vmem:[%s1557] ss:$9 sm:$0xff] %v961
    %s1559 = scalar_lea.vmem [#allocation1], 2
    %1560 = vst [vmem:[%s1559] ss:$9 sm:$0xff] %v964
    %s1561 = scalar_lea.vmem [#allocation1], 3
    %1562 = vst [vmem:[%s1561] ss:$9 sm:$0xff] %v967
    %s1563 = scalar_lea.vmem [#allocation1], 4
    %1564 = vst [vmem:[%s1563] ss:$9 sm:$0xff] %v970
    %v1565 = vld [vmem:[#allocation1 + $0x9] sm:$0xff]
    %1566 = vst [vmem:[#allocation1] ss:$9 sm:$0xff] %v973
    %1567 = vst [vmem:[%s1557] ss:$9 sm:$0xff] %v976
    %1568 = vst [vmem:[%s1559] ss:$9 sm:$0xff] %v979
    %1569 = vst [vmem:[%s1561] ss:$9 sm:$0xff] %v980
    %1570 = vst [vmem:[%s1563] ss:$9 sm:$0xff] %v982
    %v1571 = vld [vmem:[#allocation1 + $0x9] sm:$0xff]
    %1572 = vrot.lane.b32.xlu0 %v1565, 96
    %v1573 = vpop.permute.xlu0 %1572
    %1574 = vrot.lane.b32.xlu0 %v1571, 96
    %v1575 = vpop.permute.xlu0 %1574
    %v1578 = vpack.c.bf16 %v1573, %v1573
    %v1579 = vpack.c.bf16 %v1575, %v1575
    %v1581 = vunpack.c.l.b16 %v1534
    %v1582 = vpack.c.b16 %v1581, %v1581
    %1583 = vrot.lane.b32.xlu0 %v1582, 96
    %v1584 = vpop.permute.xlu0 %1583
    %v1586 = vunpack.c.l.b16 %v1554
    %v1587 = vpack.c.b16 %v1586, %v1586
    %1588 = vrot.lane.b32.xlu0 %v1587, 32
    %v1589 = vpop.permute.xlu0 %1588
    %v1591 = vsel %vm1048, %v1584, 0
    %v1594 = vsel %vm1048, %v1589, 0
    %1596 = vmatpush.bf16.xpose.msra.mxu0 0
    %1597 = vmatpush.bf16.xpose.msra.mxu0 0
    %1598 = vmatpush.bf16.xpose.msra.mxu0 0
    %1599 = vmatpush.bf16.xpose.msra.mxu0 0
    %1600 = vmatpush.bf16.xpose.msra.mxu0 0
    %1601 = vmatpush.bf16.xpose.msra.mxu0 0
    %1602 = vmatpush.bf16.xpose.msra.mxu0 0
    %1603 = vmatpush.bf16.xpose.msra.mxu0 %v1594
    %1604 = vmatmul.bf16.gmra.mxu0 %v1591
    %v1605 = vpop.f32.mrf.mxu0
    %v1606 = vadd.f32 0.0, %v1605
    %v1607 = vpop.f32.mrf.mxu0
    %1608 = vdwg.mxu0
    %v1610 = vunpack.c.l.b16 %v1535
    %v1611 = vpack.c.b16 %v1610, %v1610
    %1612 = vrot.lane.b32.xlu0 %v1611, 96
    %v1613 = vpop.permute.xlu0 %1612
    %v1615 = vunpack.c.l.b16 %v1555
    %v1616 = vpack.c.b16 %v1615, %v1615
    %1617 = vrot.lane.b32.xlu0 %v1616, 32
    %v1618 = vpop.permute.xlu0 %1617
    %v1620 = vsel %vm1048, %v1613, 0
    %v1623 = vsel %vm1048, %v1618, 0
    %1625 = vmatpush.bf16.xpose.msra.mxu0 0
    %1626 = vmatpush.bf16.xpose.msra.mxu0 0
    %1627 = vmatpush.bf16.xpose.msra.mxu0 0
    %1628 = vmatpush.bf16.xpose.msra.mxu0 0
    %1629 = vmatpush.bf16.xpose.msra.mxu0 0
    %1630 = vmatpush.bf16.xpose.msra.mxu0 0
    %1631 = vmatpush.bf16.xpose.msra.mxu0 0
    %1632 = vmatpush.bf16.xpose.msra.mxu0 %v1623
    %1633 = vmatmul.bf16.gmra.mxu0 %v1620
    %v1634 = vpop.f32.mrf.mxu0
    %v1635 = vadd.f32 0.0, %v1634
    %v1636 = vpop.f32.mrf.mxu0
    %1637 = vdwg.mxu0
    %v1638 = vmul.f32 %v1606, 0.25
    %v1639 = vmul.f32 %v1635, 0.25
    %v1640 = vsel %vm1094, %v1638, -inf
    %1641 = vmax.xlane.f32.xlu0 %v1640
    %v1642 = vpop.xlane.xlu0 %1641
    %v1643 = vsel %vm1094, %v1639, -inf
    %1644 = vmax.xlane.f32.xlu0 %v1643
    %v1645 = vpop.xlane.xlu0 %1644
    %v1646 = vsub.f32 %v1638, %v1642
    %v1647 = vsub.f32 %v1639, %v1645
    %v1648 = vmul.f32 %v1646, 1.442695
    %v1649 = vpow.pop %v1648
    %v1650 = vmul.f32 %v1647, 1.442695
    %v1651 = vpow.pop %v1650
    %v1652 = vsel %vm1094, %v1649, 0.0
    %1653 = vadd.xlane.f32.xlu0 %v1652
    %v1654 = vpop.xlane.xlu0 %1653
    %v1655 = vsel %vm1094, %v1651, 0.0
    %1656 = vadd.xlane.f32.xlu0 %v1655
    %v1657 = vpop.xlane.xlu0 %1656
    %v1658 = vrcp.pop %v1654
    %v1659 = vrcp.pop %v1657
    %v1660 = vmul.f32 %v1649, %v1658
    %v1661 = vmul.f32 %v1651, %v1659
    %v1662 = vpack.c.bf16 %v1660, %v1660
    %v1663 = vpack.c.bf16 %v1661, %v1661
    %v1665 = vsel %vm1119, %v1662, 0
    %v1668 = vand.u32 %v1578, %v1126
    %1670 = vmatpush.bf16.msra.mxu0 0
    %1671 = vmatpush.bf16.msra.mxu0 0
    %1672 = vmatpush.bf16.msra.mxu0 0
    %1673 = vmatpush.bf16.msra.mxu0 0
    %1674 = vmatpush.bf16.msra.mxu0 0
    %1675 = vmatpush.bf16.msra.mxu0 0
    %1676 = vmatpush.bf16.msra.mxu0 0
    %1677 = vmatpush.bf16.msra.mxu0 %v1668
    %1678 = vmatmul.bf16.gmra.mxu0 %v1665
    %v1679 = vpop.f32.mrf.mxu0
    %v1680 = vadd.f32 0.0, %v1679
    %v1681 = vpop.f32.mrf.mxu0
    %1682 = vdwg.mxu0
    %v1684 = vsel %vm1119, %v1663, 0
    %v1687 = vand.u32 %v1579, %v1126
    %1689 = vmatpush.bf16.msra.mxu0 0
    %1690 = vmatpush.bf16.msra.mxu0 0
    %1691 = vmatpush.bf16.msra.mxu0 0
    %1692 = vmatpush.bf16.msra.mxu0 0
    %1693 = vmatpush.bf16.msra.mxu0 0
    %1694 = vmatpush.bf16.msra.mxu0 0
    %1695 = vmatpush.bf16.msra.mxu0 0
    %1696 = vmatpush.bf16.msra.mxu0 %v1687
    %1697 = vmatmul.bf16.gmra.mxu0 %v1684
    %v1698 = vpop.f32.mrf.mxu0
    %v1699 = vadd.f32 0.0, %v1698
    %v1700 = vpop.f32.mrf.mxu0
    %1701 = vdwg.mxu0
    %v1702 = vpack.c.bf16 %v1680, %v1680
    %v1703 = vpack.c.bf16 %v1699, %v1699
    %v1706 = vrot.slane %v1702, 3
    %v1707 = vrot.slane %v1703, 3
    %v1710 = vsel %vm549, %v1702, %v1706
    %v1712 = vsel %vm959, %v1702, %v1706
    %v1714 = vrot.slane %v1712, 1
    %v1715 = vsel %vm962, %v1702, %v1706
    %v1717 = vrot.slane %v1715, 2
    %v1720 = vsel %vm549, %v1703, %v1707
    %v1722 = vsel %vm959, %v1703, %v1707
    %v1724 = vrot.slane %v1722, 1
    %v1725 = vsel %vm962, %v1703, %v1707
    %v1727 = vrot.slane %v1725, 2
    %v1728 = vunpack.i.l.s16 %v1710
    %v1729 = vunpack.i.h.s16 %v1710
    %v1730 = vunpack.i.l.s16 %v1714
    %v1731 = vunpack.i.h.s16 %v1714
    %v1732 = vunpack.i.l.s16 %v1717
    %v1733 = vunpack.i.l.s16 %v1720
    %v1734 = vunpack.i.h.s16 %v1720
    %v1735 = vunpack.i.l.s16 %v1724
    %v1736 = vunpack.i.h.s16 %v1724
    %v1737 = vunpack.i.l.s16 %v1727
    %v1738 = vpack.i.b16 %v1729, %v1728
    %v1739 = vpack.i.b16 %v1731, %v1730
    %v1740 = vpack.i.b16 %v1733, %v1732
    %v1741 = vpack.i.b16 %v1735, %v1734
    %v1742 = vpack.i.b16 %v1737, %v1736
    %1744 = vst [vmem:[#allocation1] ss:$9 sm:$0xff] %v1738
    %s1746 = scalar_lea.vmem [#allocation1], 1
    %1747 = vst [vmem:[%s1746] ss:$9 sm:$0xff] %v1739
    %s1749 = scalar_lea.vmem [#allocation1], 2
    %1750 = vst [vmem:[%s1749] ss:$9 sm:$0xff] %v1740
    %s1752 = scalar_lea.vmem [#allocation1], 3
    %1753 = vst [vmem:[%s1752] ss:$9 sm:$0xff] %v1741
    %s1755 = scalar_lea.vmem [#allocation1], 4
    %1756 = vst [vmem:[%s1755] ss:$9 sm:$0xff] %v1742
    %v1757 = vld [vmem:[#allocation1] sm:$0xff]
    %1758 = vrot.lane.b32.xlu0 %v910, 64
    %v1759 = vpop.permute.xlu0 %1758
    %v1761 = vsel %vm1048, %v1757, 0
    %1763 = vmatpush.bf16.msra.mxu0 0
    %1764 = vmatpush.bf16.msra.mxu0 0
    %1765 = vmatpush.bf16.msra.mxu0 0
    %1766 = vmatpush.bf16.msra.mxu0 0
    %1767 = vmatpush.bf16.msra.mxu0 0
    %1768 = vmatpush.bf16.msra.mxu0 0
    %1769 = vmatpush.bf16.msra.mxu0 0
    %1770 = vmatpush.bf16.msra.mxu0 %v1759
    %1771 = vmatmul.bf16.gmra.mxu0 %v1761
    %v1772 = vpop.f32.mrf.mxu0
    %v1773 = vadd.f32 0.0, %v1772
    %v1774 = vpop.f32.mrf.mxu0
    %v1775 = vadd.f32 0.0, %v1774
    %1776 = vdwg.mxu0
    %v1779 = vrot.slane %v1773, 1
    %v1780 = vrot.slane %v1773, 2
    %v1781 = vrot.slane %v1773, 3
    %v1782 = vrot.slane %v1773, 4
    %v1783 = vrot.slane %v1773, 5
    %v1784 = vrot.slane %v1773, 6
    %v1785 = vrot.slane %v1773, 7
    %v1786 = vrot.slane %v1775, 1
    %v1795 = vadd.f32 %v1494, %v1773
    %v1796 = vadd.f32 %v1500, %v1779
    %v1797 = vadd.f32 %v1501, %v1780
    %v1798 = vadd.f32 %v1502, %v1781
    %v1799 = vadd.f32 %v1503, %v1782
    %v1800 = vadd.f32 %v1504, %v1783
    %v1801 = vadd.f32 %v1505, %v1784
    %v1802 = vadd.f32 %v1506, %v1785
    %v1803 = vadd.f32 %v1496, %v1775
    %v1804 = vadd.f32 %v1507, %v1786
    %1805 = vst [vmem:[#allocation1] ss:$9 sm:$0xff] %v958
    %s1806 = scalar_lea.vmem [#allocation1], 1
    %1807 = vst [vmem:[%s1806] ss:$9 sm:$0xff] %v961
    %s1808 = scalar_lea.vmem [#allocation1], 2
    %1809 = vst [vmem:[%s1808] ss:$9 sm:$0xff] %v964
    %s1810 = scalar_lea.vmem [#allocation1], 3
    %1811 = vst [vmem:[%s1810] ss:$9 sm:$0xff] %v967
    %s1812 = scalar_lea.vmem [#allocation1], 4
    %1813 = vst [vmem:[%s1812] ss:$9 sm:$0xff] %v970
    %v1814 = vld [vmem:[#allocation1] sm:$0xff]
    %1815 = vst [vmem:[#allocation1] ss:$9 sm:$0xff] %v973
    %1816 = vst [vmem:[%s1806] ss:$9 sm:$0xff] %v976
    %1817 = vst [vmem:[%s1808] ss:$9 sm:$0xff] %v979
    %1818 = vst [vmem:[%s1810] ss:$9 sm:$0xff] %v980
    %1819 = vst [vmem:[%s1812] ss:$9 sm:$0xff] %v982
    %v1820 = vld [vmem:[#allocation1] sm:$0xff]
    %v1823 = vpack.c.bf16 %v1814, %v1814
    %v1824 = vpack.c.bf16 %v1820, %v1820
    %1825 = vst [vmem:[#allocation1] ss:$9 sm:$0xff] %v958
    %s1826 = scalar_lea.vmem [#allocation1], 1
    %1827 = vst [vmem:[%s1826] ss:$9 sm:$0xff] %v961
    %s1828 = scalar_lea.vmem [#allocation1], 2
    %1829 = vst [vmem:[%s1828] ss:$9 sm:$0xff] %v964
    %s1830 = scalar_lea.vmem [#allocation1], 3
    %1831 = vst [vmem:[%s1830] ss:$9 sm:$0xff] %v967
    %s1832 = scalar_lea.vmem [#allocation1], 4
    %1833 = vst [vmem:[%s1832] ss:$9 sm:$0xff] %v970
    %v1834 = vld [vmem:[#allocation1] sm:$0xff]
    %1835 = vst [vmem:[#allocation1] ss:$9 sm:$0xff] %v973
    %1836 = vst [vmem:[%s1826] ss:$9 sm:$0xff] %v976
    %1837 = vst [vmem:[%s1828] ss:$9 sm:$0xff] %v979
    %1838 = vst [vmem:[%s1830] ss:$9 sm:$0xff] %v980
    %1839 = vst [vmem:[%s1832] ss:$9 sm:$0xff] %v982
    %v1840 = vld [vmem:[#allocation1] sm:$0xff]
    %v1843 = vpack.c.bf16 %v1834, %v1834
    %v1844 = vpack.c.bf16 %v1840, %v1840
    %1845 = vst [vmem:[#allocation1] ss:$9 sm:$0xff] %v958
    %s1846 = scalar_lea.vmem [#allocation1], 1
    %1847 = vst [vmem:[%s1846] ss:$9 sm:$0xff] %v961
    %s1848 = scalar_lea.vmem [#allocation1], 2
    %1849 = vst [vmem:[%s1848] ss:$9 sm:$0xff] %v964
    %s1850 = scalar_lea.vmem [#allocation1], 3
    %1851 = vst [vmem:[%s1850] ss:$9 sm:$0xff] %v967
    %s1852 = scalar_lea.vmem [#allocation1], 4
    %1853 = vst [vmem:[%s1852] ss:$9 sm:$0xff] %v970
    %v1854 = vld [vmem:[#allocation1 + $0x9] sm:$0xff]
    %1855 = vst [vmem:[#allocation1] ss:$9 sm:$0xff] %v973
    %1856 = vst [vmem:[%s1846] ss:$9 sm:$0xff] %v976
    %1857 = vst [vmem:[%s1848] ss:$9 sm:$0xff] %v979
    %1858 = vst [vmem:[%s1850] ss:$9 sm:$0xff] %v980
    %1859 = vst [vmem:[%s1852] ss:$9 sm:$0xff] %v982
    %v1860 = vld [vmem:[#allocation1 + $0x9] sm:$0xff]
    %1861 = vrot.lane.b32.xlu0 %v1854, 80
    %v1862 = vpop.permute.xlu0 %1861
    %1863 = vrot.lane.b32.xlu0 %v1860, 80
    %v1864 = vpop.permute.xlu0 %1863
    %v1867 = vpack.c.bf16 %v1862, %v1862
    %v1868 = vpack.c.bf16 %v1864, %v1864
    %v1870 = vunpack.c.l.b16 %v1823
    %v1871 = vpack.c.b16 %v1870, %v1870
    %1872 = vrot.lane.b32.xlu0 %v1871, 80
    %v1873 = vpop.permute.xlu0 %1872
    %v1875 = vunpack.c.l.b16 %v1843
    %v1876 = vpack.c.b16 %v1875, %v1875
    %1877 = vrot.lane.b32.xlu0 %v1876, 16
    %v1878 = vpop.permute.xlu0 %1877
    %v1880 = vsel %vm1048, %v1873, 0
    %v1883 = vsel %vm1048, %v1878, 0
    %1885 = vmatpush.bf16.xpose.msra.mxu0 0
    %1886 = vmatpush.bf16.xpose.msra.mxu0 0
    %1887 = vmatpush.bf16.xpose.msra.mxu0 0
    %1888 = vmatpush.bf16.xpose.msra.mxu0 0
    %1889 = vmatpush.bf16.xpose.msra.mxu0 0
    %1890 = vmatpush.bf16.xpose.msra.mxu0 0
    %1891 = vmatpush.bf16.xpose.msra.mxu0 0
    %1892 = vmatpush.bf16.xpose.msra.mxu0 %v1883
    %1893 = vmatmul.bf16.gmra.mxu0 %v1880
    %v1894 = vpop.f32.mrf.mxu0
    %v1895 = vadd.f32 0.0, %v1894
    %v1896 = vpop.f32.mrf.mxu0
    %1897 = vdwg.mxu0
    %v1899 = vunpack.c.l.b16 %v1824
    %v1900 = vpack.c.b16 %v1899, %v1899
    %1901 = vrot.lane.b32.xlu0 %v1900, 80
    %v1902 = vpop.permute.xlu0 %1901
    %v1904 = vunpack.c.l.b16 %v1844
    %v1905 = vpack.c.b16 %v1904, %v1904
    %1906 = vrot.lane.b32.xlu0 %v1905, 16
    %v1907 = vpop.permute.xlu0 %1906
    %v1909 = vsel %vm1048, %v1902, 0
    %v1912 = vsel %vm1048, %v1907, 0
    %1914 = vmatpush.bf16.xpose.msra.mxu0 0
    %1915 = vmatpush.bf16.xpose.msra.mxu0 0
    %1916 = vmatpush.bf16.xpose.msra.mxu0 0
    %1917 = vmatpush.bf16.xpose.msra.mxu0 0
    %1918 = vmatpush.bf16.xpose.msra.mxu0 0
    %1919 = vmatpush.bf16.xpose.msra.mxu0 0
    %1920 = vmatpush.bf16.xpose.msra.mxu0 0
    %1921 = vmatpush.bf16.xpose.msra.mxu0 %v1912
    %1922 = vmatmul.bf16.gmra.mxu0 %v1909
    %v1923 = vpop.f32.mrf.mxu0
    %v1924 = vadd.f32 0.0, %v1923
    %v1925 = vpop.f32.mrf.mxu0
    %1926 = vdwg.mxu0
    %v1927 = vmul.f32 %v1895, 0.25
    %v1928 = vmul.f32 %v1924, 0.25
    %v1929 = vsel %vm1094, %v1927, -inf
    %1930 = vmax.xlane.f32.xlu0 %v1929
    %v1931 = vpop.xlane.xlu0 %1930
    %v1932 = vsel %vm1094, %v1928, -inf
    %1933 = vmax.xlane.f32.xlu0 %v1932
    %v1934 = vpop.xlane.xlu0 %1933
    %v1935 = vsub.f32 %v1927, %v1931
    %v1936 = vsub.f32 %v1928, %v1934
    %v1937 = vmul.f32 %v1935, 1.442695
    %v1938 = vpow.pop %v1937
    %v1939 = vmul.f32 %v1936, 1.442695
    %v1940 = vpow.pop %v1939
    %v1941 = vsel %vm1094, %v1938, 0.0
    %1942 = vadd.xlane.f32.xlu0 %v1941
    %v1943 = vpop.xlane.xlu0 %1942
    %v1944 = vsel %vm1094, %v1940, 0.0
    %1945 = vadd.xlane.f32.xlu0 %v1944
    %v1946 = vpop.xlane.xlu0 %1945
    %v1947 = vrcp.pop %v1943
    %v1948 = vrcp.pop %v1946
    %v1949 = vmul.f32 %v1938, %v1947
    %v1950 = vmul.f32 %v1940, %v1948
    %v1951 = vpack.c.bf16 %v1949, %v1949
    %v1952 = vpack.c.bf16 %v1950, %v1950
    %v1954 = vsel %vm1119, %v1951, 0
    %v1957 = vand.u32 %v1867, %v1126
    %1959 = vmatpush.bf16.msra.mxu0 0
    %1960 = vmatpush.bf16.msra.mxu0 0
    %1961 = vmatpush.bf16.msra.mxu0 0
    %1962 = vmatpush.bf16.msra.mxu0 0
    %1963 = vmatpush.bf16.msra.mxu0 0
    %1964 = vmatpush.bf16.msra.mxu0 0
    %1965 = vmatpush.bf16.msra.mxu0 0
    %1966 = vmatpush.bf16.msra.mxu0 %v1957
    %1967 = vmatmul.bf16.gmra.mxu0 %v1954
    %v1968 = vpop.f32.mrf.mxu0
    %v1969 = vadd.f32 0.0, %v1968
    %v1970 = vpop.f32.mrf.mxu0
    %1971 = vdwg.mxu0
    %v1973 = vsel %vm1119, %v1952, 0
    %v1976 = vand.u32 %v1868, %v1126
    %1978 = vmatpush.bf16.msra.mxu0 0
    %1979 = vmatpush.bf16.msra.mxu0 0
    %1980 = vmatpush.bf16.msra.mxu0 0
    %1981 = vmatpush.bf16.msra.mxu0 0
    %1982 = vmatpush.bf16.msra.mxu0 0
    %1983 = vmatpush.bf16.msra.mxu0 0
    %1984 = vmatpush.bf16.msra.mxu0 0
    %1985 = vmatpush.bf16.msra.mxu0 %v1976
    %1986 = vmatmul.bf16.gmra.mxu0 %v1973
    %v1987 = vpop.f32.mrf.mxu0
    %v1988 = vadd.f32 0.0, %v1987
    %v1989 = vpop.f32.mrf.mxu0
    %1990 = vdwg.mxu0
    %v1991 = vpack.c.bf16 %v1969, %v1969
    %v1992 = vpack.c.bf16 %v1988, %v1988
    %v1995 = vrot.slane %v1991, 3
    %v1996 = vrot.slane %v1992, 3
    %v1999 = vsel %vm549, %v1991, %v1995
    %v2001 = vsel %vm959, %v1991, %v1995
    %v2003 = vrot.slane %v2001, 1
    %v2004 = vsel %vm962, %v1991, %v1995
    %v2006 = vrot.slane %v2004, 2
    %v2009 = vsel %vm549, %v1992, %v1996
    %v2011 = vsel %vm959, %v1992, %v1996
    %v2013 = vrot.slane %v2011, 1
    %v2014 = vsel %vm962, %v1992, %v1996
    %v2016 = vrot.slane %v2014, 2
    %v2017 = vunpack.i.l.s16 %v1999
    %v2018 = vunpack.i.h.s16 %v1999
    %v2019 = vunpack.i.l.s16 %v2003
    %v2020 = vunpack.i.h.s16 %v2003
    %v2021 = vunpack.i.l.s16 %v2006
    %v2022 = vunpack.i.l.s16 %v2009
    %v2023 = vunpack.i.h.s16 %v2009
    %v2024 = vunpack.i.l.s16 %v2013
    %v2025 = vunpack.i.h.s16 %v2013
    %v2026 = vunpack.i.l.s16 %v2016
    %v2027 = vpack.i.b16 %v2018, %v2017
    %v2028 = vpack.i.b16 %v2020, %v2019
    %v2029 = vpack.i.b16 %v2022, %v2021
    %v2030 = vpack.i.b16 %v2024, %v2023
    %v2031 = vpack.i.b16 %v2026, %v2025
    %2033 = vst [vmem:[#allocation1] ss:$9 sm:$0xff] %v2027
    %s2035 = scalar_lea.vmem [#allocation1], 1
    %2036 = vst [vmem:[%s2035] ss:$9 sm:$0xff] %v2028
    %s2038 = scalar_lea.vmem [#allocation1], 2
    %2039 = vst [vmem:[%s2038] ss:$9 sm:$0xff] %v2029
    %s2041 = scalar_lea.vmem [#allocation1], 3
    %2042 = vst [vmem:[%s2041] ss:$9 sm:$0xff] %v2030
    %s2044 = scalar_lea.vmem [#allocation1], 4
    %2045 = vst [vmem:[%s2044] ss:$9 sm:$0xff] %v2031
    %v2046 = vld [vmem:[#allocation1] sm:$0xff]
    %2047 = vrot.lane.b32.xlu0 %v912, 64
    %v2048 = vpop.permute.xlu0 %2047
    %v2050 = vsel %vm1048, %v2046, 0
    %2052 = vmatpush.bf16.msra.mxu0 0
    %2053 = vmatpush.bf16.msra.mxu0 0
    %2054 = vmatpush.bf16.msra.mxu0 0
    %2055 = vmatpush.bf16.msra.mxu0 0
    %2056 = vmatpush.bf16.msra.mxu0 0
    %2057 = vmatpush.bf16.msra.mxu0 0
    %2058 = vmatpush.bf16.msra.mxu0 0
    %2059 = vmatpush.bf16.msra.mxu0 %v2048
    %2060 = vmatmul.bf16.gmra.mxu0 %v2050
    %v2061 = vpop.f32.mrf.mxu0
    %v2062 = vadd.f32 0.0, %v2061
    %v2063 = vpop.f32.mrf.mxu0
    %v2064 = vadd.f32 0.0, %v2063
    %2065 = vdwg.mxu0
    %v2068 = vrot.slane %v2062, 1
    %v2069 = vrot.slane %v2062, 2
    %v2070 = vrot.slane %v2062, 3
    %v2071 = vrot.slane %v2062, 4
    %v2072 = vrot.slane %v2062, 5
    %v2073 = vrot.slane %v2062, 6
    %v2074 = vrot.slane %v2062, 7
    %v2075 = vrot.slane %v2064, 1
    %v2084 = vadd.f32 %v1795, %v2062
    %v2085 = vadd.f32 %v1796, %v2068
    %v2086 = vadd.f32 %v1797, %v2069
    %v2087 = vadd.f32 %v1798, %v2070
    %v2088 = vadd.f32 %v1799, %v2071
    %v2089 = vadd.f32 %v1800, %v2072
    %v2090 = vadd.f32 %v1801, %v2073
    %v2091 = vadd.f32 %v1802, %v2074
    %v2092 = vadd.f32 %v1803, %v2064
    %v2093 = vadd.f32 %v1804, %v2075
    %v2094 = vadd.f32 %v554, %v2084
    %v2095 = vadd.f32 %v558, %v2085
    %v2096 = vadd.f32 %v559, %v2086
    %v2097 = vadd.f32 %v560, %v2087
    %v2098 = vadd.f32 %v561, %v2088
    %v2099 = vadd.f32 %v555, %v2089
    %v2100 = vadd.f32 %v562, %v2090
    %v2101 = vadd.f32 %v563, %v2091
    %v2102 = vadd.f32 %v564, %v2092
    %v2103 = vadd.f32 %v565, %v2093
    %v2104 = vperm.slane %v26, 2
    %v2106 = vrot.slane %v2104, 1
    %v2107 = vrot.slane %v2104, 2
    %v2108 = vrot.slane %v2104, 3
    %v2109 = vrot.slane %v2104, 4
    %v2110 = vrot.slane %v2104, 5
    %v2111 = vrot.slane %v2104, 6
    %v2112 = vrot.slane %v2104, 7
    %v2120 = vadd.f32 %v2094, %v2104
    %v2121 = vadd.f32 %v2095, %v2106
    %v2122 = vadd.f32 %v2096, %v2107
    %v2123 = vadd.f32 %v2097, %v2108
    %v2124 = vadd.f32 %v2098, %v2109
    %v2125 = vadd.f32 %v2099, %v2110
    %v2126 = vadd.f32 %v2100, %v2111
    %v2127 = vadd.f32 %v2101, %v2112
    %v2128 = vadd.f32 %v2102, %v2104
    %v2129 = vadd.f32 %v2103, %v2106
    %2140 = vst [vmem:[#allocation1] ss:$9 sm:$0xff] %v2120
    %s2141 = scalar_lea.vmem [#allocation1], 1
    %2142 = vst [vmem:[%s2141] ss:$9 sm:$0xff] %v2121
    %s2143 = scalar_lea.vmem [#allocation1], 2
    %2144 = vst [vmem:[%s2143] ss:$9 sm:$0xff] %v2122
    %s2145 = scalar_lea.vmem [#allocation1], 3
    %2146 = vst [vmem:[%s2145] ss:$9 sm:$0xff] %v2123
    %s2147 = scalar_lea.vmem [#allocation1], 4
    %2148 = vst [vmem:[%s2147] ss:$9 sm:$0xff] %v2124
    %s2149 = scalar_lea.vmem [#allocation1], 5
    %2150 = vst [vmem:[%s2149] ss:$9 sm:$0xff] %v2125
    %s2151 = scalar_lea.vmem [#allocation1], 6
    %2152 = vst [vmem:[%s2151] ss:$9 sm:$0xff] %v2126
    %s2153 = scalar_lea.vmem [#allocation1], 7
    %2154 = vst [vmem:[%s2153] ss:$9 sm:$0xff] %v2127
    %v2155 = vld [vmem:[#allocation1] sm:$0xff]
    %2156 = vst [vmem:[#allocation1] ss:$9 sm:$0xff] %v2128
    %2157 = vst [vmem:[%s2141] ss:$9 sm:$0xff] %v2129
    %v2158 = vld [vmem:[#allocation1] sm:$0xff]
    %v2161 = vsel %vm643, %v2155, 0.0
    %2162 = vadd.xlane.f32.xlu0 %v2161
    %v2163 = vpop.xlane.xlu0 %2162
    %v2164 = vsel %vm647, %v2158, 0.0
    %2165 = vadd.xlane.f32.xlu0 %v2164
    %v2166 = vpop.xlane.xlu0 %2165
    %v2167 = vmul.f32 %v2163, %v657
    %v2168 = vmul.f32 %v2166, %v657
    %v2171 = vperm.slane %v2167, 0
    %v2172 = vperm.slane %v2167, 1
    %v2173 = vperm.slane %v2167, 2
    %v2174 = vperm.slane %v2167, 3
    %v2175 = vperm.slane %v2167, 4
    %v2176 = vperm.slane %v2167, 5
    %v2177 = vperm.slane %v2167, 6
    %v2178 = vperm.slane %v2167, 7
    %v2179 = vperm.slane %v2168, 0
    %v2180 = vperm.slane %v2168, 1
    %v2191 = vsub.f32 %v2120, %v2171
    %v2192 = vsub.f32 %v2121, %v2172
    %v2193 = vsub.f32 %v2122, %v2173
    %v2194 = vsub.f32 %v2123, %v2174
    %v2195 = vsub.f32 %v2124, %v2175
    %v2196 = vsub.f32 %v2125, %v2176
    %v2197 = vsub.f32 %v2126, %v2177
    %v2198 = vsub.f32 %v2127, %v2178
    %v2199 = vsub.f32 %v2128, %v2179
    %v2200 = vsub.f32 %v2129, %v2180
    %v2201 = vmul.f32 %v2191, %v2191
    %v2202 = vmul.f32 %v2192, %v2192
    %v2203 = vmul.f32 %v2193, %v2193
    %v2204 = vmul.f32 %v2194, %v2194
    %v2205 = vmul.f32 %v2195, %v2195
    %v2206 = vmul.f32 %v2196, %v2196
    %v2207 = vmul.f32 %v2197, %v2197
    %v2208 = vmul.f32 %v2198, %v2198
    %v2209 = vmul.f32 %v2199, %v2199
    %v2210 = vmul.f32 %v2200, %v2200
    %2221 = vst [vmem:[#allocation1] ss:$9 sm:$0xff] %v2201
    %s2222 = scalar_lea.vmem [#allocation1], 1
    %2223 = vst [vmem:[%s2222] ss:$9 sm:$0xff] %v2202
    %s2224 = scalar_lea.vmem [#allocation1], 2
    %2225 = vst [vmem:[%s2224] ss:$9 sm:$0xff] %v2203
    %s2226 = scalar_lea.vmem [#allocation1], 3
    %2227 = vst [vmem:[%s2226] ss:$9 sm:$0xff] %v2204
    %s2228 = scalar_lea.vmem [#allocation1], 4
    %2229 = vst [vmem:[%s2228] ss:$9 sm:$0xff] %v2205
    %s2230 = scalar_lea.vmem [#allocation1], 5
    %2231 = vst [vmem:[%s2230] ss:$9 sm:$0xff] %v2206
    %s2232 = scalar_lea.vmem [#allocation1], 6
    %2233 = vst [vmem:[%s2232] ss:$9 sm:$0xff] %v2207
    %s2234 = scalar_lea.vmem [#allocation1], 7
    %2235 = vst [vmem:[%s2234] ss:$9 sm:$0xff] %v2208
    %v2236 = vld [vmem:[#allocation1] sm:$0xff]
    %2237 = vst [vmem:[#allocation1] ss:$9 sm:$0xff] %v2209
    %2238 = vst [vmem:[%s2222] ss:$9 sm:$0xff] %v2210
    %v2239 = vld [vmem:[#allocation1] sm:$0xff]
    %v2242 = vsel %vm643, %v2236, 0.0
    %2243 = vadd.xlane.f32.xlu0 %v2242
    %v2244 = vpop.xlane.xlu0 %2243
    %v2245 = vsel %vm647, %v2239, 0.0
    %2246 = vadd.xlane.f32.xlu0 %v2245
    %v2247 = vpop.xlane.xlu0 %2246
    %v2248 = vmul.f32 %v2244, %v657
    %v2249 = vmul.f32 %v2247, %v657
    %v2250 = vadd.f32 %v2248, 1e-06
    %v2251 = vadd.f32 %v2249, 1e-06
    %v2252 = vrsqrt.pop %v2250
    %v2253 = vmul.f32 %v2252, %v2250
    %v2254 = vmul.f32 %v2253, %v2252
    %v2255 = vmul.f32 0.5, %v2254
    %v2256 = vsub.f32 1.5, %v2255
    %v2257 = vmul.f32 %v2252, %v2256
    %vm2258 = vweird.f32 %v2250
    %vm2259 = vweird.f32 %v2252
    %vm2260 = vmor %vm2258, %vm2259
    %v2261 = vsel %vm2260, %v2252, %v2257
    %v2262 = vrsqrt.pop %v2251
    %v2263 = vmul.f32 %v2262, %v2251
    %v2264 = vmul.f32 %v2263, %v2262
    %v2265 = vmul.f32 0.5, %v2264
    %v2266 = vsub.f32 1.5, %v2265
    %v2267 = vmul.f32 %v2262, %v2266
    %vm2268 = vweird.f32 %v2251
    %vm2269 = vweird.f32 %v2262
    %vm2270 = vmor %vm2268, %vm2269
    %v2271 = vsel %vm2270, %v2262, %v2267
    %v2274 = vperm.slane %v2261, 0
    %v2275 = vperm.slane %v2261, 1
    %v2276 = vperm.slane %v2261, 2
    %v2277 = vperm.slane %v2261, 3
    %v2278 = vperm.slane %v2261, 4
    %v2279 = vperm.slane %v2261, 5
    %v2280 = vperm.slane %v2261, 6
    %v2281 = vperm.slane %v2261, 7
    %v2282 = vperm.slane %v2271, 0
    %v2283 = vperm.slane %v2271, 1
    %v2294 = vmul.f32 %v2191, %v2274
    %v2295 = vmul.f32 %v2192, %v2275
    %v2296 = vmul.f32 %v2193, %v2276
    %v2297 = vmul.f32 %v2194, %v2277
    %v2298 = vmul.f32 %v2195, %v2278
    %v2299 = vmul.f32 %v2196, %v2279
    %v2300 = vmul.f32 %v2197, %v2280
    %v2301 = vmul.f32 %v2198, %v2281
    %v2302 = vmul.f32 %v2199, %v2282
    %v2303 = vmul.f32 %v2200, %v2283
    %v2304 = vperm.slane %v26, 3
    %v2306 = vrot.slane %v2304, 1
    %v2307 = vrot.slane %v2304, 2
    %v2308 = vrot.slane %v2304, 3
    %v2309 = vrot.slane %v2304, 4
    %v2310 = vrot.slane %v2304, 5
    %v2311 = vrot.slane %v2304, 6
    %v2312 = vrot.slane %v2304, 7
    %v2320 = vmul.f32 %v2294, %v2304
    %v2321 = vmul.f32 %v2295, %v2306
    %v2322 = vmul.f32 %v2296, %v2307
    %v2323 = vmul.f32 %v2297, %v2308
    %v2324 = vmul.f32 %v2298, %v2309
    %v2325 = vmul.f32 %v2299, %v2310
    %v2326 = vmul.f32 %v2300, %v2311
    %v2327 = vmul.f32 %v2301, %v2312
    %v2328 = vmul.f32 %v2302, %v2304
    %v2329 = vmul.f32 %v2303, %v2306
    %v2330 = vperm.slane %v26, 4
    %v2332 = vrot.slane %v2330, 1
    %v2333 = vrot.slane %v2330, 2
    %v2334 = vrot.slane %v2330, 3
    %v2335 = vrot.slane %v2330, 4
    %v2336 = vrot.slane %v2330, 5
    %v2337 = vrot.slane %v2330, 6
    %v2338 = vrot.slane %v2330, 7
    %v2346 = vadd.f32 %v2320, %v2330
    %v2347 = vadd.f32 %v2321, %v2332
    %v2348 = vadd.f32 %v2322, %v2333
    %v2349 = vadd.f32 %v2323, %v2334
    %v2350 = vadd.f32 %v2324, %v2335
    %v2351 = vadd.f32 %v2325, %v2336
    %v2352 = vadd.f32 %v2326, %v2337
    %v2353 = vadd.f32 %v2327, %v2338
    %v2354 = vadd.f32 %v2328, %v2330
    %v2355 = vadd.f32 %v2329, %v2332
    %2366 = vst [vmem:[#allocation1] ss:$9 sm:$0xff] %v2346
    %s2367 = scalar_lea.vmem [#allocation1], 1
    %2368 = vst [vmem:[%s2367] ss:$9 sm:$0xff] %v2347
    %s2369 = scalar_lea.vmem [#allocation1], 2
    %2370 = vst [vmem:[%s2369] ss:$9 sm:$0xff] %v2348
    %s2371 = scalar_lea.vmem [#allocation1], 3
    %2372 = vst [vmem:[%s2371] ss:$9 sm:$0xff] %v2349
    %s2373 = scalar_lea.vmem [#allocation1], 4
    %2374 = vst [vmem:[%s2373] ss:$9 sm:$0xff] %v2350
    %s2375 = scalar_lea.vmem [#allocation1], 5
    %2376 = vst [vmem:[%s2375] ss:$9 sm:$0xff] %v2351
    %s2377 = scalar_lea.vmem [#allocation1], 6
    %2378 = vst [vmem:[%s2377] ss:$9 sm:$0xff] %v2352
    %s2379 = scalar_lea.vmem [#allocation1], 7
    %2380 = vst [vmem:[%s2379] ss:$9 sm:$0xff] %v2353
    %v2381 = vld [vmem:[#allocation1] sm:$0xff]
    %2382 = vst [vmem:[#allocation1] ss:$9 sm:$0xff] %v2354
    %2383 = vst [vmem:[%s2367] ss:$9 sm:$0xff] %v2355
    %v2384 = vld [vmem:[#allocation1] sm:$0xff]
    %v2387 = vpack.c.bf16 %v2384, %v2381
    %v2388 = vperm.slane %v26, 5
    %v2389 = vperm.slane %v27, 5
    %v2398 = vunpack.c.l.b16 %v575
    %v2399 = vunpack.c.h.b16 %v575
    %v2400 = vunpack.c.l.b16 %v577
    %v2401 = vunpack.c.h.b16 %v577
    %v2402 = vunpack.c.l.b16 %v579
    %v2403 = vunpack.c.h.b16 %v579
    %v2404 = vunpack.c.l.b16 %v581
    %v2405 = vunpack.c.h.b16 %v581
    %v2406 = vunpack.c.l.b16 %v583
    %v2407 = vunpack.c.h.b16 %v583
    %v2408 = vunpack.c.l.b16 %v585
    %v2409 = vunpack.c.h.b16 %v585
    %v2410 = vunpack.c.l.b16 %v587
    %v2411 = vunpack.c.h.b16 %v587
    %v2412 = vunpack.c.l.b16 %v589
    %v2413 = vunpack.c.h.b16 %v589
    %v2414 = vpack.c.b16 %v2400, %v2398
    %v2415 = vpack.c.b16 %v2401, %v2399
    %v2416 = vpack.c.b16 %v2404, %v2402
    %v2417 = vpack.c.b16 %v2405, %v2403
    %v2418 = vpack.c.b16 %v2408, %v2406
    %v2419 = vpack.c.b16 %v2409, %v2407
    %v2420 = vpack.c.b16 %v2412, %v2410
    %v2421 = vpack.c.b16 %v2413, %v2411
    %v2431 = vsel %vm643, %v2387, 0
    %2433 = vmatpush.bf16.msra.mxu0 0
    %2434 = vmatpush.bf16.msra.mxu0 0
    %2435 = vmatpush.bf16.msra.mxu0 0
    %2436 = vmatpush.bf16.msra.mxu0 0
    %2437 = vmatpush.bf16.msra.mxu0 %v2420
    %2438 = vmatpush.bf16.msra.mxu0 %v2418
    %2439 = vmatpush.bf16.msra.mxu0 %v2416
    %2440 = vmatpush.bf16.msra.mxu0 %v2414
    %2441 = vmatmul.bf16.gmra.mxu0 %v2431
    %v2442 = vpop.f32.mrf.mxu0
    %v2443 = vadd.f32 %v2388, %v2442
    %v2444 = vpop.f32.mrf.mxu0
    %v2445 = vadd.f32 %v2388, %v2444
    %2446 = vdwg.mxu0
    %2447 = vmatpush.bf16.msra.mxu0 0
    %2448 = vmatpush.bf16.msra.mxu0 0
    %2449 = vmatpush.bf16.msra.mxu0 0
    %2450 = vmatpush.bf16.msra.mxu0 0
    %2451 = vmatpush.bf16.msra.mxu0 %v2421
    %2452 = vmatpush.bf16.msra.mxu0 %v2419
    %2453 = vmatpush.bf16.msra.mxu0 %v2417
    %2454 = vmatpush.bf16.msra.mxu0 %v2415
    %2455 = vmatmul.bf16.gmra.mxu0 %v2431
    %v2456 = vpop.f32.mrf.mxu0
    %v2457 = vadd.f32 %v2389, %v2456
    %v2458 = vpop.f32.mrf.mxu0
    %v2459 = vadd.f32 %v2389, %v2458
    %2460 = vdwg.mxu0
    %v2461 = vmul.f32 %v2443, 0.5
    %v2462 = vmul.f32 %v2457, 0.5
    %v2463 = vmul.f32 %v2445, 0.5
    %v2464 = vmul.f32 %v2459, 0.5
    %v2465 = vmul.f32 %v2443, 0.70710677
    %v2466 = vmul.f32 %v2457, 0.70710677
    %v2467 = vmul.f32 %v2445, 0.70710677
    %v2468 = vmul.f32 %v2459, 0.70710677
    %v2469 = vmul.f32 %v2465, %v2465
    %v2470 = vmin.f32 16.0, %v2469
    %v2471 = vmul.f32 %v2470, 2.1237322e-06
    %v2472 = vadd.f32 %v2471, 0.00028619796
    %v2473 = vmul.f32 %v2470, %v2472
    %v2474 = vadd.f32 %v2473, 0.0036580483
    %v2475 = vmul.f32 %v2470, %v2474
    %v2476 = vadd.f32 %v2475, 0.05243302
    %v2477 = vmul.f32 %v2470, %v2476
    %v2478 = vadd.f32 %v2477, 0.18741608
    %v2479 = vmul.f32 %v2470, %v2478
    %v2480 = vadd.f32 %v2479, 1.1283791
    %v2481 = vmul.f32 %v2465, %v2480
    %v2482 = vmul.f32 %v2470, 3.8918573e-05
    %v2483 = vadd.f32 %v2482, 0.001143296
    %v2484 = vmul.f32 %v2470, %v2483
    %v2485 = vadd.f32 %v2484, 0.014752088
    %v2486 = vmul.f32 %v2470, %v2485
    %v2487 = vadd.f32 %v2486, 0.112945676
    %v2488 = vmul.f32 %v2470, %v2487
    %v2489 = vadd.f32 %v2488, 0.4994258
    %v2490 = vmul.f32 %v2470, %v2489
    %v2491 = vadd.f32 %v2490, 1.0
    %v2492 = vrcp.pop %v2491
    %v2493 = vmul.f32 %v2491, %v2492
    %v2494 = vsub.f32 1.0, %v2493
    %v2495 = vmul.f32 %v2492, %v2494
    %v2496 = vadd.f32 %v2492, %v2495
    %vm2497 = vweird.f32 %v2491
    %vm2498 = vweird.f32 %v2492
    %vm2499 = vmor %vm2497, %vm2498
    %v2500 = vsel %vm2499, %v2492, %v2496
    %v2501 = vand.u32 2147483647, %v2491
    %vm2502 = vcmp.eq.f32.partialorder %v2501, 8.507059e+37
    %v2503 = vand.u32 %v2491, 2147483648
    %v2504 = vor.u32 1.1754944e-38, %v2503
    %v2505 = vsel %vm2502, %v2504, %v2500
    %v2506 = vmul.f32 %v2481, %v2505
    %v2507 = vmin.f32 %v2506, 1.0
    %v2508 = vmax.f32 %v2507, -1.0
    %v2509 = vmul.f32 %v2466, %v2466
    %v2510 = vmin.f32 16.0, %v2509
    %v2511 = vmul.f32 %v2510, 2.1237322e-06
    %v2512 = vadd.f32 %v2511, 0.00028619796
    %v2513 = vmul.f32 %v2510, %v2512
    %v2514 = vadd.f32 %v2513, 0.0036580483
    %v2515 = vmul.f32 %v2510, %v2514
    %v2516 = vadd.f32 %v2515, 0.05243302
    %v2517 = vmul.f32 %v2510, %v2516
    %v2518 = vadd.f32 %v2517, 0.18741608
    %v2519 = vmul.f32 %v2510, %v2518
    %v2520 = vadd.f32 %v2519, 1.1283791
    %v2521 = vmul.f32 %v2466, %v2520
    %v2522 = vmul.f32 %v2510, 3.8918573e-05
    %v2523 = vadd.f32 %v2522, 0.001143296
    %v2524 = vmul.f32 %v2510, %v2523
    %v2525 = vadd.f32 %v2524, 0.014752088
    %v2526 = vmul.f32 %v2510, %v2525
    %v2527 = vadd.f32 %v2526, 0.112945676
    %v2528 = vmul.f32 %v2510, %v2527
    %v2529 = vadd.f32 %v2528, 0.4994258
    %v2530 = vmul.f32 %v2510, %v2529
    %v2531 = vadd.f32 %v2530, 1.0
    %v2532 = vrcp.pop %v2531
    %v2533 = vmul.f32 %v2531, %v2532
    %v2534 = vsub.f32 1.0, %v2533
    %v2535 = vmul.f32 %v2532, %v2534
    %v2536 = vadd.f32 %v2532, %v2535
    %vm2537 = vweird.f32 %v2531
    %vm2538 = vweird.f32 %v2532
    %vm2539 = vmor %vm2537, %vm2538
    %v2540 = vsel %vm2539, %v2532, %v2536
    %v2541 = vand.u32 2147483647, %v2531
    %vm2542 = vcmp.eq.f32.partialorder %v2541, 8.507059e+37
    %v2543 = vand.u32 %v2531, 2147483648
    %v2544 = vor.u32 1.1754944e-38, %v2543
    %v2545 = vsel %vm2542, %v2544, %v2540
    %v2546 = vmul.f32 %v2521, %v2545
    %v2547 = vmin.f32 %v2546, 1.0
    %v2548 = vmax.f32 %v2547, -1.0
    %v2549 = vmul.f32 %v2467, %v2467
    %v2550 = vmin.f32 16.0, %v2549
    %v2551 = vmul.f32 %v2550, 2.1237322e-06
    %v2552 = vadd.f32 %v2551, 0.00028619796
    %v2553 = vmul.f32 %v2550, %v2552
    %v2554 = vadd.f32 %v2553, 0.0036580483
    %v2555 = vmul.f32 %v2550, %v2554
    %v2556 = vadd.f32 %v2555, 0.05243302
    %v2557 = vmul.f32 %v2550, %v2556
    %v2558 = vadd.f32 %v2557, 0.18741608
    %v2559 = vmul.f32 %v2550, %v2558
    %v2560 = vadd.f32 %v2559, 1.1283791
    %v2561 = vmul.f32 %v2467, %v2560
    %v2562 = vmul.f32 %v2550, 3.8918573e-05
    %v2563 = vadd.f32 %v2562, 0.001143296
    %v2564 = vmul.f32 %v2550, %v2563
    %v2565 = vadd.f32 %v2564, 0.014752088
    %v2566 = vmul.f32 %v2550, %v2565
    %v2567 = vadd.f32 %v2566, 0.112945676
    %v2568 = vmul.f32 %v2550, %v2567
    %v2569 = vadd.f32 %v2568, 0.4994258
    %v2570 = vmul.f32 %v2550, %v2569
    %v2571 = vadd.f32 %v2570, 1.0
    %v2572 = vrcp.pop %v2571
    %v2573 = vmul.f32 %v2571, %v2572
    %v2574 = vsub.f32 1.0, %v2573
    %v2575 = vmul.f32 %v2572, %v2574
    %v2576 = vadd.f32 %v2572, %v2575
    %vm2577 = vweird.f32 %v2571
    %vm2578 = vweird.f32 %v2572
    %vm2579 = vmor %vm2577, %vm2578
    %v2580 = vsel %vm2579, %v2572, %v2576
    %v2581 = vand.u32 2147483647, %v2571
    %vm2582 = vcmp.eq.f32.partialorder %v2581, 8.507059e+37
    %v2583 = vand.u32 %v2571, 2147483648
    %v2584 = vor.u32 1.1754944e-38, %v2583
    %v2585 = vsel %vm2582, %v2584, %v2580
    %v2586 = vmul.f32 %v2561, %v2585
    %v2587 = vmin.f32 %v2586, 1.0
    %v2588 = vmax.f32 %v2587, -1.0
    %v2589 = vmul.f32 %v2468, %v2468
    %v2590 = vmin.f32 16.0, %v2589
    %v2591 = vmul.f32 %v2590, 2.1237322e-06
    %v2592 = vadd.f32 %v2591, 0.00028619796
    %v2593 = vmul.f32 %v2590, %v2592
    %v2594 = vadd.f32 %v2593, 0.0036580483
    %v2595 = vmul.f32 %v2590, %v2594
    %v2596 = vadd.f32 %v2595, 0.05243302
    %v2597 = vmul.f32 %v2590, %v2596
    %v2598 = vadd.f32 %v2597, 0.18741608
    %v2599 = vmul.f32 %v2590, %v2598
    %v2600 = vadd.f32 %v2599, 1.1283791
    %v2601 = vmul.f32 %v2468, %v2600
    %v2602 = vmul.f32 %v2590, 3.8918573e-05
    %v2603 = vadd.f32 %v2602, 0.001143296
    %v2604 = vmul.f32 %v2590, %v2603
    %v2605 = vadd.f32 %v2604, 0.014752088
    %v2606 = vmul.f32 %v2590, %v2605
    %v2607 = vadd.f32 %v2606, 0.112945676
    %v2608 = vmul.f32 %v2590, %v2607
    %v2609 = vadd.f32 %v2608, 0.4994258
    %v2610 = vmul.f32 %v2590, %v2609
    %v2611 = vadd.f32 %v2610, 1.0
    %v2612 = vrcp.pop %v2611
    %v2613 = vmul.f32 %v2611, %v2612
    %v2614 = vsub.f32 1.0, %v2613
    %v2615 = vmul.f32 %v2612, %v2614
    %v2616 = vadd.f32 %v2612, %v2615
    %vm2617 = vweird.f32 %v2611
    %vm2618 = vweird.f32 %v2612
    %vm2619 = vmor %vm2617, %vm2618
    %v2620 = vsel %vm2619, %v2612, %v2616
    %v2621 = vand.u32 2147483647, %v2611
    %vm2622 = vcmp.eq.f32.partialorder %v2621, 8.507059e+37
    %v2623 = vand.u32 %v2611, 2147483648
    %v2624 = vor.u32 1.1754944e-38, %v2623
    %v2625 = vsel %vm2622, %v2624, %v2620
    %v2626 = vmul.f32 %v2601, %v2625
    %v2627 = vmin.f32 %v2626, 1.0
    %v2628 = vmax.f32 %v2627, -1.0
    %v2629 = vadd.f32 %v2508, 1.0
    %v2630 = vadd.f32 %v2548, 1.0
    %v2631 = vadd.f32 %v2588, 1.0
    %v2632 = vadd.f32 %v2628, 1.0
    %v2633 = vmul.f32 %v2461, %v2629
    %v2634 = vmul.f32 %v2462, %v2630
    %v2635 = vmul.f32 %v2463, %v2631
    %v2636 = vmul.f32 %v2464, %v2632
    %v2637 = vpack.c.bf16 %v2635, %v2633
    %v2638 = vpack.c.bf16 %v2636, %v2634
    %v2639 = vperm.slane %v26, 6
    %v2672 = vunpack.c.l.b16 %v590
    %v2673 = vunpack.c.l.b16 %v591
    %v2674 = vunpack.c.l.b16 %v592
    %v2675 = vunpack.c.l.b16 %v593
    %v2676 = vunpack.c.l.b16 %v594
    %v2677 = vunpack.c.l.b16 %v595
    %v2678 = vunpack.c.l.b16 %v596
    %v2679 = vunpack.c.l.b16 %v597
    %v2680 = vunpack.c.l.b16 %v598
    %v2681 = vunpack.c.l.b16 %v599
    %v2682 = vunpack.c.l.b16 %v600
    %v2683 = vunpack.c.l.b16 %v601
    %v2684 = vunpack.c.l.b16 %v602
    %v2685 = vunpack.c.l.b16 %v603
    %v2686 = vunpack.c.l.b16 %v604
    %v2687 = vunpack.c.l.b16 %v605
    %v2688 = vunpack.c.l.b16 %v606
    %v2689 = vunpack.c.l.b16 %v607
    %v2690 = vunpack.c.l.b16 %v608
    %v2691 = vunpack.c.l.b16 %v609
    %v2692 = vunpack.c.l.b16 %v610
    %v2693 = vunpack.c.l.b16 %v611
    %v2694 = vunpack.c.l.b16 %v612
    %v2695 = vunpack.c.l.b16 %v613
    %v2696 = vunpack.c.l.b16 %v614
    %v2697 = vunpack.c.l.b16 %v615
    %v2698 = vunpack.c.l.b16 %v616
    %v2699 = vunpack.c.l.b16 %v617
    %v2700 = vunpack.c.l.b16 %v618
    %v2701 = vunpack.c.l.b16 %v619
    %v2702 = vunpack.c.l.b16 %v620
    %v2703 = vunpack.c.l.b16 %v621
    %v2704 = vpack.c.b16 %v2673, %v2672
    %v2705 = vpack.c.b16 %v2675, %v2674
    %v2706 = vpack.c.b16 %v2677, %v2676
    %v2707 = vpack.c.b16 %v2679, %v2678
    %v2708 = vpack.c.b16 %v2681, %v2680
    %v2709 = vpack.c.b16 %v2683, %v2682
    %v2710 = vpack.c.b16 %v2685, %v2684
    %v2711 = vpack.c.b16 %v2687, %v2686
    %v2712 = vpack.c.b16 %v2689, %v2688
    %v2713 = vpack.c.b16 %v2691, %v2690
    %v2714 = vpack.c.b16 %v2693, %v2692
    %v2715 = vpack.c.b16 %v2695, %v2694
    %v2716 = vpack.c.b16 %v2697, %v2696
    %v2717 = vpack.c.b16 %v2699, %v2698
    %v2718 = vpack.c.b16 %v2701, %v2700
    %v2719 = vpack.c.b16 %v2703, %v2702
    %2736 = vmatpush.bf16.msra.mxu0 %v2711
    %2737 = vmatpush.bf16.msra.mxu0 %v2710
    %2738 = vmatpush.bf16.msra.mxu0 %v2709
    %2739 = vmatpush.bf16.msra.mxu0 %v2708
    %2740 = vmatpush.bf16.msra.mxu0 %v2707
    %2741 = vmatpush.bf16.msra.mxu0 %v2706
    %2742 = vmatpush.bf16.msra.mxu0 %v2705
    %2743 = vmatpush.bf16.msra.mxu0 %v2704
    %2744 = vmatmul.bf16.gmra.mxu0 %v2637
    %v2745 = vpop.f32.mrf.mxu0
    %v2746 = vadd.f32 %v2639, %v2745
    %v2747 = vpop.f32.mrf.mxu0
    %v2748 = vadd.f32 %v2639, %v2747
    %2749 = vdwg.mxu0
    %2750 = vmatpush.bf16.msra.mxu0 %v2719
    %2751 = vmatpush.bf16.msra.mxu0 %v2718
    %2752 = vmatpush.bf16.msra.mxu0 %v2717
    %2753 = vmatpush.bf16.msra.mxu0 %v2716
    %2754 = vmatpush.bf16.msra.mxu0 %v2715
    %2755 = vmatpush.bf16.msra.mxu0 %v2714
    %2756 = vmatpush.bf16.msra.mxu0 %v2713
    %2757 = vmatpush.bf16.msra.mxu0 %v2712
    %2758 = vmatmul.bf16.gmra.mxu0 %v2638
    %v2759 = vpop.f32.mrf.mxu0
    %v2760 = vadd.f32 %v2746, %v2759
    %v2761 = vpop.f32.mrf.mxu0
    %v2762 = vadd.f32 %v2748, %v2761
    %2763 = vdwg.mxu0
    %v2766 = vrot.slane %v2760, 1
    %v2767 = vrot.slane %v2760, 2
    %v2768 = vrot.slane %v2760, 3
    %v2769 = vrot.slane %v2760, 4
    %v2770 = vrot.slane %v2760, 5
    %v2771 = vrot.slane %v2760, 6
    %v2772 = vrot.slane %v2760, 7
    %v2773 = vrot.slane %v2762, 1
    %v2782 = vadd.f32 %v2120, %v2760
    %v2783 = vadd.f32 %v2121, %v2766
    %v2784 = vadd.f32 %v2122, %v2767
    %v2785 = vadd.f32 %v2123, %v2768
    %v2786 = vadd.f32 %v2124, %v2769
    %v2787 = vadd.f32 %v2125, %v2770
    %v2788 = vadd.f32 %v2126, %v2771
    %v2789 = vadd.f32 %v2127, %v2772
    %v2790 = vadd.f32 %v2128, %v2762
    %v2791 = vadd.f32 %v2129, %v2773
    %s2792 = scalar_lea.vmem %s2, 128
    %v2793 = vld [vmem:[%s2792] sm:$0xff]
    %v2794 = vld [vmem:[%s2792 + $0x8] sm:$0xff]
    %v2795 = vld [vmem:[%s2792 + $0x10] sm:$0xff]
    %v2796 = vld [vmem:[%s2792 + $0x18] sm:$0xff]
    %v2797 = vld [vmem:[%s2792 + $0x20] sm:$0xff]
    %v2798 = vld [vmem:[%s2792 + $0x28] sm:$0xff]
    %v2799 = vld [vmem:[%s2792 + $0x30] sm:$0xff]
    %v2800 = vld [vmem:[%s2792 + $0x38] sm:$0xff]
    %v2801 = vld [vmem:[%s2792 + $0x40] sm:$0xff]
    %v2802 = vld [vmem:[%s2792 + $0x48] sm:$0xff]
    %v2803 = vld [vmem:[%s2792 + $0x50] sm:$0xff]
    %v2804 = vld [vmem:[%s2792 + $0x58] sm:$0xff]
    %v2805 = vld [vmem:[%s2792 + $0x60] sm:$0xff]
    %v2806 = vld [vmem:[%s2792 + $0x68] sm:$0xff]
    %v2807 = vld [vmem:[%s2792 + $0x70] sm:$0xff]
    %v2808 = vld [vmem:[%s2792 + $0x78] sm:$0xff]
    %s2809 = scalar_lea.vmem %s3, 128
    %v2810 = vld [vmem:[%s2809] sm:$0xf]
    %v2811 = vld [vmem:[%s2809 + $0x4] sm:$0xf]
    %v2812 = vld [vmem:[%s2809 + $0x8] sm:$0xf]
    %v2813 = vld [vmem:[%s2809 + $0xc] sm:$0xf]
    %v2814 = vld [vmem:[%s2809 + $0x10] sm:$0xf]
    %v2815 = vld [vmem:[%s2809 + $0x14] sm:$0xf]
    %v2816 = vld [vmem:[%s2809 + $0x18] sm:$0xf]
    %v2817 = vld [vmem:[%s2809 + $0x1c] sm:$0xf]
    %v2818 = vld [vmem:[%s2809 + $0x20] sm:$0xf]
    %v2819 = vld [vmem:[%s2809 + $0x24] sm:$0xf]
    %v2820 = vld [vmem:[%s2809 + $0x28] sm:$0xf]
    %v2821 = vld [vmem:[%s2809 + $0x2c] sm:$0xf]
    %v2822 = vld [vmem:[%s2809 + $0x30] sm:$0xf]
    %v2823 = vld [vmem:[%s2809 + $0x34] sm:$0xf]
    %v2824 = vld [vmem:[%s2809 + $0x38] sm:$0xf]
    %v2825 = vld [vmem:[%s2809 + $0x3c] sm:$0xf]
    %v2826 = vld [vmem:[%s2809 + $0x40] sm:$0xf]
    %v2827 = vld [vmem:[%s2809 + $0x44] sm:$0xf]
    %v2828 = vld [vmem:[%s2809 + $0x48] sm:$0xf]
    %v2829 = vld [vmem:[%s2809 + $0x4c] sm:$0xf]
    %v2830 = vld [vmem:[%s2809 + $0x50] sm:$0xf]
    %v2831 = vld [vmem:[%s2809 + $0x54] sm:$0xf]
    %v2832 = vld [vmem:[%s2809 + $0x58] sm:$0xf]
    %v2833 = vld [vmem:[%s2809 + $0x5c] sm:$0xf]
    %v2834 = vld [vmem:[%s2809 + $0x60] sm:$0xf]
    %v2835 = vld [vmem:[%s2809 + $0x64] sm:$0xf]
    %v2836 = vld [vmem:[%s2809 + $0x68] sm:$0xf]
    %v2837 = vld [vmem:[%s2809 + $0x6c] sm:$0xf]
    %v2838 = vld [vmem:[%s2809 + $0x70] sm:$0xf]
    %v2839 = vld [vmem:[%s2809 + $0x74] sm:$0xf]
    %v2840 = vld [vmem:[%s2809 + $0x78] sm:$0xf]
    %v2841 = vld [vmem:[%s2809 + $0x7c] sm:$0xf]
    %2852 = vst [vmem:[#allocation1] ss:$9 sm:$0xff] %v2782
    %s2853 = scalar_lea.vmem [#allocation1], 1
    %2854 = vst [vmem:[%s2853] ss:$9 sm:$0xff] %v2783
    %s2855 = scalar_lea.vmem [#allocation1], 2
    %2856 = vst [vmem:[%s2855] ss:$9 sm:$0xff] %v2784
    %s2857 = scalar_lea.vmem [#allocation1], 3
    %2858 = vst [vmem:[%s2857] ss:$9 sm:$0xff] %v2785
    %s2859 = scalar_lea.vmem [#allocation1], 4
    %2860 = vst [vmem:[%s2859] ss:$9 sm:$0xff] %v2786
    %s2861 = scalar_lea.vmem [#allocation1], 5
    %2862 = vst [vmem:[%s2861] ss:$9 sm:$0xff] %v2787
    %s2863 = scalar_lea.vmem [#allocation1], 6
    %2864 = vst [vmem:[%s2863] ss:$9 sm:$0xff] %v2788
    %s2865 = scalar_lea.vmem [#allocation1], 7
    %2866 = vst [vmem:[%s2865] ss:$9 sm:$0xff] %v2789
    %v2867 = vld [vmem:[#allocation1] sm:$0xff]
    %2868 = vst [vmem:[#allocation1] ss:$9 sm:$0xff] %v2790
    %2869 = vst [vmem:[%s2853] ss:$9 sm:$0xff] %v2791
    %v2870 = vld [vmem:[#allocation1] sm:$0xff]
    %v2873 = vsel %vm643, %v2867, 0.0
    %2874 = vadd.xlane.f32.xlu0 %v2873
    %v2875 = vpop.xlane.xlu0 %2874
    %v2876 = vsel %vm647, %v2870, 0.0
    %2877 = vadd.xlane.f32.xlu0 %v2876
    %v2878 = vpop.xlane.xlu0 %2877
    %v2879 = vmul.f32 %v2875, %v657
    %v2880 = vmul.f32 %v2878, %v657
    %v2883 = vperm.slane %v2879, 0
    %v2884 = vperm.slane %v2879, 1
    %v2885 = vperm.slane %v2879, 2
    %v2886 = vperm.slane %v2879, 3
    %v2887 = vperm.slane %v2879, 4
    %v2888 = vperm.slane %v2879, 5
    %v2889 = vperm.slane %v2879, 6
    %v2890 = vperm.slane %v2879, 7
    %v2891 = vperm.slane %v2880, 0
    %v2892 = vperm.slane %v2880, 1
    %v2903 = vsub.f32 %v2782, %v2883
    %v2904 = vsub.f32 %v2783, %v2884
    %v2905 = vsub.f32 %v2784, %v2885
    %v2906 = vsub.f32 %v2785, %v2886
    %v2907 = vsub.f32 %v2786, %v2887
    %v2908 = vsub.f32 %v2787, %v2888
    %v2909 = vsub.f32 %v2788, %v2889
    %v2910 = vsub.f32 %v2789, %v2890
    %v2911 = vsub.f32 %v2790, %v2891
    %v2912 = vsub.f32 %v2791, %v2892
    %v2913 = vmul.f32 %v2903, %v2903
    %v2914 = vmul.f32 %v2904, %v2904
    %v2915 = vmul.f32 %v2905, %v2905
    %v2916 = vmul.f32 %v2906, %v2906
    %v2917 = vmul.f32 %v2907, %v2907
    %v2918 = vmul.f32 %v2908, %v2908
    %v2919 = vmul.f32 %v2909, %v2909
    %v2920 = vmul.f32 %v2910, %v2910
    %v2921 = vmul.f32 %v2911, %v2911
    %v2922 = vmul.f32 %v2912, %v2912
    %2933 = vst [vmem:[#allocation1] ss:$9 sm:$0xff] %v2913
    %s2934 = scalar_lea.vmem [#allocation1], 1
    %2935 = vst [vmem:[%s2934] ss:$9 sm:$0xff] %v2914
    %s2936 = scalar_lea.vmem [#allocation1], 2
    %2937 = vst [vmem:[%s2936] ss:$9 sm:$0xff] %v2915
    %s2938 = scalar_lea.vmem [#allocation1], 3
    %2939 = vst [vmem:[%s2938] ss:$9 sm:$0xff] %v2916
    %s2940 = scalar_lea.vmem [#allocation1], 4
    %2941 = vst [vmem:[%s2940] ss:$9 sm:$0xff] %v2917
    %s2942 = scalar_lea.vmem [#allocation1], 5
    %2943 = vst [vmem:[%s2942] ss:$9 sm:$0xff] %v2918
    %s2944 = scalar_lea.vmem [#allocation1], 6
    %2945 = vst [vmem:[%s2944] ss:$9 sm:$0xff] %v2919
    %s2946 = scalar_lea.vmem [#allocation1], 7
    %2947 = vst [vmem:[%s2946] ss:$9 sm:$0xff] %v2920
    %v2948 = vld [vmem:[#allocation1] sm:$0xff]
    %2949 = vst [vmem:[#allocation1] ss:$9 sm:$0xff] %v2921
    %2950 = vst [vmem:[%s2934] ss:$9 sm:$0xff] %v2922
    %v2951 = vld [vmem:[#allocation1] sm:$0xff]
    %v2954 = vsel %vm643, %v2948, 0.0
    %2955 = vadd.xlane.f32.xlu0 %v2954
    %v2956 = vpop.xlane.xlu0 %2955
    %v2957 = vsel %vm647, %v2951, 0.0
    %2958 = vadd.xlane.f32.xlu0 %v2957
    %v2959 = vpop.xlane.xlu0 %2958
    %v2960 = vmul.f32 %v2956, %v657
    %v2961 = vmul.f32 %v2959, %v657
    %v2962 = vadd.f32 %v2960, 1e-06
    %v2963 = vadd.f32 %v2961, 1e-06
    %v2964 = vrsqrt.pop %v2962
    %v2965 = vmul.f32 %v2964, %v2962
    %v2966 = vmul.f32 %v2965, %v2964
    %v2967 = vmul.f32 0.5, %v2966
    %v2968 = vsub.f32 1.5, %v2967
    %v2969 = vmul.f32 %v2964, %v2968
    %vm2970 = vweird.f32 %v2962
    %vm2971 = vweird.f32 %v2964
    %vm2972 = vmor %vm2970, %vm2971
    %v2973 = vsel %vm2972, %v2964, %v2969
    %v2974 = vrsqrt.pop %v2963
    %v2975 = vmul.f32 %v2974, %v2963
    %v2976 = vmul.f32 %v2975, %v2974
    %v2977 = vmul.f32 0.5, %v2976
    %v2978 = vsub.f32 1.5, %v2977
    %v2979 = vmul.f32 %v2974, %v2978
    %vm2980 = vweird.f32 %v2963
    %vm2981 = vweird.f32 %v2974
    %vm2982 = vmor %vm2980, %vm2981
    %v2983 = vsel %vm2982, %v2974, %v2979
    %v2986 = vperm.slane %v2973, 0
    %v2987 = vperm.slane %v2973, 1
    %v2988 = vperm.slane %v2973, 2
    %v2989 = vperm.slane %v2973, 3
    %v2990 = vperm.slane %v2973, 4
    %v2991 = vperm.slane %v2973, 5
    %v2992 = vperm.slane %v2973, 6
    %v2993 = vperm.slane %v2973, 7
    %v2994 = vperm.slane %v2983, 0
    %v2995 = vperm.slane %v2983, 1
    %v3006 = vmul.f32 %v2903, %v2986
    %v3007 = vmul.f32 %v2904, %v2987
    %v3008 = vmul.f32 %v2905, %v2988
    %v3009 = vmul.f32 %v2906, %v2989
    %v3010 = vmul.f32 %v2907, %v2990
    %v3011 = vmul.f32 %v2908, %v2991
    %v3012 = vmul.f32 %v2909, %v2992
    %v3013 = vmul.f32 %v2910, %v2993
    %v3014 = vmul.f32 %v2911, %v2994
    %v3015 = vmul.f32 %v2912, %v2995
    %v3016 = vperm.slane %v26, 7
    %v3018 = vrot.slane %v3016, 1
    %v3019 = vrot.slane %v3016, 2
    %v3020 = vrot.slane %v3016, 3
    %v3021 = vrot.slane %v3016, 4
    %v3022 = vrot.slane %v3016, 5
    %v3023 = vrot.slane %v3016, 6
    %v3024 = vrot.slane %v3016, 7
    %v3032 = vmul.f32 %v3006, %v3016
    %v3033 = vmul.f32 %v3007, %v3018
    %v3034 = vmul.f32 %v3008, %v3019
    %v3035 = vmul.f32 %v3009, %v3020
    %v3036 = vmul.f32 %v3010, %v3021
    %v3037 = vmul.f32 %v3011, %v3022
    %v3038 = vmul.f32 %v3012, %v3023
    %v3039 = vmul.f32 %v3013, %v3024
    %v3040 = vmul.f32 %v3014, %v3016
    %v3041 = vmul.f32 %v3015, %v3018
    %v3042 = vperm.slane %v28, 0
    %v3044 = vrot.slane %v3042, 1
    %v3045 = vrot.slane %v3042, 2
    %v3046 = vrot.slane %v3042, 3
    %v3047 = vrot.slane %v3042, 4
    %v3048 = vrot.slane %v3042, 5
    %v3049 = vrot.slane %v3042, 6
    %v3050 = vrot.slane %v3042, 7
    %v3058 = vadd.f32 %v3032, %v3042
    %v3059 = vadd.f32 %v3033, %v3044
    %v3060 = vadd.f32 %v3034, %v3045
    %v3061 = vadd.f32 %v3035, %v3046
    %v3062 = vadd.f32 %v3036, %v3047
    %v3063 = vadd.f32 %v3037, %v3048
    %v3064 = vadd.f32 %v3038, %v3049
    %v3065 = vadd.f32 %v3039, %v3050
    %v3066 = vadd.f32 %v3040, %v3042
    %v3067 = vadd.f32 %v3041, %v3044
    %3078 = vst [vmem:[#allocation1] ss:$9 sm:$0xff] %v3058
    %s3079 = scalar_lea.vmem [#allocation1], 1
    %3080 = vst [vmem:[%s3079] ss:$9 sm:$0xff] %v3059
    %s3081 = scalar_lea.vmem [#allocation1], 2
    %3082 = vst [vmem:[%s3081] ss:$9 sm:$0xff] %v3060
    %s3083 = scalar_lea.vmem [#allocation1], 3
    %3084 = vst [vmem:[%s3083] ss:$9 sm:$0xff] %v3061
    %s3085 = scalar_lea.vmem [#allocation1], 4
    %3086 = vst [vmem:[%s3085] ss:$9 sm:$0xff] %v3062
    %s3087 = scalar_lea.vmem [#allocation1], 5
    %3088 = vst [vmem:[%s3087] ss:$9 sm:$0xff] %v3063
    %s3089 = scalar_lea.vmem [#allocation1], 6
    %3090 = vst [vmem:[%s3089] ss:$9 sm:$0xff] %v3064
    %s3091 = scalar_lea.vmem [#allocation1], 7
    %3092 = vst [vmem:[%s3091] ss:$9 sm:$0xff] %v3065
    %v3093 = vld [vmem:[#allocation1] sm:$0xff]
    %3094 = vst [vmem:[#allocation1] ss:$9 sm:$0xff] %v3066
    %3095 = vst [vmem:[%s3079] ss:$9 sm:$0xff] %v3067
    %v3096 = vld [vmem:[#allocation1] sm:$0xff]
    %v3099 = vpack.c.bf16 %v3096, %v3093
    %v3100 = vperm.slane %v28, 1
    %v3101 = vperm.slane %v29, 1
    %v3110 = vunpack.c.l.b16 %v2793
    %v3111 = vunpack.c.h.b16 %v2793
    %v3112 = vunpack.c.l.b16 %v2795
    %v3113 = vunpack.c.h.b16 %v2795
    %v3114 = vunpack.c.l.b16 %v2797
    %v3115 = vunpack.c.h.b16 %v2797
    %v3116 = vunpack.c.l.b16 %v2799
    %v3117 = vunpack.c.h.b16 %v2799
    %v3118 = vunpack.c.l.b16 %v2801
    %v3119 = vunpack.c.h.b16 %v2801
    %v3120 = vunpack.c.l.b16 %v2803
    %v3121 = vunpack.c.h.b16 %v2803
    %v3122 = vunpack.c.l.b16 %v2805
    %v3123 = vunpack.c.h.b16 %v2805
    %v3124 = vunpack.c.l.b16 %v2807
    %v3125 = vunpack.c.h.b16 %v2807
    %v3126 = vpack.c.b16 %v3112, %v3110
    %v3127 = vpack.c.b16 %v3113, %v3111
    %v3128 = vpack.c.b16 %v3116, %v3114
    %v3129 = vpack.c.b16 %v3117, %v3115
    %v3130 = vpack.c.b16 %v3120, %v3118
    %v3131 = vpack.c.b16 %v3121, %v3119
    %v3132 = vpack.c.b16 %v3124, %v3122
    %v3133 = vpack.c.b16 %v3125, %v3123
    %v3143 = vsel %vm643, %v3099, 0
    %3145 = vmatpush.bf16.msra.mxu0 0
    %3146 = vmatpush.bf16.msra.mxu0 0
    %3147 = vmatpush.bf16.msra.mxu0 0
    %3148 = vmatpush.bf16.msra.mxu0 0
    %3149 = vmatpush.bf16.msra.mxu0 %v3132
    %3150 = vmatpush.bf16.msra.mxu0 %v3130
    %3151 = vmatpush.bf16.msra.mxu0 %v3128
    %3152 = vmatpush.bf16.msra.mxu0 %v3126
    %3153 = vmatmul.bf16.gmra.mxu0 %v3143
    %v3154 = vpop.f32.mrf.mxu0
    %v3155 = vadd.f32 %v3100, %v3154
    %v3156 = vpop.f32.mrf.mxu0
    %v3157 = vadd.f32 %v3100, %v3156
    %3158 = vdwg.mxu0
    %3159 = vmatpush.bf16.msra.mxu0 0
    %3160 = vmatpush.bf16.msra.mxu0 0
    %3161 = vmatpush.bf16.msra.mxu0 0
    %3162 = vmatpush.bf16.msra.mxu0 0
    %3163 = vmatpush.bf16.msra.mxu0 %v3133
    %3164 = vmatpush.bf16.msra.mxu0 %v3131
    %3165 = vmatpush.bf16.msra.mxu0 %v3129
    %3166 = vmatpush.bf16.msra.mxu0 %v3127
    %3167 = vmatmul.bf16.gmra.mxu0 %v3143
    %v3168 = vpop.f32.mrf.mxu0
    %v3169 = vadd.f32 %v3101, %v3168
    %v3170 = vpop.f32.mrf.mxu0
    %v3171 = vadd.f32 %v3101, %v3170
    %3172 = vdwg.mxu0
    %v3177 = vrot.slane %v3169, 7
    %v3178 = vrot.slane %v3171, 7
    %v3179 = vsel %vm549, %v3155, %v3177
    %v3180 = vsel %vm959, %v3155, %v3177
    %v3181 = vrot.slane %v3180, 1
    %v3182 = vsel %vm962, %v3155, %v3177
    %v3183 = vrot.slane %v3182, 2
    %v3184 = vsel %vm965, %v3155, %v3177
    %v3185 = vrot.slane %v3184, 3
    %v3186 = vsel %vm968, %v3155, %v3177
    %v3187 = vrot.slane %v3186, 4
    %v3188 = vsel %vm971, %v3155, %v3177
    %v3189 = vrot.slane %v3188, 5
    %v3190 = vsel %vm974, %v3155, %v3177
    %v3191 = vrot.slane %v3190, 6
    %v3192 = vsel %vm977, %v3177, %v3155
    %v3193 = vrot.slane %v3192, 7
    %v3194 = vsel %vm549, %v3157, %v3178
    %v3195 = vsel %vm959, %v3157, %v3178
    %v3196 = vrot.slane %v3195, 1
    %3197 = vst [vmem:[#allocation1] ss:$9 sm:$0xff] %v3179
    %s3198 = scalar_lea.vmem [#allocation1], 1
    %3199 = vst [vmem:[%s3198] ss:$9 sm:$0xff] %v3181
    %s3200 = scalar_lea.vmem [#allocation1], 2
    %3201 = vst [vmem:[%s3200] ss:$9 sm:$0xff] %v3183
    %s3202 = scalar_lea.vmem [#allocation1], 3
    %3203 = vst [vmem:[%s3202] ss:$9 sm:$0xff] %v3185
    %s3204 = scalar_lea.vmem [#allocation1], 4
    %3205 = vst [vmem:[%s3204] ss:$9 sm:$0xff] %v3187
    %v3206 = vld [vmem:[#allocation1] sm:$0xff]
    %3207 = vst [vmem:[#allocation1] ss:$9 sm:$0xff] %v3189
    %3208 = vst [vmem:[%s3198] ss:$9 sm:$0xff] %v3191
    %3209 = vst [vmem:[%s3200] ss:$9 sm:$0xff] %v3193
    %3210 = vst [vmem:[%s3202] ss:$9 sm:$0xff] %v3194
    %3211 = vst [vmem:[%s3204] ss:$9 sm:$0xff] %v3196
    %v3212 = vld [vmem:[#allocation1] sm:$0xff]
    %v3215 = vpack.c.bf16 %v3206, %v3206
    %v3216 = vpack.c.bf16 %v3212, %v3212
    %3217 = vst [vmem:[#allocation1] ss:$9 sm:$0xff] %v3179
    %s3218 = scalar_lea.vmem [#allocation1], 1
    %3219 = vst [vmem:[%s3218] ss:$9 sm:$0xff] %v3181
    %s3220 = scalar_lea.vmem [#allocation1], 2
    %3221 = vst [vmem:[%s3220] ss:$9 sm:$0xff] %v3183
    %s3222 = scalar_lea.vmem [#allocation1], 3
    %3223 = vst [vmem:[%s3222] ss:$9 sm:$0xff] %v3185
    %s3224 = scalar_lea.vmem [#allocation1], 4
    %3225 = vst [vmem:[%s3224] ss:$9 sm:$0xff] %v3187
    %v3226 = vld [vmem:[#allocation1] sm:$0xff]
    %3227 = vst [vmem:[#allocation1] ss:$9 sm:$0xff] %v3189
    %3228 = vst [vmem:[%s3218] ss:$9 sm:$0xff] %v3191
    %3229 = vst [vmem:[%s3220] ss:$9 sm:$0xff] %v3193
    %3230 = vst [vmem:[%s3222] ss:$9 sm:$0xff] %v3194
    %3231 = vst [vmem:[%s3224] ss:$9 sm:$0xff] %v3196
    %v3232 = vld [vmem:[#allocation1] sm:$0xff]
    %v3235 = vpack.c.bf16 %v3226, %v3226
    %v3236 = vpack.c.bf16 %v3232, %v3232
    %3237 = vst [vmem:[#allocation1] ss:$9 sm:$0xff] %v3179
    %s3238 = scalar_lea.vmem [#allocation1], 1
    %3239 = vst [vmem:[%s3238] ss:$9 sm:$0xff] %v3181
    %s3240 = scalar_lea.vmem [#allocation1], 2
    %3241 = vst [vmem:[%s3240] ss:$9 sm:$0xff] %v3183
    %s3242 = scalar_lea.vmem [#allocation1], 3
    %3243 = vst [vmem:[%s3242] ss:$9 sm:$0xff] %v3185
    %s3244 = scalar_lea.vmem [#allocation1], 4
    %3245 = vst [vmem:[%s3244] ss:$9 sm:$0xff] %v3187
    %v3246 = vld [vmem:[#allocation1 + $0x9] sm:$0xff]
    %3247 = vst [vmem:[#allocation1] ss:$9 sm:$0xff] %v3189
    %3248 = vst [vmem:[%s3238] ss:$9 sm:$0xff] %v3191
    %3249 = vst [vmem:[%s3240] ss:$9 sm:$0xff] %v3193
    %3250 = vst [vmem:[%s3242] ss:$9 sm:$0xff] %v3194
    %3251 = vst [vmem:[%s3244] ss:$9 sm:$0xff] %v3196
    %v3252 = vld [vmem:[#allocation1 + $0x9] sm:$0xff]
    %v3255 = vpack.c.bf16 %v3246, %v3246
    %v3256 = vpack.c.bf16 %v3252, %v3252
    %v3258 = vunpack.c.l.b16 %v3235
    %v3259 = vpack.c.b16 %v3258, %v3258
    %3260 = vrot.lane.b32.xlu0 %v3259, 64
    %v3261 = vpop.permute.xlu0 %3260
    %v3263 = vsel %vm1048, %v3215, 0
    %v3266 = vsel %vm1048, %v3261, 0
    %3268 = vmatpush.bf16.xpose.msra.mxu0 0
    %3269 = vmatpush.bf16.xpose.msra.mxu0 0
    %3270 = vmatpush.bf16.xpose.msra.mxu0 0
    %3271 = vmatpush.bf16.xpose.msra.mxu0 0
    %3272 = vmatpush.bf16.xpose.msra.mxu0 0
    %3273 = vmatpush.bf16.xpose.msra.mxu0 0
    %3274 = vmatpush.bf16.xpose.msra.mxu0 0
    %3275 = vmatpush.bf16.xpose.msra.mxu0 %v3266
    %3276 = vmatmul.bf16.gmra.mxu0 %v3263
    %v3277 = vpop.f32.mrf.mxu0
    %v3278 = vadd.f32 0.0, %v3277
    %v3279 = vpop.f32.mrf.mxu0
    %3280 = vdwg.mxu0
    %v3282 = vunpack.c.l.b16 %v3236
    %v3283 = vpack.c.b16 %v3282, %v3282
    %3284 = vrot.lane.b32.xlu0 %v3283, 64
    %v3285 = vpop.permute.xlu0 %3284
    %v3287 = vsel %vm1048, %v3216, 0
    %v3290 = vsel %vm1048, %v3285, 0
    %3292 = vmatpush.bf16.xpose.msra.mxu0 0
    %3293 = vmatpush.bf16.xpose.msra.mxu0 0
    %3294 = vmatpush.bf16.xpose.msra.mxu0 0
    %3295 = vmatpush.bf16.xpose.msra.mxu0 0
    %3296 = vmatpush.bf16.xpose.msra.mxu0 0
    %3297 = vmatpush.bf16.xpose.msra.mxu0 0
    %3298 = vmatpush.bf16.xpose.msra.mxu0 0
    %3299 = vmatpush.bf16.xpose.msra.mxu0 %v3290
    %3300 = vmatmul.bf16.gmra.mxu0 %v3287
    %v3301 = vpop.f32.mrf.mxu0
    %v3302 = vadd.f32 0.0, %v3301
    %v3303 = vpop.f32.mrf.mxu0
    %3304 = vdwg.mxu0
    %v3305 = vmul.f32 %v3278, 0.25
    %v3306 = vmul.f32 %v3302, 0.25
    %v3307 = vsel %vm1094, %v3305, -inf
    %3308 = vmax.xlane.f32.xlu0 %v3307
    %v3309 = vpop.xlane.xlu0 %3308
    %v3310 = vsel %vm1094, %v3306, -inf
    %3311 = vmax.xlane.f32.xlu0 %v3310
    %v3312 = vpop.xlane.xlu0 %3311
    %v3313 = vsub.f32 %v3305, %v3309
    %v3314 = vsub.f32 %v3306, %v3312
    %v3315 = vmul.f32 %v3313, 1.442695
    %v3316 = vpow.pop %v3315
    %v3317 = vmul.f32 %v3314, 1.442695
    %v3318 = vpow.pop %v3317
    %v3319 = vsel %vm1094, %v3316, 0.0
    %3320 = vadd.xlane.f32.xlu0 %v3319
    %v3321 = vpop.xlane.xlu0 %3320
    %v3322 = vsel %vm1094, %v3318, 0.0
    %3323 = vadd.xlane.f32.xlu0 %v3322
    %v3324 = vpop.xlane.xlu0 %3323
    %v3325 = vrcp.pop %v3321
    %v3326 = vrcp.pop %v3324
    %v3327 = vmul.f32 %v3316, %v3325
    %v3328 = vmul.f32 %v3318, %v3326
    %v3329 = vpack.c.bf16 %v3327, %v3327
    %v3330 = vpack.c.bf16 %v3328, %v3328
    %v3332 = vsel %vm1119, %v3329, 0
    %v3335 = vand.u32 %v3255, %v1126
    %3337 = vmatpush.bf16.msra.mxu0 0
    %3338 = vmatpush.bf16.msra.mxu0 0
    %3339 = vmatpush.bf16.msra.mxu0 0
    %3340 = vmatpush.bf16.msra.mxu0 0
    %3341 = vmatpush.bf16.msra.mxu0 0
    %3342 = vmatpush.bf16.msra.mxu0 0
    %3343 = vmatpush.bf16.msra.mxu0 0
    %3344 = vmatpush.bf16.msra.mxu0 %v3335
    %3345 = vmatmul.bf16.gmra.mxu0 %v3332
    %v3346 = vpop.f32.mrf.mxu0
    %v3347 = vadd.f32 0.0, %v3346
    %v3348 = vpop.f32.mrf.mxu0
    %3349 = vdwg.mxu0
    %v3351 = vsel %vm1119, %v3330, 0
    %v3354 = vand.u32 %v3256, %v1126
    %3356 = vmatpush.bf16.msra.mxu0 0
    %3357 = vmatpush.bf16.msra.mxu0 0
    %3358 = vmatpush.bf16.msra.mxu0 0
    %3359 = vmatpush.bf16.msra.mxu0 0
    %3360 = vmatpush.bf16.msra.mxu0 0
    %3361 = vmatpush.bf16.msra.mxu0 0
    %3362 = vmatpush.bf16.msra.mxu0 0
    %3363 = vmatpush.bf16.msra.mxu0 %v3354
    %3364 = vmatmul.bf16.gmra.mxu0 %v3351
    %v3365 = vpop.f32.mrf.mxu0
    %v3366 = vadd.f32 0.0, %v3365
    %v3367 = vpop.f32.mrf.mxu0
    %3368 = vdwg.mxu0
    %v3369 = vpack.c.bf16 %v3347, %v3347
    %v3370 = vpack.c.bf16 %v3366, %v3366
    %3371 = vst [vmem:[#allocation1] ss:$9 sm:$0xff] %v3179
    %s3372 = scalar_lea.vmem [#allocation1], 1
    %3373 = vst [vmem:[%s3372] ss:$9 sm:$0xff] %v3181
    %s3374 = scalar_lea.vmem [#allocation1], 2
    %3375 = vst [vmem:[%s3374] ss:$9 sm:$0xff] %v3183
    %s3376 = scalar_lea.vmem [#allocation1], 3
    %3377 = vst [vmem:[%s3376] ss:$9 sm:$0xff] %v3185
    %s3378 = scalar_lea.vmem [#allocation1], 4
    %3379 = vst [vmem:[%s3378] ss:$9 sm:$0xff] %v3187
    %v3380 = vld [vmem:[#allocation1] sm:$0xff]
    %3381 = vst [vmem:[#allocation1] ss:$9 sm:$0xff] %v3189
    %3382 = vst [vmem:[%s3372] ss:$9 sm:$0xff] %v3191
    %3383 = vst [vmem:[%s3374] ss:$9 sm:$0xff] %v3193
    %3384 = vst [vmem:[%s3376] ss:$9 sm:$0xff] %v3194
    %3385 = vst [vmem:[%s3378] ss:$9 sm:$0xff] %v3196
    %v3386 = vld [vmem:[#allocation1] sm:$0xff]
    %v3389 = vpack.c.bf16 %v3380, %v3380
    %v3390 = vpack.c.bf16 %v3386, %v3386
    %3391 = vst [vmem:[#allocation1] ss:$9 sm:$0xff] %v3179
    %s3392 = scalar_lea.vmem [#allocation1], 1
    %3393 = vst [vmem:[%s3392] ss:$9 sm:$0xff] %v3181
    %s3394 = scalar_lea.vmem [#allocation1], 2
    %3395 = vst [vmem:[%s3394] ss:$9 sm:$0xff] %v3183
    %s3396 = scalar_lea.vmem [#allocation1], 3
    %3397 = vst [vmem:[%s3396] ss:$9 sm:$0xff] %v3185
    %s3398 = scalar_lea.vmem [#allocation1], 4
    %3399 = vst [vmem:[%s3398] ss:$9 sm:$0xff] %v3187
    %v3400 = vld [vmem:[#allocation1] sm:$0xff]
    %3401 = vst [vmem:[#allocation1] ss:$9 sm:$0xff] %v3189
    %3402 = vst [vmem:[%s3392] ss:$9 sm:$0xff] %v3191
    %3403 = vst [vmem:[%s3394] ss:$9 sm:$0xff] %v3193
    %3404 = vst [vmem:[%s3396] ss:$9 sm:$0xff] %v3194
    %3405 = vst [vmem:[%s3398] ss:$9 sm:$0xff] %v3196
    %v3406 = vld [vmem:[#allocation1] sm:$0xff]
    %v3409 = vpack.c.bf16 %v3400, %v3400
    %v3410 = vpack.c.bf16 %v3406, %v3406
    %3411 = vst [vmem:[#allocation1] ss:$9 sm:$0xff] %v3179
    %s3412 = scalar_lea.vmem [#allocation1], 1
    %3413 = vst [vmem:[%s3412] ss:$9 sm:$0xff] %v3181
    %s3414 = scalar_lea.vmem [#allocation1], 2
    %3415 = vst [vmem:[%s3414] ss:$9 sm:$0xff] %v3183
    %s3416 = scalar_lea.vmem [#allocation1], 3
    %3417 = vst [vmem:[%s3416] ss:$9 sm:$0xff] %v3185
    %s3418 = scalar_lea.vmem [#allocation1], 4
    %3419 = vst [vmem:[%s3418] ss:$9 sm:$0xff] %v3187
    %v3420 = vld [vmem:[#allocation1 + $0x9] sm:$0xff]
    %3421 = vst [vmem:[#allocation1] ss:$9 sm:$0xff] %v3189
    %3422 = vst [vmem:[%s3412] ss:$9 sm:$0xff] %v3191
    %3423 = vst [vmem:[%s3414] ss:$9 sm:$0xff] %v3193
    %3424 = vst [vmem:[%s3416] ss:$9 sm:$0xff] %v3194
    %3425 = vst [vmem:[%s3418] ss:$9 sm:$0xff] %v3196
    %v3426 = vld [vmem:[#allocation1 + $0x9] sm:$0xff]
    %3427 = vrot.lane.b32.xlu0 %v3420, 112
    %v3428 = vpop.permute.xlu0 %3427
    %3429 = vrot.lane.b32.xlu0 %v3426, 112
    %v3430 = vpop.permute.xlu0 %3429
    %v3433 = vpack.c.bf16 %v3428, %v3428
    %v3434 = vpack.c.bf16 %v3430, %v3430
    %v3436 = vunpack.c.l.b16 %v3389
    %v3437 = vpack.c.b16 %v3436, %v3436
    %3438 = vrot.lane.b32.xlu0 %v3437, 112
    %v3439 = vpop.permute.xlu0 %3438
    %v3441 = vunpack.c.l.b16 %v3409
    %v3442 = vpack.c.b16 %v3441, %v3441
    %3443 = vrot.lane.b32.xlu0 %v3442, 48
    %v3444 = vpop.permute.xlu0 %3443
    %v3446 = vsel %vm1048, %v3439, 0
    %v3449 = vsel %vm1048, %v3444, 0
    %3451 = vmatpush.bf16.xpose.msra.mxu0 0
    %3452 = vmatpush.bf16.xpose.msra.mxu0 0
    %3453 = vmatpush.bf16.xpose.msra.mxu0 0
    %3454 = vmatpush.bf16.xpose.msra.mxu0 0
    %3455 = vmatpush.bf16.xpose.msra.mxu0 0
    %3456 = vmatpush.bf16.xpose.msra.mxu0 0
    %3457 = vmatpush.bf16.xpose.msra.mxu0 0
    %3458 = vmatpush.bf16.xpose.msra.mxu0 %v3449
    %3459 = vmatmul.bf16.gmra.mxu0 %v3446
    %v3460 = vpop.f32.mrf.mxu0
    %v3461 = vadd.f32 0.0, %v3460
    %v3462 = vpop.f32.mrf.mxu0
    %3463 = vdwg.mxu0
    %v3465 = vunpack.c.l.b16 %v3390
    %v3466 = vpack.c.b16 %v3465, %v3465
    %3467 = vrot.lane.b32.xlu0 %v3466, 112
    %v3468 = vpop.permute.xlu0 %3467
    %v3470 = vunpack.c.l.b16 %v3410
    %v3471 = vpack.c.b16 %v3470, %v3470
    %3472 = vrot.lane.b32.xlu0 %v3471, 48
    %v3473 = vpop.permute.xlu0 %3472
    %v3475 = vsel %vm1048, %v3468, 0
    %v3478 = vsel %vm1048, %v3473, 0
    %3480 = vmatpush.bf16.xpose.msra.mxu0 0
    %3481 = vmatpush.bf16.xpose.msra.mxu0 0
    %3482 = vmatpush.bf16.xpose.msra.mxu0 0
    %3483 = vmatpush.bf16.xpose.msra.mxu0 0
    %3484 = vmatpush.bf16.xpose.msra.mxu0 0
    %3485 = vmatpush.bf16.xpose.msra.mxu0 0
    %3486 = vmatpush.bf16.xpose.msra.mxu0 0
    %3487 = vmatpush.bf16.xpose.msra.mxu0 %v3478
    %3488 = vmatmul.bf16.gmra.mxu0 %v3475
    %v3489 = vpop.f32.mrf.mxu0
    %v3490 = vadd.f32 0.0, %v3489
    %v3491 = vpop.f32.mrf.mxu0
    %3492 = vdwg.mxu0
    %v3493 = vmul.f32 %v3461, 0.25
    %v3494 = vmul.f32 %v3490, 0.25
    %v3495 = vsel %vm1094, %v3493, -inf
    %3496 = vmax.xlane.f32.xlu0 %v3495
    %v3497 = vpop.xlane.xlu0 %3496
    %v3498 = vsel %vm1094, %v3494, -inf
    %3499 = vmax.xlane.f32.xlu0 %v3498
    %v3500 = vpop.xlane.xlu0 %3499
    %v3501 = vsub.f32 %v3493, %v3497
    %v3502 = vsub.f32 %v3494, %v3500
    %v3503 = vmul.f32 %v3501, 1.442695
    %v3504 = vpow.pop %v3503
    %v3505 = vmul.f32 %v3502, 1.442695
    %v3506 = vpow.pop %v3505
    %v3507 = vsel %vm1094, %v3504, 0.0
    %3508 = vadd.xlane.f32.xlu0 %v3507
    %v3509 = vpop.xlane.xlu0 %3508
    %v3510 = vsel %vm1094, %v3506, 0.0
    %3511 = vadd.xlane.f32.xlu0 %v3510
    %v3512 = vpop.xlane.xlu0 %3511
    %v3513 = vrcp.pop %v3509
    %v3514 = vrcp.pop %v3512
    %v3515 = vmul.f32 %v3504, %v3513
    %v3516 = vmul.f32 %v3506, %v3514
    %v3517 = vpack.c.bf16 %v3515, %v3515
    %v3518 = vpack.c.bf16 %v3516, %v3516
    %v3520 = vsel %vm1119, %v3517, 0
    %v3523 = vand.u32 %v3433, %v1126
    %3525 = vmatpush.bf16.msra.mxu0 0
    %3526 = vmatpush.bf16.msra.mxu0 0
    %3527 = vmatpush.bf16.msra.mxu0 0
    %3528 = vmatpush.bf16.msra.mxu0 0
    %3529 = vmatpush.bf16.msra.mxu0 0
    %3530 = vmatpush.bf16.msra.mxu0 0
    %3531 = vmatpush.bf16.msra.mxu0 0
    %3532 = vmatpush.bf16.msra.mxu0 %v3523
    %3533 = vmatmul.bf16.gmra.mxu0 %v3520
    %v3534 = vpop.f32.mrf.mxu0
    %v3535 = vadd.f32 0.0, %v3534
    %v3536 = vpop.f32.mrf.mxu0
    %3537 = vdwg.mxu0
    %v3539 = vsel %vm1119, %v3518, 0
    %v3542 = vand.u32 %v3434, %v1126
    %3544 = vmatpush.bf16.msra.mxu0 0
    %3545 = vmatpush.bf16.msra.mxu0 0
    %3546 = vmatpush.bf16.msra.mxu0 0
    %3547 = vmatpush.bf16.msra.mxu0 0
    %3548 = vmatpush.bf16.msra.mxu0 0
    %3549 = vmatpush.bf16.msra.mxu0 0
    %3550 = vmatpush.bf16.msra.mxu0 0
    %3551 = vmatpush.bf16.msra.mxu0 %v3542
    %3552 = vmatmul.bf16.gmra.mxu0 %v3539
    %v3553 = vpop.f32.mrf.mxu0
    %v3554 = vadd.f32 0.0, %v3553
    %v3555 = vpop.f32.mrf.mxu0
    %3556 = vdwg.mxu0
    %v3557 = vpack.c.bf16 %v3535, %v3535
    %v3558 = vpack.c.bf16 %v3554, %v3554
    %v3561 = vrot.slane %v3557, 3
    %v3562 = vrot.slane %v3558, 3
    %v3565 = vsel %vm549, %v3557, %v3561
    %v3567 = vsel %vm959, %v3557, %v3561
    %v3569 = vrot.slane %v3567, 1
    %v3570 = vsel %vm962, %v3557, %v3561
    %v3572 = vrot.slane %v3570, 2
    %v3575 = vsel %vm549, %v3558, %v3562
    %v3577 = vsel %vm959, %v3558, %v3562
    %v3579 = vrot.slane %v3577, 1
    %v3580 = vsel %vm962, %v3558, %v3562
    %v3582 = vrot.slane %v3580, 2
    %v3583 = vunpack.i.l.s16 %v3565
    %v3584 = vunpack.i.h.s16 %v3565
    %v3585 = vunpack.i.l.s16 %v3569
    %v3586 = vunpack.i.h.s16 %v3569
    %v3587 = vunpack.i.l.s16 %v3572
    %v3588 = vunpack.i.l.s16 %v3575
    %v3589 = vunpack.i.h.s16 %v3575
    %v3590 = vunpack.i.l.s16 %v3579
    %v3591 = vunpack.i.h.s16 %v3579
    %v3592 = vunpack.i.l.s16 %v3582
    %v3593 = vpack.i.b16 %v3584, %v3583
    %v3594 = vpack.i.b16 %v3586, %v3585
    %v3595 = vpack.i.b16 %v3588, %v3587
    %v3596 = vpack.i.b16 %v3590, %v3589
    %v3597 = vpack.i.b16 %v3592, %v3591
    %3599 = vst [vmem:[#allocation1] ss:$9 sm:$0xff] %v3593
    %s3601 = scalar_lea.vmem [#allocation1], 1
    %3602 = vst [vmem:[%s3601] ss:$9 sm:$0xff] %v3594
    %s3604 = scalar_lea.vmem [#allocation1], 2
    %3605 = vst [vmem:[%s3604] ss:$9 sm:$0xff] %v3595
    %s3607 = scalar_lea.vmem [#allocation1], 3
    %3608 = vst [vmem:[%s3607] ss:$9 sm:$0xff] %v3596
    %s3610 = scalar_lea.vmem [#allocation1], 4
    %3611 = vst [vmem:[%s3610] ss:$9 sm:$0xff] %v3597
    %v3612 = vld [vmem:[#allocation1] sm:$0xff]
    %3613 = vrot.lane.b32.xlu0 %v3129, 64
    %v3614 = vpop.permute.xlu0 %3613
    %v3616 = vsel %vm1048, %v3612, 0
    %3618 = vmatpush.bf16.msra.mxu0 0
    %3619 = vmatpush.bf16.msra.mxu0 0
    %3620 = vmatpush.bf16.msra.mxu0 0
    %3621 = vmatpush.bf16.msra.mxu0 0
    %3622 = vmatpush.bf16.msra.mxu0 0
    %3623 = vmatpush.bf16.msra.mxu0 0
    %3624 = vmatpush.bf16.msra.mxu0 0
    %3625 = vmatpush.bf16.msra.mxu0 %v3614
    %3626 = vmatmul.bf16.gmra.mxu0 %v3616
    %v3627 = vpop.f32.mrf.mxu0
    %v3628 = vadd.f32 0.0, %v3627
    %v3629 = vpop.f32.mrf.mxu0
    %v3630 = vadd.f32 0.0, %v3629
    %3631 = vdwg.mxu0
    %v3634 = vrot.slane %v3369, 3
    %v3635 = vrot.slane %v3370, 3
    %v3638 = vsel %vm549, %v3369, %v3634
    %v3640 = vsel %vm959, %v3369, %v3634
    %v3642 = vrot.slane %v3640, 1
    %v3643 = vsel %vm962, %v3369, %v3634
    %v3645 = vrot.slane %v3643, 2
    %v3648 = vsel %vm549, %v3370, %v3635
    %v3650 = vsel %vm959, %v3370, %v3635
    %v3652 = vrot.slane %v3650, 1
    %v3653 = vsel %vm962, %v3370, %v3635
    %v3655 = vrot.slane %v3653, 2
    %v3656 = vunpack.i.l.s16 %v3638
    %v3657 = vunpack.i.h.s16 %v3638
    %v3658 = vunpack.i.l.s16 %v3642
    %v3659 = vunpack.i.h.s16 %v3642
    %v3660 = vunpack.i.l.s16 %v3645
    %v3661 = vunpack.i.l.s16 %v3648
    %v3662 = vunpack.i.h.s16 %v3648
    %v3663 = vunpack.i.l.s16 %v3652
    %v3664 = vunpack.i.h.s16 %v3652
    %v3665 = vunpack.i.l.s16 %v3655
    %v3666 = vpack.i.b16 %v3657, %v3656
    %v3667 = vpack.i.b16 %v3659, %v3658
    %v3668 = vpack.i.b16 %v3661, %v3660
    %v3669 = vpack.i.b16 %v3663, %v3662
    %v3670 = vpack.i.b16 %v3665, %v3664
    %3672 = vst [vmem:[#allocation1] ss:$9 sm:$0xff] %v3666
    %s3674 = scalar_lea.vmem [#allocation1], 1
    %3675 = vst [vmem:[%s3674] ss:$9 sm:$0xff] %v3667
    %s3677 = scalar_lea.vmem [#allocation1], 2
    %3678 = vst [vmem:[%s3677] ss:$9 sm:$0xff] %v3668
    %s3680 = scalar_lea.vmem [#allocation1], 3
    %3681 = vst [vmem:[%s3680] ss:$9 sm:$0xff] %v3669
    %s3683 = scalar_lea.vmem [#allocation1], 4
    %3684 = vst [vmem:[%s3683] ss:$9 sm:$0xff] %v3670
    %v3685 = vld [vmem:[#allocation1] sm:$0xff]
    %3686 = vrot.lane.b32.xlu0 %v3127, 64
    %v3687 = vpop.permute.xlu0 %3686
    %v3689 = vsel %vm1048, %v3685, 0
    %3691 = vmatpush.bf16.msra.mxu0 0
    %3692 = vmatpush.bf16.msra.mxu0 0
    %3693 = vmatpush.bf16.msra.mxu0 0
    %3694 = vmatpush.bf16.msra.mxu0 0
    %3695 = vmatpush.bf16.msra.mxu0 0
    %3696 = vmatpush.bf16.msra.mxu0 0
    %3697 = vmatpush.bf16.msra.mxu0 0
    %3698 = vmatpush.bf16.msra.mxu0 %v3687
    %3699 = vmatmul.bf16.gmra.mxu0 %v3689
    %v3700 = vpop.f32.mrf.mxu0
    %v3701 = vadd.f32 %v3628, %v3700
    %v3702 = vpop.f32.mrf.mxu0
    %v3703 = vadd.f32 %v3630, %v3702
    %3704 = vdwg.mxu0
    %v3707 = vrot.slane %v3701, 1
    %v3708 = vrot.slane %v3701, 2
    %v3709 = vrot.slane %v3701, 3
    %v3710 = vrot.slane %v3701, 4
    %v3711 = vrot.slane %v3701, 5
    %v3712 = vrot.slane %v3701, 6
    %v3713 = vrot.slane %v3701, 7
    %v3714 = vrot.slane %v3703, 1
    %3723 = vst [vmem:[#allocation1] ss:$9 sm:$0xff] %v3179
    %s3724 = scalar_lea.vmem [#allocation1], 1
    %3725 = vst [vmem:[%s3724] ss:$9 sm:$0xff] %v3181
    %s3726 = scalar_lea.vmem [#allocation1], 2
    %3727 = vst [vmem:[%s3726] ss:$9 sm:$0xff] %v3183
    %s3728 = scalar_lea.vmem [#allocation1], 3
    %3729 = vst [vmem:[%s3728] ss:$9 sm:$0xff] %v3185
    %s3730 = scalar_lea.vmem [#allocation1], 4
    %3731 = vst [vmem:[%s3730] ss:$9 sm:$0xff] %v3187
    %v3732 = vld [vmem:[#allocation1] sm:$0xff]
    %3733 = vst [vmem:[#allocation1] ss:$9 sm:$0xff] %v3189
    %3734 = vst [vmem:[%s3724] ss:$9 sm:$0xff] %v3191
    %3735 = vst [vmem:[%s3726] ss:$9 sm:$0xff] %v3193
    %3736 = vst [vmem:[%s3728] ss:$9 sm:$0xff] %v3194
    %3737 = vst [vmem:[%s3730] ss:$9 sm:$0xff] %v3196
    %v3738 = vld [vmem:[#allocation1] sm:$0xff]
    %v3741 = vpack.c.bf16 %v3732, %v3732
    %v3742 = vpack.c.bf16 %v3738, %v3738
    %3743 = vst [vmem:[#allocation1] ss:$9 sm:$0xff] %v3179
    %s3744 = scalar_lea.vmem [#allocation1], 1
    %3745 = vst [vmem:[%s3744] ss:$9 sm:$0xff] %v3181
    %s3746 = scalar_lea.vmem [#allocation1], 2
    %3747 = vst [vmem:[%s3746] ss:$9 sm:$0xff] %v3183
    %s3748 = scalar_lea.vmem [#allocation1], 3
    %3749 = vst [vmem:[%s3748] ss:$9 sm:$0xff] %v3185
    %s3750 = scalar_lea.vmem [#allocation1], 4
    %3751 = vst [vmem:[%s3750] ss:$9 sm:$0xff] %v3187
    %v3752 = vld [vmem:[#allocation1] sm:$0xff]
    %3753 = vst [vmem:[#allocation1] ss:$9 sm:$0xff] %v3189
    %3754 = vst [vmem:[%s3744] ss:$9 sm:$0xff] %v3191
    %3755 = vst [vmem:[%s3746] ss:$9 sm:$0xff] %v3193
    %3756 = vst [vmem:[%s3748] ss:$9 sm:$0xff] %v3194
    %3757 = vst [vmem:[%s3750] ss:$9 sm:$0xff] %v3196
    %v3758 = vld [vmem:[#allocation1] sm:$0xff]
    %v3761 = vpack.c.bf16 %v3752, %v3752
    %v3762 = vpack.c.bf16 %v3758, %v3758
    %3763 = vst [vmem:[#allocation1] ss:$9 sm:$0xff] %v3179
    %s3764 = scalar_lea.vmem [#allocation1], 1
    %3765 = vst [vmem:[%s3764] ss:$9 sm:$0xff] %v3181
    %s3766 = scalar_lea.vmem [#allocation1], 2
    %3767 = vst [vmem:[%s3766] ss:$9 sm:$0xff] %v3183
    %s3768 = scalar_lea.vmem [#allocation1], 3
    %3769 = vst [vmem:[%s3768] ss:$9 sm:$0xff] %v3185
    %s3770 = scalar_lea.vmem [#allocation1], 4
    %3771 = vst [vmem:[%s3770] ss:$9 sm:$0xff] %v3187
    %v3772 = vld [vmem:[#allocation1 + $0x9] sm:$0xff]
    %3773 = vst [vmem:[#allocation1] ss:$9 sm:$0xff] %v3189
    %3774 = vst [vmem:[%s3764] ss:$9 sm:$0xff] %v3191
    %3775 = vst [vmem:[%s3766] ss:$9 sm:$0xff] %v3193
    %3776 = vst [vmem:[%s3768] ss:$9 sm:$0xff] %v3194
    %3777 = vst [vmem:[%s3770] ss:$9 sm:$0xff] %v3196
    %v3778 = vld [vmem:[#allocation1 + $0x9] sm:$0xff]
    %3779 = vrot.lane.b32.xlu0 %v3772, 96
    %v3780 = vpop.permute.xlu0 %3779
    %3781 = vrot.lane.b32.xlu0 %v3778, 96
    %v3782 = vpop.permute.xlu0 %3781
    %v3785 = vpack.c.bf16 %v3780, %v3780
    %v3786 = vpack.c.bf16 %v3782, %v3782
    %v3788 = vunpack.c.l.b16 %v3741
    %v3789 = vpack.c.b16 %v3788, %v3788
    %3790 = vrot.lane.b32.xlu0 %v3789, 96
    %v3791 = vpop.permute.xlu0 %3790
    %v3793 = vunpack.c.l.b16 %v3761
    %v3794 = vpack.c.b16 %v3793, %v3793
    %3795 = vrot.lane.b32.xlu0 %v3794, 32
    %v3796 = vpop.permute.xlu0 %3795
    %v3798 = vsel %vm1048, %v3791, 0
    %v3801 = vsel %vm1048, %v3796, 0
    %3803 = vmatpush.bf16.xpose.msra.mxu0 0
    %3804 = vmatpush.bf16.xpose.msra.mxu0 0
    %3805 = vmatpush.bf16.xpose.msra.mxu0 0
    %3806 = vmatpush.bf16.xpose.msra.mxu0 0
    %3807 = vmatpush.bf16.xpose.msra.mxu0 0
    %3808 = vmatpush.bf16.xpose.msra.mxu0 0
    %3809 = vmatpush.bf16.xpose.msra.mxu0 0
    %3810 = vmatpush.bf16.xpose.msra.mxu0 %v3801
    %3811 = vmatmul.bf16.gmra.mxu0 %v3798
    %v3812 = vpop.f32.mrf.mxu0
    %v3813 = vadd.f32 0.0, %v3812
    %v3814 = vpop.f32.mrf.mxu0
    %3815 = vdwg.mxu0
    %v3817 = vunpack.c.l.b16 %v3742
    %v3818 = vpack.c.b16 %v3817, %v3817
    %3819 = vrot.lane.b32.xlu0 %v3818, 96
    %v3820 = vpop.permute.xlu0 %3819
    %v3822 = vunpack.c.l.b16 %v3762
    %v3823 = vpack.c.b16 %v3822, %v3822
    %3824 = vrot.lane.b32.xlu0 %v3823, 32
    %v3825 = vpop.permute.xlu0 %3824
    %v3827 = vsel %vm1048, %v3820, 0
    %v3830 = vsel %vm1048, %v3825, 0
    %3832 = vmatpush.bf16.xpose.msra.mxu0 0
    %3833 = vmatpush.bf16.xpose.msra.mxu0 0
    %3834 = vmatpush.bf16.xpose.msra.mxu0 0
    %3835 = vmatpush.bf16.xpose.msra.mxu0 0
    %3836 = vmatpush.bf16.xpose.msra.mxu0 0
    %3837 = vmatpush.bf16.xpose.msra.mxu0 0
    %3838 = vmatpush.bf16.xpose.msra.mxu0 0
    %3839 = vmatpush.bf16.xpose.msra.mxu0 %v3830
    %3840 = vmatmul.bf16.gmra.mxu0 %v3827
    %v3841 = vpop.f32.mrf.mxu0
    %v3842 = vadd.f32 0.0, %v3841
    %v3843 = vpop.f32.mrf.mxu0
    %3844 = vdwg.mxu0
    %v3845 = vmul.f32 %v3813, 0.25
    %v3846 = vmul.f32 %v3842, 0.25
    %v3847 = vsel %vm1094, %v3845, -inf
    %3848 = vmax.xlane.f32.xlu0 %v3847
    %v3849 = vpop.xlane.xlu0 %3848
    %v3850 = vsel %vm1094, %v3846, -inf
    %3851 = vmax.xlane.f32.xlu0 %v3850
    %v3852 = vpop.xlane.xlu0 %3851
    %v3853 = vsub.f32 %v3845, %v3849
    %v3854 = vsub.f32 %v3846, %v3852
    %v3855 = vmul.f32 %v3853, 1.442695
    %v3856 = vpow.pop %v3855
    %v3857 = vmul.f32 %v3854, 1.442695
    %v3858 = vpow.pop %v3857
    %v3859 = vsel %vm1094, %v3856, 0.0
    %3860 = vadd.xlane.f32.xlu0 %v3859
    %v3861 = vpop.xlane.xlu0 %3860
    %v3862 = vsel %vm1094, %v3858, 0.0
    %3863 = vadd.xlane.f32.xlu0 %v3862
    %v3864 = vpop.xlane.xlu0 %3863
    %v3865 = vrcp.pop %v3861
    %v3866 = vrcp.pop %v3864
    %v3867 = vmul.f32 %v3856, %v3865
    %v3868 = vmul.f32 %v3858, %v3866
    %v3869 = vpack.c.bf16 %v3867, %v3867
    %v3870 = vpack.c.bf16 %v3868, %v3868
    %v3872 = vsel %vm1119, %v3869, 0
    %v3875 = vand.u32 %v3785, %v1126
    %3877 = vmatpush.bf16.msra.mxu0 0
    %3878 = vmatpush.bf16.msra.mxu0 0
    %3879 = vmatpush.bf16.msra.mxu0 0
    %3880 = vmatpush.bf16.msra.mxu0 0
    %3881 = vmatpush.bf16.msra.mxu0 0
    %3882 = vmatpush.bf16.msra.mxu0 0
    %3883 = vmatpush.bf16.msra.mxu0 0
    %3884 = vmatpush.bf16.msra.mxu0 %v3875
    %3885 = vmatmul.bf16.gmra.mxu0 %v3872
    %v3886 = vpop.f32.mrf.mxu0
    %v3887 = vadd.f32 0.0, %v3886
    %v3888 = vpop.f32.mrf.mxu0
    %3889 = vdwg.mxu0
    %v3891 = vsel %vm1119, %v3870, 0
    %v3894 = vand.u32 %v3786, %v1126
    %3896 = vmatpush.bf16.msra.mxu0 0
    %3897 = vmatpush.bf16.msra.mxu0 0
    %3898 = vmatpush.bf16.msra.mxu0 0
    %3899 = vmatpush.bf16.msra.mxu0 0
    %3900 = vmatpush.bf16.msra.mxu0 0
    %3901 = vmatpush.bf16.msra.mxu0 0
    %3902 = vmatpush.bf16.msra.mxu0 0
    %3903 = vmatpush.bf16.msra.mxu0 %v3894
    %3904 = vmatmul.bf16.gmra.mxu0 %v3891
    %v3905 = vpop.f32.mrf.mxu0
    %v3906 = vadd.f32 0.0, %v3905
    %v3907 = vpop.f32.mrf.mxu0
    %3908 = vdwg.mxu0
    %v3909 = vpack.c.bf16 %v3887, %v3887
    %v3910 = vpack.c.bf16 %v3906, %v3906
    %v3913 = vrot.slane %v3909, 3
    %v3914 = vrot.slane %v3910, 3
    %v3917 = vsel %vm549, %v3909, %v3913
    %v3919 = vsel %vm959, %v3909, %v3913
    %v3921 = vrot.slane %v3919, 1
    %v3922 = vsel %vm962, %v3909, %v3913
    %v3924 = vrot.slane %v3922, 2
    %v3927 = vsel %vm549, %v3910, %v3914
    %v3929 = vsel %vm959, %v3910, %v3914
    %v3931 = vrot.slane %v3929, 1
    %v3932 = vsel %vm962, %v3910, %v3914
    %v3934 = vrot.slane %v3932, 2
    %v3935 = vunpack.i.l.s16 %v3917
    %v3936 = vunpack.i.h.s16 %v3917
    %v3937 = vunpack.i.l.s16 %v3921
    %v3938 = vunpack.i.h.s16 %v3921
    %v3939 = vunpack.i.l.s16 %v3924
    %v3940 = vunpack.i.l.s16 %v3927
    %v3941 = vunpack.i.h.s16 %v3927
    %v3942 = vunpack.i.l.s16 %v3931
    %v3943 = vunpack.i.h.s16 %v3931
    %v3944 = vunpack.i.l.s16 %v3934
    %v3945 = vpack.i.b16 %v3936, %v3935
    %v3946 = vpack.i.b16 %v3938, %v3937
    %v3947 = vpack.i.b16 %v3940, %v3939
    %v3948 = vpack.i.b16 %v3942, %v3941
    %v3949 = vpack.i.b16 %v3944, %v3943
    %3951 = vst [vmem:[#allocation1] ss:$9 sm:$0xff] %v3945
    %s3953 = scalar_lea.vmem [#allocation1], 1
    %3954 = vst [vmem:[%s3953] ss:$9 sm:$0xff] %v3946
    %s3956 = scalar_lea.vmem [#allocation1], 2
    %3957 = vst [vmem:[%s3956] ss:$9 sm:$0xff] %v3947
    %s3959 = scalar_lea.vmem [#allocation1], 3
    %3960 = vst [vmem:[%s3959] ss:$9 sm:$0xff] %v3948
    %s3962 = scalar_lea.vmem [#allocation1], 4
    %3963 = vst [vmem:[%s3962] ss:$9 sm:$0xff] %v3949
    %v3964 = vld [vmem:[#allocation1] sm:$0xff]
    %3965 = vrot.lane.b32.xlu0 %v3131, 64
    %v3966 = vpop.permute.xlu0 %3965
    %v3968 = vsel %vm1048, %v3964, 0
    %3970 = vmatpush.bf16.msra.mxu0 0
    %3971 = vmatpush.bf16.msra.mxu0 0
    %3972 = vmatpush.bf16.msra.mxu0 0
    %3973 = vmatpush.bf16.msra.mxu0 0
    %3974 = vmatpush.bf16.msra.mxu0 0
    %3975 = vmatpush.bf16.msra.mxu0 0
    %3976 = vmatpush.bf16.msra.mxu0 0
    %3977 = vmatpush.bf16.msra.mxu0 %v3966
    %3978 = vmatmul.bf16.gmra.mxu0 %v3968
    %v3979 = vpop.f32.mrf.mxu0
    %v3980 = vadd.f32 0.0, %v3979
    %v3981 = vpop.f32.mrf.mxu0
    %v3982 = vadd.f32 0.0, %v3981
    %3983 = vdwg.mxu0
    %v3986 = vrot.slane %v3980, 1
    %v3987 = vrot.slane %v3980, 2
    %v3988 = vrot.slane %v3980, 3
    %v3989 = vrot.slane %v3980, 4
    %v3990 = vrot.slane %v3980, 5
    %v3991 = vrot.slane %v3980, 6
    %v3992 = vrot.slane %v3980, 7
    %v3993 = vrot.slane %v3982, 1
    %v4002 = vadd.f32 %v3701, %v3980
    %v4003 = vadd.f32 %v3707, %v3986
    %v4004 = vadd.f32 %v3708, %v3987
    %v4005 = vadd.f32 %v3709, %v3988
    %v4006 = vadd.f32 %v3710, %v3989
    %v4007 = vadd.f32 %v3711, %v3990
    %v4008 = vadd.f32 %v3712, %v3991
    %v4009 = vadd.f32 %v3713, %v3992
    %v4010 = vadd.f32 %v3703, %v3982
    %v4011 = vadd.f32 %v3714, %v3993
    %4012 = vst [vmem:[#allocation1] ss:$9 sm:$0xff] %v3179
    %s4013 = scalar_lea.vmem [#allocation1], 1
    %4014 = vst [vmem:[%s4013] ss:$9 sm:$0xff] %v3181
    %s4015 = scalar_lea.vmem [#allocation1], 2
    %4016 = vst [vmem:[%s4015] ss:$9 sm:$0xff] %v3183
    %s4017 = scalar_lea.vmem [#allocation1], 3
    %4018 = vst [vmem:[%s4017] ss:$9 sm:$0xff] %v3185
    %s4019 = scalar_lea.vmem [#allocation1], 4
    %4020 = vst [vmem:[%s4019] ss:$9 sm:$0xff] %v3187
    %v4021 = vld [vmem:[#allocation1] sm:$0xff]
    %4022 = vst [vmem:[#allocation1] ss:$9 sm:$0xff] %v3189
    %4023 = vst [vmem:[%s4013] ss:$9 sm:$0xff] %v3191
    %4024 = vst [vmem:[%s4015] ss:$9 sm:$0xff] %v3193
    %4025 = vst [vmem:[%s4017] ss:$9 sm:$0xff] %v3194
    %4026 = vst [vmem:[%s4019] ss:$9 sm:$0xff] %v3196
    %v4027 = vld [vmem:[#allocation1] sm:$0xff]
    %v4030 = vpack.c.bf16 %v4021, %v4021
    %v4031 = vpack.c.bf16 %v4027, %v4027
    %4032 = vst [vmem:[#allocation1] ss:$9 sm:$0xff] %v3179
    %s4033 = scalar_lea.vmem [#allocation1], 1
    %4034 = vst [vmem:[%s4033] ss:$9 sm:$0xff] %v3181
    %s4035 = scalar_lea.vmem [#allocation1], 2
    %4036 = vst [vmem:[%s4035] ss:$9 sm:$0xff] %v3183
    %s4037 = scalar_lea.vmem [#allocation1], 3
    %4038 = vst [vmem:[%s4037] ss:$9 sm:$0xff] %v3185
    %s4039 = scalar_lea.vmem [#allocation1], 4
    %4040 = vst [vmem:[%s4039] ss:$9 sm:$0xff] %v3187
    %v4041 = vld [vmem:[#allocation1] sm:$0xff]
    %4042 = vst [vmem:[#allocation1] ss:$9 sm:$0xff] %v3189
    %4043 = vst [vmem:[%s4033] ss:$9 sm:$0xff] %v3191
    %4044 = vst [vmem:[%s4035] ss:$9 sm:$0xff] %v3193
    %4045 = vst [vmem:[%s4037] ss:$9 sm:$0xff] %v3194
    %4046 = vst [vmem:[%s4039] ss:$9 sm:$0xff] %v3196
    %v4047 = vld [vmem:[#allocation1] sm:$0xff]
    %v4050 = vpack.c.bf16 %v4041, %v4041
    %v4051 = vpack.c.bf16 %v4047, %v4047
    %4052 = vst [vmem:[#allocation1] ss:$9 sm:$0xff] %v3179
    %s4053 = scalar_lea.vmem [#allocation1], 1
    %4054 = vst [vmem:[%s4053] ss:$9 sm:$0xff] %v3181
    %s4055 = scalar_lea.vmem [#allocation1], 2
    %4056 = vst [vmem:[%s4055] ss:$9 sm:$0xff] %v3183
    %s4057 = scalar_lea.vmem [#allocation1], 3
    %4058 = vst [vmem:[%s4057] ss:$9 sm:$0xff] %v3185
    %s4059 = scalar_lea.vmem [#allocation1], 4
    %4060 = vst [vmem:[%s4059] ss:$9 sm:$0xff] %v3187
    %v4061 = vld [vmem:[#allocation1 + $0x9] sm:$0xff]
    %4062 = vst [vmem:[#allocation1] ss:$9 sm:$0xff] %v3189
    %4063 = vst [vmem:[%s4053] ss:$9 sm:$0xff] %v3191
    %4064 = vst [vmem:[%s4055] ss:$9 sm:$0xff] %v3193
    %4065 = vst [vmem:[%s4057] ss:$9 sm:$0xff] %v3194
    %4066 = vst [vmem:[%s4059] ss:$9 sm:$0xff] %v3196
    %v4067 = vld [vmem:[#allocation1 + $0x9] sm:$0xff]
    %4068 = vrot.lane.b32.xlu0 %v4061, 80
    %v4069 = vpop.permute.xlu0 %4068
    %4070 = vrot.lane.b32.xlu0 %v4067, 80
    %v4071 = vpop.permute.xlu0 %4070
    %v4074 = vpack.c.bf16 %v4069, %v4069
    %v4075 = vpack.c.bf16 %v4071, %v4071
    %v4077 = vunpack.c.l.b16 %v4030
    %v4078 = vpack.c.b16 %v4077, %v4077
    %4079 = vrot.lane.b32.xlu0 %v4078, 80
    %v4080 = vpop.permute.xlu0 %4079
    %v4082 = vunpack.c.l.b16 %v4050
    %v4083 = vpack.c.b16 %v4082, %v4082
    %4084 = vrot.lane.b32.xlu0 %v4083, 16
    %v4085 = vpop.permute.xlu0 %4084
    %v4087 = vsel %vm1048, %v4080, 0
    %v4090 = vsel %vm1048, %v4085, 0
    %4092 = vmatpush.bf16.xpose.msra.mxu0 0
    %4093 = vmatpush.bf16.xpose.msra.mxu0 0
    %4094 = vmatpush.bf16.xpose.msra.mxu0 0
    %4095 = vmatpush.bf16.xpose.msra.mxu0 0
    %4096 = vmatpush.bf16.xpose.msra.mxu0 0
    %4097 = vmatpush.bf16.xpose.msra.mxu0 0
    %4098 = vmatpush.bf16.xpose.msra.mxu0 0
    %4099 = vmatpush.bf16.xpose.msra.mxu0 %v4090
    %4100 = vmatmul.bf16.gmra.mxu0 %v4087
    %v4101 = vpop.f32.mrf.mxu0
    %v4102 = vadd.f32 0.0, %v4101
    %v4103 = vpop.f32.mrf.mxu0
    %4104 = vdwg.mxu0
    %v4106 = vunpack.c.l.b16 %v4031
    %v4107 = vpack.c.b16 %v4106, %v4106
    %4108 = vrot.lane.b32.xlu0 %v4107, 80
    %v4109 = vpop.permute.xlu0 %4108
    %v4111 = vunpack.c.l.b16 %v4051
    %v4112 = vpack.c.b16 %v4111, %v4111
    %4113 = vrot.lane.b32.xlu0 %v4112, 16
    %v4114 = vpop.permute.xlu0 %4113
    %v4116 = vsel %vm1048, %v4109, 0
    %v4119 = vsel %vm1048, %v4114, 0
    %4121 = vmatpush.bf16.xpose.msra.mxu0 0
    %4122 = vmatpush.bf16.xpose.msra.mxu0 0
    %4123 = vmatpush.bf16.xpose.msra.mxu0 0
    %4124 = vmatpush.bf16.xpose.msra.mxu0 0
    %4125 = vmatpush.bf16.xpose.msra.mxu0 0
    %4126 = vmatpush.bf16.xpose.msra.mxu0 0
    %4127 = vmatpush.bf16.xpose.msra.mxu0 0
    %4128 = vmatpush.bf16.xpose.msra.mxu0 %v4119
    %4129 = vmatmul.bf16.gmra.mxu0 %v4116
    %v4130 = vpop.f32.mrf.mxu0
    %v4131 = vadd.f32 0.0, %v4130
    %v4132 = vpop.f32.mrf.mxu0
    %4133 = vdwg.mxu0
    %v4134 = vmul.f32 %v4102, 0.25
    %v4135 = vmul.f32 %v4131, 0.25
    %v4136 = vsel %vm1094, %v4134, -inf
    %4137 = vmax.xlane.f32.xlu0 %v4136
    %v4138 = vpop.xlane.xlu0 %4137
    %v4139 = vsel %vm1094, %v4135, -inf
    %4140 = vmax.xlane.f32.xlu0 %v4139
    %v4141 = vpop.xlane.xlu0 %4140
    %v4142 = vsub.f32 %v4134, %v4138
    %v4143 = vsub.f32 %v4135, %v4141
    %v4144 = vmul.f32 %v4142, 1.442695
    %v4145 = vpow.pop %v4144
    %v4146 = vmul.f32 %v4143, 1.442695
    %v4147 = vpow.pop %v4146
    %v4148 = vsel %vm1094, %v4145, 0.0
    %4149 = vadd.xlane.f32.xlu0 %v4148
    %v4150 = vpop.xlane.xlu0 %4149
    %v4151 = vsel %vm1094, %v4147, 0.0
    %4152 = vadd.xlane.f32.xlu0 %v4151
    %v4153 = vpop.xlane.xlu0 %4152
    %v4154 = vrcp.pop %v4150
    %v4155 = vrcp.pop %v4153
    %v4156 = vmul.f32 %v4145, %v4154
    %v4157 = vmul.f32 %v4147, %v4155
    %v4158 = vpack.c.bf16 %v4156, %v4156
    %v4159 = vpack.c.bf16 %v4157, %v4157
    %v4161 = vsel %vm1119, %v4158, 0
    %v4164 = vand.u32 %v4074, %v1126
    %4166 = vmatpush.bf16.msra.mxu0 0
    %4167 = vmatpush.bf16.msra.mxu0 0
    %4168 = vmatpush.bf16.msra.mxu0 0
    %4169 = vmatpush.bf16.msra.mxu0 0
    %4170 = vmatpush.bf16.msra.mxu0 0
    %4171 = vmatpush.bf16.msra.mxu0 0
    %4172 = vmatpush.bf16.msra.mxu0 0
    %4173 = vmatpush.bf16.msra.mxu0 %v4164
    %4174 = vmatmul.bf16.gmra.mxu0 %v4161
    %v4175 = vpop.f32.mrf.mxu0
    %v4176 = vadd.f32 0.0, %v4175
    %v4177 = vpop.f32.mrf.mxu0
    %4178 = vdwg.mxu0
    %v4180 = vsel %vm1119, %v4159, 0
    %v4183 = vand.u32 %v4075, %v1126
    %4185 = vmatpush.bf16.msra.mxu0 0
    %4186 = vmatpush.bf16.msra.mxu0 0
    %4187 = vmatpush.bf16.msra.mxu0 0
    %4188 = vmatpush.bf16.msra.mxu0 0
    %4189 = vmatpush.bf16.msra.mxu0 0
    %4190 = vmatpush.bf16.msra.mxu0 0
    %4191 = vmatpush.bf16.msra.mxu0 0
    %4192 = vmatpush.bf16.msra.mxu0 %v4183
    %4193 = vmatmul.bf16.gmra.mxu0 %v4180
    %v4194 = vpop.f32.mrf.mxu0
    %v4195 = vadd.f32 0.0, %v4194
    %v4196 = vpop.f32.mrf.mxu0
    %4197 = vdwg.mxu0
    %v4198 = vpack.c.bf16 %v4176, %v4176
    %v4199 = vpack.c.bf16 %v4195, %v4195
    %v4202 = vrot.slane %v4198, 3
    %v4203 = vrot.slane %v4199, 3
    %v4206 = vsel %vm549, %v4198, %v4202
    %v4208 = vsel %vm959, %v4198, %v4202
    %v4210 = vrot.slane %v4208, 1
    %v4211 = vsel %vm962, %v4198, %v4202
    %v4213 = vrot.slane %v4211, 2
    %v4216 = vsel %vm549, %v4199, %v4203
    %v4218 = vsel %vm959, %v4199, %v4203
    %v4220 = vrot.slane %v4218, 1
    %v4221 = vsel %vm962, %v4199, %v4203
    %v4223 = vrot.slane %v4221, 2
    %v4224 = vunpack.i.l.s16 %v4206
    %v4225 = vunpack.i.h.s16 %v4206
    %v4226 = vunpack.i.l.s16 %v4210
    %v4227 = vunpack.i.h.s16 %v4210
    %v4228 = vunpack.i.l.s16 %v4213
    %v4229 = vunpack.i.l.s16 %v4216
    %v4230 = vunpack.i.h.s16 %v4216
    %v4231 = vunpack.i.l.s16 %v4220
    %v4232 = vunpack.i.h.s16 %v4220
    %v4233 = vunpack.i.l.s16 %v4223
    %v4234 = vpack.i.b16 %v4225, %v4224
    %v4235 = vpack.i.b16 %v4227, %v4226
    %v4236 = vpack.i.b16 %v4229, %v4228
    %v4237 = vpack.i.b16 %v4231, %v4230
    %v4238 = vpack.i.b16 %v4233, %v4232
    %4240 = vst [vmem:[#allocation1] ss:$9 sm:$0xff] %v4234
    %s4242 = scalar_lea.vmem [#allocation1], 1
    %4243 = vst [vmem:[%s4242] ss:$9 sm:$0xff] %v4235
    %s4245 = scalar_lea.vmem [#allocation1], 2
    %4246 = vst [vmem:[%s4245] ss:$9 sm:$0xff] %v4236
    %s4248 = scalar_lea.vmem [#allocation1], 3
    %4249 = vst [vmem:[%s4248] ss:$9 sm:$0xff] %v4237
    %s4251 = scalar_lea.vmem [#allocation1], 4
    %4252 = vst [vmem:[%s4251] ss:$9 sm:$0xff] %v4238
    %v4253 = vld [vmem:[#allocation1] sm:$0xff]
    %4254 = vrot.lane.b32.xlu0 %v3133, 64
    %v4255 = vpop.permute.xlu0 %4254
    %v4257 = vsel %vm1048, %v4253, 0
    %4259 = vmatpush.bf16.msra.mxu0 0
    %4260 = vmatpush.bf16.msra.mxu0 0
    %4261 = vmatpush.bf16.msra.mxu0 0
    %4262 = vmatpush.bf16.msra.mxu0 0
    %4263 = vmatpush.bf16.msra.mxu0 0
    %4264 = vmatpush.bf16.msra.mxu0 0
    %4265 = vmatpush.bf16.msra.mxu0 0
    %4266 = vmatpush.bf16.msra.mxu0 %v4255
    %4267 = vmatmul.bf16.gmra.mxu0 %v4257
    %v4268 = vpop.f32.mrf.mxu0
    %v4269 = vadd.f32 0.0, %v4268
    %v4270 = vpop.f32.mrf.mxu0
    %v4271 = vadd.f32 0.0, %v4270
    %4272 = vdwg.mxu0
    %v4275 = vrot.slane %v4269, 1
    %v4276 = vrot.slane %v4269, 2
    %v4277 = vrot.slane %v4269, 3
    %v4278 = vrot.slane %v4269, 4
    %v4279 = vrot.slane %v4269, 5
    %v4280 = vrot.slane %v4269, 6
    %v4281 = vrot.slane %v4269, 7
    %v4282 = vrot.slane %v4271, 1
    %v4291 = vadd.f32 %v4002, %v4269
    %v4292 = vadd.f32 %v4003, %v4275
    %v4293 = vadd.f32 %v4004, %v4276
    %v4294 = vadd.f32 %v4005, %v4277
    %v4295 = vadd.f32 %v4006, %v4278
    %v4296 = vadd.f32 %v4007, %v4279
    %v4297 = vadd.f32 %v4008, %v4280
    %v4298 = vadd.f32 %v4009, %v4281
    %v4299 = vadd.f32 %v4010, %v4271
    %v4300 = vadd.f32 %v4011, %v4282
    %v4301 = vadd.f32 %v2782, %v4291
    %v4302 = vadd.f32 %v2783, %v4292
    %v4303 = vadd.f32 %v2784, %v4293
    %v4304 = vadd.f32 %v2785, %v4294
    %v4305 = vadd.f32 %v2786, %v4295
    %v4306 = vadd.f32 %v2787, %v4296
    %v4307 = vadd.f32 %v2788, %v4297
    %v4308 = vadd.f32 %v2789, %v4298
    %v4309 = vadd.f32 %v2790, %v4299
    %v4310 = vadd.f32 %v2791, %v4300
    %v4311 = vperm.slane %v28, 2
    %v4313 = vrot.slane %v4311, 1
    %v4314 = vrot.slane %v4311, 2
    %v4315 = vrot.slane %v4311, 3
    %v4316 = vrot.slane %v4311, 4
    %v4317 = vrot.slane %v4311, 5
    %v4318 = vrot.slane %v4311, 6
    %v4319 = vrot.slane %v4311, 7
    %v4327 = vadd.f32 %v4301, %v4311
    %v4328 = vadd.f32 %v4302, %v4313
    %v4329 = vadd.f32 %v4303, %v4314
    %v4330 = vadd.f32 %v4304, %v4315
    %v4331 = vadd.f32 %v4305, %v4316
    %v4332 = vadd.f32 %v4306, %v4317
    %v4333 = vadd.f32 %v4307, %v4318
    %v4334 = vadd.f32 %v4308, %v4319
    %v4335 = vadd.f32 %v4309, %v4311
    %v4336 = vadd.f32 %v4310, %v4313
    %4347 = vst [vmem:[#allocation1] ss:$9 sm:$0xff] %v4327
    %s4348 = scalar_lea.vmem [#allocation1], 1
    %4349 = vst [vmem:[%s4348] ss:$9 sm:$0xff] %v4328
    %s4350 = scalar_lea.vmem [#allocation1], 2
    %4351 = vst [vmem:[%s4350] ss:$9 sm:$0xff] %v4329
    %s4352 = scalar_lea.vmem [#allocation1], 3
    %4353 = vst [vmem:[%s4352] ss:$9 sm:$0xff] %v4330
    %s4354 = scalar_lea.vmem [#allocation1], 4
    %4355 = vst [vmem:[%s4354] ss:$9 sm:$0xff] %v4331
    %s4356 = scalar_lea.vmem [#allocation1], 5
    %4357 = vst [vmem:[%s4356] ss:$9 sm:$0xff] %v4332
    %s4358 = scalar_lea.vmem [#allocation1], 6
    %4359 = vst [vmem:[%s4358] ss:$9 sm:$0xff] %v4333
    %s4360 = scalar_lea.vmem [#allocation1], 7
    %4361 = vst [vmem:[%s4360] ss:$9 sm:$0xff] %v4334
    %v4362 = vld [vmem:[#allocation1] sm:$0xff]
    %4363 = vst [vmem:[#allocation1] ss:$9 sm:$0xff] %v4335
    %4364 = vst [vmem:[%s4348] ss:$9 sm:$0xff] %v4336
    %v4365 = vld [vmem:[#allocation1] sm:$0xff]
    %v4368 = vsel %vm643, %v4362, 0.0
    %4369 = vadd.xlane.f32.xlu0 %v4368
    %v4370 = vpop.xlane.xlu0 %4369
    %v4371 = vsel %vm647, %v4365, 0.0
    %4372 = vadd.xlane.f32.xlu0 %v4371
    %v4373 = vpop.xlane.xlu0 %4372
    %v4374 = vmul.f32 %v4370, %v657
    %v4375 = vmul.f32 %v4373, %v657
    %v4378 = vperm.slane %v4374, 0
    %v4379 = vperm.slane %v4374, 1
    %v4380 = vperm.slane %v4374, 2
    %v4381 = vperm.slane %v4374, 3
    %v4382 = vperm.slane %v4374, 4
    %v4383 = vperm.slane %v4374, 5
    %v4384 = vperm.slane %v4374, 6
    %v4385 = vperm.slane %v4374, 7
    %v4386 = vperm.slane %v4375, 0
    %v4387 = vperm.slane %v4375, 1
    %v4398 = vsub.f32 %v4327, %v4378
    %v4399 = vsub.f32 %v4328, %v4379
    %v4400 = vsub.f32 %v4329, %v4380
    %v4401 = vsub.f32 %v4330, %v4381
    %v4402 = vsub.f32 %v4331, %v4382
    %v4403 = vsub.f32 %v4332, %v4383
    %v4404 = vsub.f32 %v4333, %v4384
    %v4405 = vsub.f32 %v4334, %v4385
    %v4406 = vsub.f32 %v4335, %v4386
    %v4407 = vsub.f32 %v4336, %v4387
    %v4408 = vmul.f32 %v4398, %v4398
    %v4409 = vmul.f32 %v4399, %v4399
    %v4410 = vmul.f32 %v4400, %v4400
    %v4411 = vmul.f32 %v4401, %v4401
    %v4412 = vmul.f32 %v4402, %v4402
    %v4413 = vmul.f32 %v4403, %v4403
    %v4414 = vmul.f32 %v4404, %v4404
    %v4415 = vmul.f32 %v4405, %v4405
    %v4416 = vmul.f32 %v4406, %v4406
    %v4417 = vmul.f32 %v4407, %v4407
    %4428 = vst [vmem:[#allocation1] ss:$9 sm:$0xff] %v4408
    %s4429 = scalar_lea.vmem [#allocation1], 1
    %4430 = vst [vmem:[%s4429] ss:$9 sm:$0xff] %v4409
    %s4431 = scalar_lea.vmem [#allocation1], 2
    %4432 = vst [vmem:[%s4431] ss:$9 sm:$0xff] %v4410
    %s4433 = scalar_lea.vmem [#allocation1], 3
    %4434 = vst [vmem:[%s4433] ss:$9 sm:$0xff] %v4411
    %s4435 = scalar_lea.vmem [#allocation1], 4
    %4436 = vst [vmem:[%s4435] ss:$9 sm:$0xff] %v4412
    %s4437 = scalar_lea.vmem [#allocation1], 5
    %4438 = vst [vmem:[%s4437] ss:$9 sm:$0xff] %v4413
    %s4439 = scalar_lea.vmem [#allocation1], 6
    %4440 = vst [vmem:[%s4439] ss:$9 sm:$0xff] %v4414
    %s4441 = scalar_lea.vmem [#allocation1], 7
    %4442 = vst [vmem:[%s4441] ss:$9 sm:$0xff] %v4415
    %v4443 = vld [vmem:[#allocation1] sm:$0xff]
    %4444 = vst [vmem:[#allocation1] ss:$9 sm:$0xff] %v4416
    %4445 = vst [vmem:[%s4429] ss:$9 sm:$0xff] %v4417
    %v4446 = vld [vmem:[#allocation1] sm:$0xff]
    %v4449 = vsel %vm643, %v4443, 0.0
    %4450 = vadd.xlane.f32.xlu0 %v4449
    %v4451 = vpop.xlane.xlu0 %4450
    %v4452 = vsel %vm647, %v4446, 0.0
    %4453 = vadd.xlane.f32.xlu0 %v4452
    %v4454 = vpop.xlane.xlu0 %4453
    %v4455 = vmul.f32 %v4451, %v657
    %v4456 = vmul.f32 %v4454, %v657
    %v4457 = vadd.f32 %v4455, 1e-06
    %v4458 = vadd.f32 %v4456, 1e-06
    %v4459 = vrsqrt.pop %v4457
    %v4460 = vmul.f32 %v4459, %v4457
    %v4461 = vmul.f32 %v4460, %v4459
    %v4462 = vmul.f32 0.5, %v4461
    %v4463 = vsub.f32 1.5, %v4462
    %v4464 = vmul.f32 %v4459, %v4463
    %vm4465 = vweird.f32 %v4457
    %vm4466 = vweird.f32 %v4459
    %vm4467 = vmor %vm4465, %vm4466
    %v4468 = vsel %vm4467, %v4459, %v4464
    %v4469 = vrsqrt.pop %v4458
    %v4470 = vmul.f32 %v4469, %v4458
    %v4471 = vmul.f32 %v4470, %v4469
    %v4472 = vmul.f32 0.5, %v4471
    %v4473 = vsub.f32 1.5, %v4472
    %v4474 = vmul.f32 %v4469, %v4473
    %vm4475 = vweird.f32 %v4458
    %vm4476 = vweird.f32 %v4469
    %vm4477 = vmor %vm4475, %vm4476
    %v4478 = vsel %vm4477, %v4469, %v4474
    %v4481 = vperm.slane %v4468, 0
    %v4482 = vperm.slane %v4468, 1
    %v4483 = vperm.slane %v4468, 2
    %v4484 = vperm.slane %v4468, 3
    %v4485 = vperm.slane %v4468, 4
    %v4486 = vperm.slane %v4468, 5
    %v4487 = vperm.slane %v4468, 6
    %v4488 = vperm.slane %v4468, 7
    %v4489 = vperm.slane %v4478, 0
    %v4490 = vperm.slane %v4478, 1
    %v4501 = vmul.f32 %v4398, %v4481
    %v4502 = vmul.f32 %v4399, %v4482
    %v4503 = vmul.f32 %v4400, %v4483
    %v4504 = vmul.f32 %v4401, %v4484
    %v4505 = vmul.f32 %v4402, %v4485
    %v4506 = vmul.f32 %v4403, %v4486
    %v4507 = vmul.f32 %v4404, %v4487
    %v4508 = vmul.f32 %v4405, %v4488
    %v4509 = vmul.f32 %v4406, %v4489
    %v4510 = vmul.f32 %v4407, %v4490
    %v4511 = vperm.slane %v28, 3
    %v4513 = vrot.slane %v4511, 1
    %v4514 = vrot.slane %v4511, 2
    %v4515 = vrot.slane %v4511, 3
    %v4516 = vrot.slane %v4511, 4
    %v4517 = vrot.slane %v4511, 5
    %v4518 = vrot.slane %v4511, 6
    %v4519 = vrot.slane %v4511, 7
    %v4527 = vmul.f32 %v4501, %v4511
    %v4528 = vmul.f32 %v4502, %v4513
    %v4529 = vmul.f32 %v4503, %v4514
    %v4530 = vmul.f32 %v4504, %v4515
    %v4531 = vmul.f32 %v4505, %v4516
    %v4532 = vmul.f32 %v4506, %v4517
    %v4533 = vmul.f32 %v4507, %v4518
    %v4534 = vmul.f32 %v4508, %v4519
    %v4535 = vmul.f32 %v4509, %v4511
    %v4536 = vmul.f32 %v4510, %v4513
    %v4537 = vperm.slane %v28, 4
    %v4539 = vrot.slane %v4537, 1
    %v4540 = vrot.slane %v4537, 2
    %v4541 = vrot.slane %v4537, 3
    %v4542 = vrot.slane %v4537, 4
    %v4543 = vrot.slane %v4537, 5
    %v4544 = vrot.slane %v4537, 6
    %v4545 = vrot.slane %v4537, 7
    %v4553 = vadd.f32 %v4527, %v4537
    %v4554 = vadd.f32 %v4528, %v4539
    %v4555 = vadd.f32 %v4529, %v4540
    %v4556 = vadd.f32 %v4530, %v4541
    %v4557 = vadd.f32 %v4531, %v4542
    %v4558 = vadd.f32 %v4532, %v4543
    %v4559 = vadd.f32 %v4533, %v4544
    %v4560 = vadd.f32 %v4534, %v4545
    %v4561 = vadd.f32 %v4535, %v4537
    %v4562 = vadd.f32 %v4536, %v4539
    %4573 = vst [vmem:[#allocation1] ss:$9 sm:$0xff] %v4553
    %s4574 = scalar_lea.vmem [#allocation1], 1
    %4575 = vst [vmem:[%s4574] ss:$9 sm:$0xff] %v4554
    %s4576 = scalar_lea.vmem [#allocation1], 2
    %4577 = vst [vmem:[%s4576] ss:$9 sm:$0xff] %v4555
    %s4578 = scalar_lea.vmem [#allocation1], 3
    %4579 = vst [vmem:[%s4578] ss:$9 sm:$0xff] %v4556
    %s4580 = scalar_lea.vmem [#allocation1], 4
    %4581 = vst [vmem:[%s4580] ss:$9 sm:$0xff] %v4557
    %s4582 = scalar_lea.vmem [#allocation1], 5
    %4583 = vst [vmem:[%s4582] ss:$9 sm:$0xff] %v4558
    %s4584 = scalar_lea.vmem [#allocation1], 6
    %4585 = vst [vmem:[%s4584] ss:$9 sm:$0xff] %v4559
    %s4586 = scalar_lea.vmem [#allocation1], 7
    %4587 = vst [vmem:[%s4586] ss:$9 sm:$0xff] %v4560
    %v4588 = vld [vmem:[#allocation1] sm:$0xff]
    %4589 = vst [vmem:[#allocation1] ss:$9 sm:$0xff] %v4561
    %4590 = vst [vmem:[%s4574] ss:$9 sm:$0xff] %v4562
    %v4591 = vld [vmem:[#allocation1] sm:$0xff]
    %v4594 = vpack.c.bf16 %v4591, %v4588
    %v4595 = vperm.slane %v28, 5
    %v4596 = vperm.slane %v29, 5
    %v4605 = vunpack.c.l.b16 %v2794
    %v4606 = vunpack.c.h.b16 %v2794
    %v4607 = vunpack.c.l.b16 %v2796
    %v4608 = vunpack.c.h.b16 %v2796
    %v4609 = vunpack.c.l.b16 %v2798
    %v4610 = vunpack.c.h.b16 %v2798
    %v4611 = vunpack.c.l.b16 %v2800
    %v4612 = vunpack.c.h.b16 %v2800
    %v4613 = vunpack.c.l.b16 %v2802
    %v4614 = vunpack.c.h.b16 %v2802
    %v4615 = vunpack.c.l.b16 %v2804
    %v4616 = vunpack.c.h.b16 %v2804
    %v4617 = vunpack.c.l.b16 %v2806
    %v4618 = vunpack.c.h.b16 %v2806
    %v4619 = vunpack.c.l.b16 %v2808
    %v4620 = vunpack.c.h.b16 %v2808
    %v4621 = vpack.c.b16 %v4607, %v4605
    %v4622 = vpack.c.b16 %v4608, %v4606
    %v4623 = vpack.c.b16 %v4611, %v4609
    %v4624 = vpack.c.b16 %v4612, %v4610
    %v4625 = vpack.c.b16 %v4615, %v4613
    %v4626 = vpack.c.b16 %v4616, %v4614
    %v4627 = vpack.c.b16 %v4619, %v4617
    %v4628 = vpack.c.b16 %v4620, %v4618
    %v4638 = vsel %vm643, %v4594, 0
    %4640 = vmatpush.bf16.msra.mxu0 0
    %4641 = vmatpush.bf16.msra.mxu0 0
    %4642 = vmatpush.bf16.msra.mxu0 0
    %4643 = vmatpush.bf16.msra.mxu0 0
    %4644 = vmatpush.bf16.msra.mxu0 %v4627
    %4645 = vmatpush.bf16.msra.mxu0 %v4625
    %4646 = vmatpush.bf16.msra.mxu0 %v4623
    %4647 = vmatpush.bf16.msra.mxu0 %v4621
    %4648 = vmatmul.bf16.gmra.mxu0 %v4638
    %v4649 = vpop.f32.mrf.mxu0
    %v4650 = vadd.f32 %v4595, %v4649
    %v4651 = vpop.f32.mrf.mxu0
    %v4652 = vadd.f32 %v4595, %v4651
    %4653 = vdwg.mxu0
    %4654 = vmatpush.bf16.msra.mxu0 0
    %4655 = vmatpush.bf16.msra.mxu0 0
    %4656 = vmatpush.bf16.msra.mxu0 0
    %4657 = vmatpush.bf16.msra.mxu0 0
    %4658 = vmatpush.bf16.msra.mxu0 %v4628
    %4659 = vmatpush.bf16.msra.mxu0 %v4626
    %4660 = vmatpush.bf16.msra.mxu0 %v4624
    %4661 = vmatpush.bf16.msra.mxu0 %v4622
    %4662 = vmatmul.bf16.gmra.mxu0 %v4638
    %v4663 = vpop.f32.mrf.mxu0
    %v4664 = vadd.f32 %v4596, %v4663
    %v4665 = vpop.f32.mrf.mxu0
    %v4666 = vadd.f32 %v4596, %v4665
    %4667 = vdwg.mxu0
    %v4668 = vmul.f32 %v4650, 0.5
    %v4669 = vmul.f32 %v4664, 0.5
    %v4670 = vmul.f32 %v4652, 0.5
    %v4671 = vmul.f32 %v4666, 0.5
    %v4672 = vmul.f32 %v4650, 0.70710677
    %v4673 = vmul.f32 %v4664, 0.70710677
    %v4674 = vmul.f32 %v4652, 0.70710677
    %v4675 = vmul.f32 %v4666, 0.70710677
    %v4676 = vmul.f32 %v4672, %v4672
    %v4677 = vmin.f32 16.0, %v4676
    %v4678 = vmul.f32 %v4677, 2.1237322e-06
    %v4679 = vadd.f32 %v4678, 0.00028619796
    %v4680 = vmul.f32 %v4677, %v4679
    %v4681 = vadd.f32 %v4680, 0.0036580483
    %v4682 = vmul.f32 %v4677, %v4681
    %v4683 = vadd.f32 %v4682, 0.05243302
    %v4684 = vmul.f32 %v4677, %v4683
    %v4685 = vadd.f32 %v4684, 0.18741608
    %v4686 = vmul.f32 %v4677, %v4685
    %v4687 = vadd.f32 %v4686, 1.1283791
    %v4688 = vmul.f32 %v4672, %v4687
    %v4689 = vmul.f32 %v4677, 3.8918573e-05
    %v4690 = vadd.f32 %v4689, 0.001143296
    %v4691 = vmul.f32 %v4677, %v4690
    %v4692 = vadd.f32 %v4691, 0.014752088
    %v4693 = vmul.f32 %v4677, %v4692
    %v4694 = vadd.f32 %v4693, 0.112945676
    %v4695 = vmul.f32 %v4677, %v4694
    %v4696 = vadd.f32 %v4695, 0.4994258
    %v4697 = vmul.f32 %v4677, %v4696
    %v4698 = vadd.f32 %v4697, 1.0
    %v4699 = vrcp.pop %v4698
    %v4700 = vmul.f32 %v4698, %v4699
    %v4701 = vsub.f32 1.0, %v4700
    %v4702 = vmul.f32 %v4699, %v4701
    %v4703 = vadd.f32 %v4699, %v4702
    %vm4704 = vweird.f32 %v4698
    %vm4705 = vweird.f32 %v4699
    %vm4706 = vmor %vm4704, %vm4705
    %v4707 = vsel %vm4706, %v4699, %v4703
    %v4708 = vand.u32 2147483647, %v4698
    %vm4709 = vcmp.eq.f32.partialorder %v4708, 8.507059e+37
    %v4710 = vand.u32 %v4698, 2147483648
    %v4711 = vor.u32 1.1754944e-38, %v4710
    %v4712 = vsel %vm4709, %v4711, %v4707
    %v4713 = vmul.f32 %v4688, %v4712
    %v4714 = vmin.f32 %v4713, 1.0
    %v4715 = vmax.f32 %v4714, -1.0
    %v4716 = vmul.f32 %v4673, %v4673
    %v4717 = vmin.f32 16.0, %v4716
    %v4718 = vmul.f32 %v4717, 2.1237322e-06
    %v4719 = vadd.f32 %v4718, 0.00028619796
    %v4720 = vmul.f32 %v4717, %v4719
    %v4721 = vadd.f32 %v4720, 0.0036580483
    %v4722 = vmul.f32 %v4717, %v4721
    %v4723 = vadd.f32 %v4722, 0.05243302
    %v4724 = vmul.f32 %v4717, %v4723
    %v4725 = vadd.f32 %v4724, 0.18741608
    %v4726 = vmul.f32 %v4717, %v4725
    %v4727 = vadd.f32 %v4726, 1.1283791
    %v4728 = vmul.f32 %v4673, %v4727
    %v4729 = vmul.f32 %v4717, 3.8918573e-05
    %v4730 = vadd.f32 %v4729, 0.001143296
    %v4731 = vmul.f32 %v4717, %v4730
    %v4732 = vadd.f32 %v4731, 0.014752088
    %v4733 = vmul.f32 %v4717, %v4732
    %v4734 = vadd.f32 %v4733, 0.112945676
    %v4735 = vmul.f32 %v4717, %v4734
    %v4736 = vadd.f32 %v4735, 0.4994258
    %v4737 = vmul.f32 %v4717, %v4736
    %v4738 = vadd.f32 %v4737, 1.0
    %v4739 = vrcp.pop %v4738
    %v4740 = vmul.f32 %v4738, %v4739
    %v4741 = vsub.f32 1.0, %v4740
    %v4742 = vmul.f32 %v4739, %v4741
    %v4743 = vadd.f32 %v4739, %v4742
    %vm4744 = vweird.f32 %v4738
    %vm4745 = vweird.f32 %v4739
    %vm4746 = vmor %vm4744, %vm4745
    %v4747 = vsel %vm4746, %v4739, %v4743
    %v4748 = vand.u32 2147483647, %v4738
    %vm4749 = vcmp.eq.f32.partialorder %v4748, 8.507059e+37
    %v4750 = vand.u32 %v4738, 2147483648
    %v4751 = vor.u32 1.1754944e-38, %v4750
    %v4752 = vsel %vm4749, %v4751, %v4747
    %v4753 = vmul.f32 %v4728, %v4752
    %v4754 = vmin.f32 %v4753, 1.0
    %v4755 = vmax.f32 %v4754, -1.0
    %v4756 = vmul.f32 %v4674, %v4674
    %v4757 = vmin.f32 16.0, %v4756
    %v4758 = vmul.f32 %v4757, 2.1237322e-06
    %v4759 = vadd.f32 %v4758, 0.00028619796
    %v4760 = vmul.f32 %v4757, %v4759
    %v4761 = vadd.f32 %v4760, 0.0036580483
    %v4762 = vmul.f32 %v4757, %v4761
    %v4763 = vadd.f32 %v4762, 0.05243302
    %v4764 = vmul.f32 %v4757, %v4763
    %v4765 = vadd.f32 %v4764, 0.18741608
    %v4766 = vmul.f32 %v4757, %v4765
    %v4767 = vadd.f32 %v4766, 1.1283791
    %v4768 = vmul.f32 %v4674, %v4767
    %v4769 = vmul.f32 %v4757, 3.8918573e-05
    %v4770 = vadd.f32 %v4769, 0.001143296
    %v4771 = vmul.f32 %v4757, %v4770
    %v4772 = vadd.f32 %v4771, 0.014752088
    %v4773 = vmul.f32 %v4757, %v4772
    %v4774 = vadd.f32 %v4773, 0.112945676
    %v4775 = vmul.f32 %v4757, %v4774
    %v4776 = vadd.f32 %v4775, 0.4994258
    %v4777 = vmul.f32 %v4757, %v4776
    %v4778 = vadd.f32 %v4777, 1.0
    %v4779 = vrcp.pop %v4778
    %v4780 = vmul.f32 %v4778, %v4779
    %v4781 = vsub.f32 1.0, %v4780
    %v4782 = vmul.f32 %v4779, %v4781
    %v4783 = vadd.f32 %v4779, %v4782
    %vm4784 = vweird.f32 %v4778
    %vm4785 = vweird.f32 %v4779
    %vm4786 = vmor %vm4784, %vm4785
    %v4787 = vsel %vm4786, %v4779, %v4783
    %v4788 = vand.u32 2147483647, %v4778
    %vm4789 = vcmp.eq.f32.partialorder %v4788, 8.507059e+37
    %v4790 = vand.u32 %v4778, 2147483648
    %v4791 = vor.u32 1.1754944e-38, %v4790
    %v4792 = vsel %vm4789, %v4791, %v4787
    %v4793 = vmul.f32 %v4768, %v4792
    %v4794 = vmin.f32 %v4793, 1.0
    %v4795 = vmax.f32 %v4794, -1.0
    %v4796 = vmul.f32 %v4675, %v4675
    %v4797 = vmin.f32 16.0, %v4796
    %v4798 = vmul.f32 %v4797, 2.1237322e-06
    %v4799 = vadd.f32 %v4798, 0.00028619796
    %v4800 = vmul.f32 %v4797, %v4799
    %v4801 = vadd.f32 %v4800, 0.0036580483
    %v4802 = vmul.f32 %v4797, %v4801
    %v4803 = vadd.f32 %v4802, 0.05243302
    %v4804 = vmul.f32 %v4797, %v4803
    %v4805 = vadd.f32 %v4804, 0.18741608
    %v4806 = vmul.f32 %v4797, %v4805
    %v4807 = vadd.f32 %v4806, 1.1283791
    %v4808 = vmul.f32 %v4675, %v4807
    %v4809 = vmul.f32 %v4797, 3.8918573e-05
    %v4810 = vadd.f32 %v4809, 0.001143296
    %v4811 = vmul.f32 %v4797, %v4810
    %v4812 = vadd.f32 %v4811, 0.014752088
    %v4813 = vmul.f32 %v4797, %v4812
    %v4814 = vadd.f32 %v4813, 0.112945676
    %v4815 = vmul.f32 %v4797, %v4814
    %v4816 = vadd.f32 %v4815, 0.4994258
    %v4817 = vmul.f32 %v4797, %v4816
    %v4818 = vadd.f32 %v4817, 1.0
    %v4819 = vrcp.pop %v4818
    %v4820 = vmul.f32 %v4818, %v4819
    %v4821 = vsub.f32 1.0, %v4820
    %v4822 = vmul.f32 %v4819, %v4821
    %v4823 = vadd.f32 %v4819, %v4822
    %vm4824 = vweird.f32 %v4818
    %vm4825 = vweird.f32 %v4819
    %vm4826 = vmor %vm4824, %vm4825
    %v4827 = vsel %vm4826, %v4819, %v4823
    %v4828 = vand.u32 2147483647, %v4818
    %vm4829 = vcmp.eq.f32.partialorder %v4828, 8.507059e+37
    %v4830 = vand.u32 %v4818, 2147483648
    %v4831 = vor.u32 1.1754944e-38, %v4830
    %v4832 = vsel %vm4829, %v4831, %v4827
    %v4833 = vmul.f32 %v4808, %v4832
    %v4834 = vmin.f32 %v4833, 1.0
    %v4835 = vmax.f32 %v4834, -1.0
    %v4836 = vadd.f32 %v4715, 1.0
    %v4837 = vadd.f32 %v4755, 1.0
    %v4838 = vadd.f32 %v4795, 1.0
    %v4839 = vadd.f32 %v4835, 1.0
    %v4840 = vmul.f32 %v4668, %v4836
    %v4841 = vmul.f32 %v4669, %v4837
    %v4842 = vmul.f32 %v4670, %v4838
    %v4843 = vmul.f32 %v4671, %v4839
    %v4844 = vpack.c.bf16 %v4842, %v4840
    %v4845 = vpack.c.bf16 %v4843, %v4841
    %v4846 = vperm.slane %v28, 6
    %v4879 = vunpack.c.l.b16 %v2810
    %v4880 = vunpack.c.l.b16 %v2811
    %v4881 = vunpack.c.l.b16 %v2812
    %v4882 = vunpack.c.l.b16 %v2813
    %v4883 = vunpack.c.l.b16 %v2814
    %v4884 = vunpack.c.l.b16 %v2815
    %v4885 = vunpack.c.l.b16 %v2816
    %v4886 = vunpack.c.l.b16 %v2817
    %v4887 = vunpack.c.l.b16 %v2818
    %v4888 = vunpack.c.l.b16 %v2819
    %v4889 = vunpack.c.l.b16 %v2820
    %v4890 = vunpack.c.l.b16 %v2821
    %v4891 = vunpack.c.l.b16 %v2822
    %v4892 = vunpack.c.l.b16 %v2823
    %v4893 = vunpack.c.l.b16 %v2824
    %v4894 = vunpack.c.l.b16 %v2825
    %v4895 = vunpack.c.l.b16 %v2826
    %v4896 = vunpack.c.l.b16 %v2827
    %v4897 = vunpack.c.l.b16 %v2828
    %v4898 = vunpack.c.l.b16 %v2829
    %v4899 = vunpack.c.l.b16 %v2830
    %v4900 = vunpack.c.l.b16 %v2831
    %v4901 = vunpack.c.l.b16 %v2832
    %v4902 = vunpack.c.l.b16 %v2833
    %v4903 = vunpack.c.l.b16 %v2834
    %v4904 = vunpack.c.l.b16 %v2835
    %v4905 = vunpack.c.l.b16 %v2836
    %v4906 = vunpack.c.l.b16 %v2837
    %v4907 = vunpack.c.l.b16 %v2838
    %v4908 = vunpack.c.l.b16 %v2839
    %v4909 = vunpack.c.l.b16 %v2840
    %v4910 = vunpack.c.l.b16 %v2841
    %v4911 = vpack.c.b16 %v4880, %v4879
    %v4912 = vpack.c.b16 %v4882, %v4881
    %v4913 = vpack.c.b16 %v4884, %v4883
    %v4914 = vpack.c.b16 %v4886, %v4885
    %v4915 = vpack.c.b16 %v4888, %v4887
    %v4916 = vpack.c.b16 %v4890, %v4889
    %v4917 = vpack.c.b16 %v4892, %v4891
    %v4918 = vpack.c.b16 %v4894, %v4893
    %v4919 = vpack.c.b16 %v4896, %v4895
    %v4920 = vpack.c.b16 %v4898, %v4897
    %v4921 = vpack.c.b16 %v4900, %v4899
    %v4922 = vpack.c.b16 %v4902, %v4901
    %v4923 = vpack.c.b16 %v4904, %v4903
    %v4924 = vpack.c.b16 %v4906, %v4905
    %v4925 = vpack.c.b16 %v4908, %v4907
    %v4926 = vpack.c.b16 %v4910, %v4909
    %4943 = vmatpush.bf16.msra.mxu0 %v4918
    %4944 = vmatpush.bf16.msra.mxu0 %v4917
    %4945 = vmatpush.bf16.msra.mxu0 %v4916
    %4946 = vmatpush.bf16.msra.mxu0 %v4915
    %4947 = vmatpush.bf16.msra.mxu0 %v4914
    %4948 = vmatpush.bf16.msra.mxu0 %v4913
    %4949 = vmatpush.bf16.msra.mxu0 %v4912
    %4950 = vmatpush.bf16.msra.mxu0 %v4911
    %4951 = vmatmul.bf16.gmra.mxu0 %v4844
    %v4952 = vpop.f32.mrf.mxu0
    %v4953 = vadd.f32 %v4846, %v4952
    %v4954 = vpop.f32.mrf.mxu0
    %4955 = vdwg.mxu0
    %4956 = vmatpush.bf16.msra.mxu0 %v4926
    %4957 = vmatpush.bf16.msra.mxu0 %v4925
    %4958 = vmatpush.bf16.msra.mxu0 %v4924
    %4959 = vmatpush.bf16.msra.mxu0 %v4923
    %4960 = vmatpush.bf16.msra.mxu0 %v4922
    %4961 = vmatpush.bf16.msra.mxu0 %v4921
    %4962 = vmatpush.bf16.msra.mxu0 %v4920
    %4963 = vmatpush.bf16.msra.mxu0 %v4919
    %4964 = vmatmul.bf16.gmra.mxu0 %v4845
    %v4965 = vpop.f32.mrf.mxu0
    %v4966 = vadd.f32 %v4953, %v4965
    %v4967 = vpop.f32.mrf.mxu0
    %4968 = vdwg.mxu0
    %v4970 = vrot.slane %v4966, 5
    %v4972 = vadd.f32 %v4327, %v4966
    %v4973 = vadd.f32 %v4332, %v4970
    %4976 = vst [vmem:[#allocation1] ss:$9 sm:$0xff] %v4972
    %s4977 = scalar_lea.vmem [#allocation1], 1
    %4978 = vst [vmem:[%s4977] ss:$9 sm:$0xff] %v4973
    %v4979 = vld [vmem:[#allocation1] sm:$0xff]
    %v4981 = vsel %vm647, %v4979, 0.0
    %4982 = vadd.xlane.f32.xlu0 %v4981
    %v4983 = vpop.xlane.xlu0 %4982
    %v4984 = vmul.f32 %v4983, %v657
    %v4986 = vperm.slane %v4984, 0
    %v4987 = vperm.slane %v4984, 1
    %v4990 = vsub.f32 %v4972, %v4986
    %v4991 = vsub.f32 %v4973, %v4987
    %v4992 = vmul.f32 %v4990, %v4990
    %v4993 = vmul.f32 %v4991, %v4991
    %4996 = vst [vmem:[#allocation1] ss:$9 sm:$0xff] %v4992
    %s4997 = scalar_lea.vmem [#allocation1], 1
    %4998 = vst [vmem:[%s4997] ss:$9 sm:$0xff] %v4993
    %v4999 = vld [vmem:[#allocation1] sm:$0xff]
    %v5001 = vsel %vm647, %v4999, 0.0
    %5002 = vadd.xlane.f32.xlu0 %v5001
    %v5003 = vpop.xlane.xlu0 %5002
    %v5004 = vmul.f32 %v5003, %v657
    %v5005 = vadd.f32 %v5004, 1e-06
    %v5006 = vrsqrt.pop %v5005
    %v5007 = vmul.f32 %v5006, %v5005
    %v5008 = vmul.f32 %v5007, %v5006
    %v5009 = vmul.f32 0.5, %v5008
    %v5010 = vsub.f32 1.5, %v5009
    %v5011 = vmul.f32 %v5006, %v5010
    %vm5012 = vweird.f32 %v5005
    %vm5013 = vweird.f32 %v5006
    %vm5014 = vmor %vm5012, %vm5013
    %v5015 = vsel %vm5014, %v5006, %v5011
    %v5017 = vperm.slane %v5015, 0
    %v5018 = vperm.slane %v5015, 1
    %v5021 = vmul.f32 %v4990, %v5017
    %v5022 = vmul.f32 %v4991, %v5018
    %v5023 = vperm.slane %v28, 7
    %v5025 = vrot.slane %v5023, 1
    %v5027 = vmul.f32 %v5021, %v5023
    %v5028 = vmul.f32 %v5022, %v5025
    %v5029 = vperm.slane %v30, 0
    %v5031 = vrot.slane %v5029, 1
    %v5033 = vadd.f32 %v5027, %v5029
    %v5034 = vadd.f32 %v5028, %v5031
    %v5035 = vpack.c.bf16 %v5033, %v5033
    %v5036 = vpack.c.bf16 %v5034, %v5034
    %v5037 = vld [vmem:[%s5] sm:$0xf]
    %v5038 = vld [vmem:[%s5 + $0x4] sm:$0xf]
    %v5039 = vld [vmem:[%s5 + $0x8] sm:$0xf]
    %v5040 = vld [vmem:[%s5 + $0xc] sm:$0xf]
    %v5041 = vld [vmem:[%s5 + $0x10] sm:$0xf]
    %v5042 = vld [vmem:[%s5 + $0x14] sm:$0xf]
    %v5043 = vld [vmem:[%s5 + $0x18] sm:$0xf]
    %v5044 = vld [vmem:[%s5 + $0x1c] sm:$0xf]
    %v5045 = vperm.slane %v30, 1
    %v5048 = vunpack.c.l.b16 %v5035
    %v5049 = vunpack.c.l.b16 %v5036
    %v5050 = vrot.slane %v5049, 7
    %v5051 = vsel %vm959, %v5050, %v5048
    %v5052 = vpack.c.b16 %v5051, %v5051
    %v5061 = vunpack.c.l.b16 %v5037
    %v5062 = vunpack.c.l.b16 %v5038
    %v5063 = vunpack.c.l.b16 %v5039
    %v5064 = vunpack.c.l.b16 %v5040
    %v5065 = vunpack.c.l.b16 %v5041
    %v5066 = vunpack.c.l.b16 %v5042
    %v5067 = vunpack.c.l.b16 %v5043
    %v5068 = vunpack.c.l.b16 %v5044
    %v5069 = vpack.c.b16 %v5062, %v5061
    %v5070 = vpack.c.b16 %v5064, %v5063
    %v5071 = vpack.c.b16 %v5066, %v5065
    %v5072 = vpack.c.b16 %v5068, %v5067
    %v5078 = vsel %vm643, %v5052, 0
    %5080 = vmatpush.bf16.msra.mxu0 0
    %5081 = vmatpush.bf16.msra.mxu0 0
    %5082 = vmatpush.bf16.msra.mxu0 0
    %5083 = vmatpush.bf16.msra.mxu0 0
    %5084 = vmatpush.bf16.msra.mxu0 %v5072
    %5085 = vmatpush.bf16.msra.mxu0 %v5071
    %5086 = vmatpush.bf16.msra.mxu0 %v5070
    %5087 = vmatpush.bf16.msra.mxu0 %v5069
    %5088 = vmatmul.bf16.gmra.mxu0 %v5078
    %v5089 = vpop.f32.mrf.mxu0
    %v5090 = vadd.f32 %v5045, %v5089
    %v5091 = vpop.f32.mrf.mxu0
    %5092 = vdwg.mxu0
    %5093 = vst [vmem:[#allocation2] sm:$0x3] %v5090
    // Predicated region
    $region26: #{disease_model_forward.1} parent=1 // pred_check
      _
    $region27: #{disease_model_forward.1} parent=1 // pred_check_branch
      %5095 = sbr.rel (0) target = $region29
    $region28: #{disease_model_forward.1} parent=1 // pred_region
      %5097 = vsyncadd [#allocation3], 0
      %s5099 = sshll.u32 [#allocation2], 4
      %s5100 = int_to_ptr.vmem [resolvable:$true] %s5099
      %s5101 = sshll.u32 %s6, 4
      %s5102 = int_to_ptr.hbm [resolvable:$true] %s5101
      %5104 = dma.vmem_to_hbm [thread:$0]  %s5100, 32, %s5102, [#allocation3]
    $region29: #{disease_model_forward.1} parent=1 // pred_fallthru
      _
    // Predicated region
    $region30: #{disease_model_forward.1} parent=1 // pred_check
      _
    $region31: #{disease_model_forward.1} parent=1 // pred_check_branch
      %5106 = sbr.rel (0) target = $region33
    $region32: #{disease_model_forward.1} parent=1 // pred_region
      %5108 = dma.done [#allocation3], 32
    $region33: #{disease_model_forward.1} parent=1 // pred_fallthru
      _
    %5109 = vsyncpa [#allocation3], 1

</llo_original>
